<compile_context>
chip_gen: v5e
topology: v5e:2x2
jax: 0.10.0
libtpu: 0.0.40
codegen_flags: <defaults>
</compile_context>

<pallas_src>
import functools

import numpy as np

import jax
import jax.numpy as jnp
from jax.experimental import pallas as pl
from jax.experimental.pallas import tpu as pltpu
from jax.scipy.special import gammaln


# ---------------------------------------------------------------------------
# Lanczos lgamma (z > 0), g = 7, n = 9, with the partial-fraction series
# collapsed into a single rational P(zm1)/Q(zm1):
#   * numerator P evaluated by Horner,
#   * denominator Q = prod_{i=1..8}(zm1 + i) evaluated in factored form
#     (perfectly conditioned near zm1 ~ -1, i.e. small alphas),
# so the whole series costs one divide instead of eight.
# ---------------------------------------------------------------------------
_LANCZOS_G = 7.0
_HALF_LOG_2PI = 0.9189385332046727
_LANCZOS_COEF = (
    0.99999999999980993, 676.5203681218851, -1259.1392167224028,
    771.32342877765313, -176.61502916214059, 12.507343278686905,
    -0.13857109526572012, 9.9843695780195716e-6, 1.5056327351493116e-7,
)


def _lanczos_numerator_coeffs():
    """P(z) such that  c0 + sum_i c_i/(z+i) == P(z) / prod_i (z+i)."""
    q = np.poly1d([1.0])
    for i in range(1, len(_LANCZOS_COEF)):
        q = q * np.poly1d([1.0, float(i)])
    p = _LANCZOS_COEF[0] * q
    for i in range(1, len(_LANCZOS_COEF)):
        r = np.poly1d([1.0])
        for j in range(1, len(_LANCZOS_COEF)):
            if j != i:
                r = r * np.poly1d([1.0, float(j)])
        p = p + _LANCZOS_COEF[i] * r
    return tuple(float(c) for c in p.coeffs)   # highest degree first


_LANCZOS_P = _lanczos_numerator_coeffs()


def _lgamma_pos(z):
    """log Gamma(z) for strictly positive z (softplus outputs)."""
    zm1 = z - 1.0
    pnum = jnp.full_like(zm1, _LANCZOS_P[0])
    for c in _LANCZOS_P[1:]:
        pnum = pnum * zm1 + c
    qden = zm1 + 1.0
    for i in range(2, len(_LANCZOS_COEF)):
        qden = qden * (zm1 + float(i))
    t = zm1 + (_LANCZOS_G + 0.5)
    return _HALF_LOG_2PI + (zm1 + 0.5) * jnp.log(t) - t + jnp.log(pnum / qden)


def _lrelu(h):
    # nn.LeakyReLU(negative_slope=0.01)
    return jnp.where(h >= 0.0, h, 0.01 * h)


# ---------------------------------------------------------------------------
# Kernel 1: phased encoder pass that produces exact full-batch BatchNorm
# statistics and the pre-BN activations of the last encoder layer.
# Grid = (4 layer phases, batch tiles); both axes sequential ("arbitrary").
# ---------------------------------------------------------------------------
def _encoder_stats_kernel(x_ref, w0_ref, w1_ref, w2_ref, w3_ref,
                          g0_ref, be0_ref, g1_ref, be1_ref, g2_ref, be2_ref,
                          a3_ref,
                          m0_ref, s0_ref, m1_ref, s1_ref,
                          m2_ref, s2_ref, m3_ref, s3_ref,
                          *, inv_b, bn_eps=1e-5):
    p = pl.program_id(0)           # layer phase
    i = pl.program_id(1)           # batch tile
    last = pl.num_programs(1) - 1
    hp = jax.lax.Precision.HIGHEST

    @pl.when((p == 0) & (i == 0))
    def _init():
        for ref in (m0_ref, s0_ref, m1_ref, s1_ref, m2_ref, s2_ref,
                    m3_ref, s3_ref):
            ref[...] = jnp.zeros_like(ref)

    def accumulate(m_ref, s_ref, a):
        # two fused lane reductions; var later via E[a^2] - mean^2
        m_ref[...] += jnp.sum(a, axis=1, keepdims=True)
        s_ref[...] += jnp.sum(a * a, axis=1, keepdims=True)

    def finalize(m_ref, s_ref):
        mean = m_ref[...] * inv_b
        var = s_ref[...] * inv_b - mean * mean    # biased var (BN training mode)
        m_ref[...] = mean
        s_ref[...] = jax.lax.rsqrt(var + bn_eps)

    def bn_lrelu(a, m_ref, s_ref, g_ref, be_ref):
        return _lrelu((a - m_ref[...]) * s_ref[...] * g_ref[...] + be_ref[...])

    x = x_ref[...]                                          # (tb, n_bands)
    # a0^T = W0 . x^T : contract the shared n_bands axis, keep batch on lanes.
    a0 = jax.lax.dot_general(w0_ref[...], x, (((1,), (1,)), ((), ())),
                             precision=hp, preferred_element_type=jnp.float32)

    @pl.when(p == 0)
    def _():
        accumulate(m0_ref, s0_ref, a0)

    @pl.when((p == 0) & (i == last))
    def _():
        finalize(m0_ref, s0_ref)

    # Layers beyond the currently-accumulating one read not-yet-final
    # statistics; their results are never consumed in those phases (the
    # accumulations below are phase-gated), they just keep the code
    # straight-line and cost only a few tiny matmuls.
    h0 = bn_lrelu(a0, m0_ref, s0_ref, g0_ref, be0_ref)
    a1 = jnp.dot(w1_ref[...], h0, precision=hp,
                 preferred_element_type=jnp.float32)

    @pl.when(p == 1)
    def _():
        accumulate(m1_ref, s1_ref, a1)

    @pl.when((p == 1) & (i == last))
    def _():
        finalize(m1_ref, s1_ref)

    h1 = bn_lrelu(a1, m1_ref, s1_ref, g1_ref, be1_ref)
    a2 = jnp.dot(w2_ref[...], h1, precision=hp,
                 preferred_element_type=jnp.float32)

    @pl.when(p == 2)
    def _():
        accumulate(m2_ref, s2_ref, a2)

    @pl.when((p == 2) & (i == last))
    def _():
        finalize(m2_ref, s2_ref)

    h2 = bn_lrelu(a2, m2_ref, s2_ref, g2_ref, be2_ref)
    a3 = jnp.dot(w3_ref[...], h2, precision=hp,
                 preferred_element_type=jnp.float32)

    # The phase-3 value is the last one written back to HBM for each tile, so
    # the (partial-statistics) values stored in earlier phases are harmless.
    a3_ref[...] = a3

    @pl.when(p == 3)
    def _():
        accumulate(m3_ref, s3_ref, a3)

    @pl.when((p == 3) & (i == last))
    def _():
        finalize(m3_ref, s3_ref)


# ---------------------------------------------------------------------------
# Kernel 2: BN + Softplus of the last encoder layer, inverse-CDF multi-gamma
# reparameterization, Dirichlet normalization, bias-free linear decoder.
# Grid = (batch tiles,), fully parallel.  Layout is (features, batch-tile) so
# every store is lane-dense.
# ---------------------------------------------------------------------------
def _decode_kernel(a3_ref, u_ref, m3_ref, s3_ref, g3_ref, be3_ref,
                   ob_ref, decw_ref, out_ref, z_ref, alpha_ref):
    h = (a3_ref[...] - m3_ref[...]) * s3_ref[...] * g3_ref[...] + be3_ref[...]
    # Softplus with the PyTorch threshold (= 20)
    alphas = jnp.where(h > 20.0, h, jnp.log(1.0 + jnp.exp(jnp.minimum(h, 20.0))))
    alpha_ref[...] = alphas

    # v = beta^-1 * (u * alpha * Gamma(alpha)) ** (1/alpha)
    # clamp(max=30) as in the PyTorch module; the extra 1e-6 lower clamp only
    # guards the Gamma/lgamma path against softplus underflow (inf*0 -> NaN).
    ca = jnp.clip(alphas, 1e-6, 30.0)
    int1 = 1.0 / ca                          # == 1/max(ca, 1e-8) since ca >= 1e-6
    int3 = jnp.exp(_lgamma_pos(ca))          # Gamma(ca)
    int4 = int3 * u_ref[...] + 1e-12
    v = ob_ref[...] * jnp.exp(int1 * jnp.log(int4 * ca))   # x**y, arg > 0

    sum_v = jnp.sum(v, axis=0, keepdims=True)               # (1, tb)
    z = v / jnp.maximum(sum_v, 1e-8)
    z_ref[...] = z
    out_ref[...] = jnp.dot(decw_ref[...], z,
                           precision=jax.lax.Precision.HIGHEST,
                           preferred_element_type=jnp.float32)


# ---------------------------------------------------------------------------
# Wrapper
# ---------------------------------------------------------------------------
def _pick_batch_tile(batch, max_tile):
    """Largest tile that divides `batch`, is a multiple of 128 (lane-dense
    stores for the transposed blocks) and is <= max_tile; falls back to the
    whole batch (single tile)."""
    cap = min(max_tile, batch)
    tile = cap - cap % 128
    while tile >= 128:
        if batch % tile == 0:
            return tile
        tile -= 128
    return batch


@functools.partial(jax.jit, static_argnames=("max_batch_tile",))
def dirvae_forward(x, params, u, *, max_batch_tile=1024):
    """DirVAE forward.  x: (B, n_bands) f32; u: (n_ems, B) U(0,1) draws
    (the torch.rand_like equivalent, supplied externally).

    Returns (output, z_latent, alphas) in PyTorch layouts:
      output (B, n_bands), z_latent (B, n_ems), alphas (B, n_ems).

    max_batch_tile: ~1-2K is comfortable on v5e/v6e; keep <= 1024 on v7x
    (64 MiB VMEM, 2 TensorCores).  Tiles here are tiny either way.
    """
    B, n_bands = x.shape
    n_ems = params["w3"].shape[0]
    f0, f1, f2, f3 = 3 * n_ems, 2 * n_ems, n_ems, n_ems
    f32 = jnp.float32

    tb = _pick_batch_tile(B, max_batch_tile)
    nt = B // tb

    const2 = lambda p, i: (0, 0)
    stat_feats = (f0, f0, f1, f1, f2, f2, f3, f3)
    stats_shapes = tuple(jax.ShapeDtypeStruct((f, 1), f32) for f in stat_feats)
    stats_specs = tuple(pl.BlockSpec((f, 1), const2) for f in stat_feats)

    encoder_stats = pl.pallas_call(
        functools.partial(_encoder_stats_kernel, inv_b=1.0 / float(B)),
        grid=(4, nt),
        in_specs=[
            pl.BlockSpec((tb, n_bands), lambda p, i: (i, 0)),   # x
            pl.BlockSpec((f0, n_bands), const2),                # w0
            pl.BlockSpec((f1, f0), const2),                     # w1
            pl.BlockSpec((f2, f1), const2),                     # w2
            pl.BlockSpec((f3, f2), const2),                     # w3
            pl.BlockSpec((f0, 1), const2), pl.BlockSpec((f0, 1), const2),  # g0, be0
            pl.BlockSpec((f1, 1), const2), pl.BlockSpec((f1, 1), const2),  # g1, be1
            pl.BlockSpec((f2, 1), const2), pl.BlockSpec((f2, 1), const2),  # g2, be2
        ],
        out_specs=(pl.BlockSpec((f3, tb), lambda p, i: (0, i)),) + stats_specs,
        out_shape=(jax.ShapeDtypeStruct((f3, B), f32),) + stats_shapes,
        compiler_params=pltpu.CompilerParams(
            dimension_semantics=("arbitrary", "arbitrary"),
            vmem_limit_bytes=32 * 1024 * 1024),
    )
    (a3_t, _m0, _s0, _m1, _s1, _m2, _s2, m3, s3) = encoder_stats(
        x, params["w0"], params["w1"], params["w2"], params["w3"],
        params["g0"], params["be0"], params["g1"], params["be1"],
        params["g2"], params["be2"])

    const1 = lambda i: (0, 0)
    decode = pl.pallas_call(
        _decode_kernel,
        grid=(nt,),
        in_specs=[
            pl.BlockSpec((f3, tb), lambda i: (0, i)),            # a3 (pre-BN)
            pl.BlockSpec((f3, tb), lambda i: (0, i)),            # u
            pl.BlockSpec((f3, 1), const1),                       # mean3
            pl.BlockSpec((f3, 1), const1),                       # rstd3
            pl.BlockSpec((f3, 1), const1),                       # g3
            pl.BlockSpec((f3, 1), const1),                       # be3
            pl.BlockSpec((f3, 1), const1),                       # one_over_beta
            pl.BlockSpec((n_bands, f3), const1),                 # dec_w
        ],
        out_specs=(
            pl.BlockSpec((n_bands, tb), lambda i: (0, i)),
            pl.BlockSpec((f3, tb), lambda i: (0, i)),
            pl.BlockSpec((f3, tb), lambda i: (0, i)),
        ),
        out_shape=(jax.ShapeDtypeStruct((n_bands, B), f32),
                   jax.ShapeDtypeStruct((f3, B), f32),
                   jax.ShapeDtypeStruct((f3, B), f32)),
        compiler_params=pltpu.CompilerParams(
            dimension_semantics=("parallel",),
            vmem_limit_bytes=32 * 1024 * 1024),
    )
    out_t, z_t, alpha_t = decode(a3_t, u, m3, s3, params["g3"], params["be3"],
                                 params["one_over_beta"], params["dec_w"])
    # back to the PyTorch (batch, features) convention (layout plumbing only)
    return out_t.T, z_t.T, alpha_t.T


# ---------------------------------------------------------------------------
# Deterministic parameter construction (shapes from DirVAE.init_architecture:
# hidden_dims = [3, 2, 1, 1]).  Weights use the PyTorch (out, in) layout.
# ---------------------------------------------------------------------------
def _round_bf16(a):
    # Demo inputs/weights are snapped to bf16-representable values so the
    # correctness check is insensitive to the MXU's f32 pass configuration.
    return a.astype(jnp.bfloat16).astype(jnp.float32)


def init_params(key, n_bands, n_ems):
    feats = [3 * n_ems, 2 * n_ems, n_ems, n_ems]
    dims_in = [n_bands] + feats[:-1]
    keys = jax.random.split(key, 2 * len(feats) + 1)
    params = {}
    ki = 0
    for i, (fi, fo) in enumerate(zip(dims_in, feats)):
        w = jax.random.normal(keys[ki], (fo, fi), jnp.float32) / jnp.sqrt(float(fi))
        ki += 1
        params[f"w{i}"] = _round_bf16(w)
        # nn.Linear bias: consumed only by the reference -- it is followed by
        # BatchNorm (mean subtraction), so it cancels exactly and the kernel
        # omits it.
        params[f"b{i}"] = jax.random.uniform(keys[ki], (fo,), jnp.float32,
                                             minval=-0.1, maxval=0.1)
        ki += 1
        params[f"g{i}"] = jnp.ones((fo, 1), jnp.float32)    # BN weight default
        params[f"be{i}"] = jnp.zeros((fo, 1), jnp.float32)  # BN bias default
    # Decoder Linear(n_ems -> n_bands, bias=False), NonNegConstraint applied.
    dec = jnp.abs(jax.random.normal(keys[ki], (n_bands, n_ems), jnp.float32)
                  * jnp.sqrt(2.0 / n_ems))
    params["dec_w"] = _round_bf16(dec)
    params["one_over_beta"] = jnp.ones((n_ems, 1), jnp.float32)
    return params


# ---------------------------------------------------------------------------
# Pure-JAX reference mirroring the PyTorch forward (training-mode BatchNorm
# over the full batch, torch softplus threshold, inverse-CDF multi-gamma).
# ---------------------------------------------------------------------------
def ref_forward(x, p, u):
    hp = jax.lax.Precision.HIGHEST

    def bn(h, g, be):
        m = jnp.mean(h, axis=0, keepdims=True)
        v = jnp.mean((h - m) ** 2, axis=0, keepdims=True)
        return (h - m) / jnp.sqrt(v + 1e-5) * g.reshape(1, -1) + be.reshape(1, -1)

    def lrelu(h):
        return jnp.where(h >= 0.0, h, 0.01 * h)

    h = lrelu(bn(jnp.dot(x, p["w0"].T, precision=hp) + p["b0"], p["g0"], p["be0"]))
    h = lrelu(bn(jnp.dot(h, p["w1"].T, precision=hp) + p["b1"], p["g1"], p["be1"]))
    h = lrelu(bn(jnp.dot(h, p["w2"].T, precision=hp) + p["b2"], p["g2"], p["be2"]))
    h = bn(jnp.dot(h, p["w3"].T, precision=hp) + p["b3"], p["g3"], p["be3"])
    alphas = jnp.where(h > 20.0, h, jnp.log(1.0 + jnp.exp(jnp.minimum(h, 20.0))))

    uu = u.T
    ca = jnp.minimum(alphas, 30.0)
    int1 = 1.0 / jnp.maximum(ca, 1e-8)
    int3 = jnp.exp(gammaln(ca))
    int4 = int3 * uu + 1e-12
    v = p["one_over_beta"].reshape(1, -1) * (int4 * ca) ** int1
    sum_v = jnp.sum(v, axis=1, keepdims=True)
    z = v / jnp.maximum(sum_v, 1e-8)
    out = jnp.dot(z, p["dec_w"].T, precision=hp)
    return out, z, alphas


if __name__ == "__main__":
    B, n_bands, n_ems = 1024, 32, 4

    key = jax.random.PRNGKey(0)
    k_x, k_p, k_u = jax.random.split(key, 3)
    # hyperspectral-pixel-like nonnegative reflectances
    x = _round_bf16(jax.random.uniform(k_x, (B, n_bands), dtype=jnp.float32))
    params = init_params(k_p, n_bands, n_ems)
    # U(0,1) draws (torch.rand_like equivalent), one per latent component
    u = jax.random.uniform(k_u, (n_ems, B), dtype=jnp.float32)

    # Small max tile so the demo exercises multi-tile stats accumulation and a
    # multi-step parallel decode grid; production would keep the default.
    output, z_latent, alphas = dirvae_forward(x, params, u, max_batch_tile=256)
    jax.block_until_ready((output, z_latent, alphas))

    out_ref, z_ref, alphas_ref = ref_forward(x, params, u)

    assert output.shape == (B, n_bands) and z_latent.shape == (B, n_ems)
    assert alphas.shape == (B, n_ems)
    assert jnp.allclose(alphas, alphas_ref, rtol=1e-3, atol=1e-3), "alphas mismatch"
    assert jnp.allclose(z_latent, z_ref, rtol=5e-3, atol=5e-3), "z_latent mismatch"
    assert jnp.allclose(output, out_ref, rtol=5e-3, atol=5e-3), "output mismatch"
    assert bool(jnp.all(jnp.isfinite(output))) and bool(jnp.all(jnp.isfinite(z_latent)))
    assert bool(jnp.all(z_latent >= 0.0))
    assert bool(jnp.allclose(jnp.sum(z_latent, axis=1), 1.0, atol=1e-4)), "simplex check"

    print("KERNEL_OK")
</pallas_src>

<mosaic_0001>
module attributes {stable_mosaic.version = 11 : i64} {
  func.func @_decode_kernel(%arg0: i32, %arg1: memref<4x256xf32, #tpu.memory_space<vmem>>, %arg2: memref<4x256xf32, #tpu.memory_space<vmem>>, %arg3: memref<4x1xf32, #tpu.memory_space<vmem>>, %arg4: memref<4x1xf32, #tpu.memory_space<vmem>>, %arg5: memref<4x1xf32, #tpu.memory_space<vmem>>, %arg6: memref<4x1xf32, #tpu.memory_space<vmem>>, %arg7: memref<4x1xf32, #tpu.memory_space<vmem>>, %arg8: memref<32x4xf32, #tpu.memory_space<vmem>>, %arg9: memref<32x256xf32, #tpu.memory_space<vmem>>, %arg10: memref<4x256xf32, #tpu.memory_space<vmem>>, %arg11: memref<4x256xf32, #tpu.memory_space<vmem>>) attributes {dimension_semantics = [#tpu.dimension_semantics<parallel>], iteration_bounds = array<i64: 4>, scalar_prefetch = 0 : i64, scratch_operands = 0 : i64, tpu.core_type = #tpu.core_type<tc>, window_params = [{transform_indices = @transform_0, window_bounds = array<i64: 4, 256>}, {transform_indices = @transform_1, window_bounds = array<i64: 4, 256>}, {pipeline_mode = #tpu.pipeline_mode<synchronous>, transform_indices = @transform_2, window_bounds = array<i64: 4, 1>}, {pipeline_mode = #tpu.pipeline_mode<synchronous>, transform_indices = @transform_3, window_bounds = array<i64: 4, 1>}, {pipeline_mode = #tpu.pipeline_mode<synchronous>, transform_indices = @transform_4, window_bounds = array<i64: 4, 1>}, {pipeline_mode = #tpu.pipeline_mode<synchronous>, transform_indices = @transform_5, window_bounds = array<i64: 4, 1>}, {pipeline_mode = #tpu.pipeline_mode<synchronous>, transform_indices = @transform_6, window_bounds = array<i64: 4, 1>}, {pipeline_mode = #tpu.pipeline_mode<synchronous>, transform_indices = @transform_7, window_bounds = array<i64: 32, 4>}, {transform_indices = @transform_8, window_bounds = array<i64: 32, 256>}, {transform_indices = @transform_9, window_bounds = array<i64: 4, 256>}, {transform_indices = @transform_10, window_bounds = array<i64: 4, 256>}]} {
    %c0 = arith.constant 0 : index
    %c0_0 = arith.constant 0 : index
    %0 = vector.load %arg1[%c0, %c0_0] : memref<4x256xf32, #tpu.memory_space<vmem>>, vector<4x256xf32>
    %c0_1 = arith.constant 0 : index
    %c0_2 = arith.constant 0 : index
    %1 = vector.load %arg3[%c0_1, %c0_2] : memref<4x1xf32, #tpu.memory_space<vmem>>, vector<4x1xf32>
    %2 = vector.broadcast %1 : vector<4x1xf32> to vector<4x256xf32>
    %3 = arith.subf %0, %2 : vector<4x256xf32>
    %c0_3 = arith.constant 0 : index
    %c0_4 = arith.constant 0 : index
    %4 = vector.load %arg4[%c0_3, %c0_4] : memref<4x1xf32, #tpu.memory_space<vmem>>, vector<4x1xf32>
    %5 = vector.broadcast %4 : vector<4x1xf32> to vector<4x256xf32>
    %6 = arith.mulf %3, %5 : vector<4x256xf32>
    %c0_5 = arith.constant 0 : index
    %c0_6 = arith.constant 0 : index
    %7 = vector.load %arg5[%c0_5, %c0_6] : memref<4x1xf32, #tpu.memory_space<vmem>>, vector<4x1xf32>
    %8 = vector.broadcast %7 : vector<4x1xf32> to vector<4x256xf32>
    %9 = arith.mulf %6, %8 : vector<4x256xf32>
    %c0_7 = arith.constant 0 : index
    %c0_8 = arith.constant 0 : index
    %10 = vector.load %arg6[%c0_7, %c0_8] : memref<4x1xf32, #tpu.memory_space<vmem>>, vector<4x1xf32>
    %11 = vector.broadcast %10 : vector<4x1xf32> to vector<4x256xf32>
    %12 = arith.addf %9, %11 : vector<4x256xf32>
    %cst = arith.constant 2.000000e+01 : f32
    %13 = vector.broadcast %cst : f32 to vector<4x256xf32>
    %14 = arith.cmpf ogt, %12, %13 : vector<4x256xf32>
    %cst_9 = arith.constant 2.000000e+01 : f32
    %15 = vector.broadcast %cst_9 : f32 to vector<4x256xf32>
    %16 = arith.minimumf %12, %15 : vector<4x256xf32>
    %17 = math.exp %16 : vector<4x256xf32>
    %cst_10 = arith.constant 1.000000e+00 : f32
    %18 = vector.broadcast %cst_10 : f32 to vector<4x256xf32>
    %19 = arith.addf %18, %17 : vector<4x256xf32>
    %20 = math.log %19 : vector<4x256xf32>
    %21 = arith.select %14, %12, %20 : vector<4x256xi1>, vector<4x256xf32>
    %c0_11 = arith.constant 0 : index
    %c0_12 = arith.constant 0 : index
    %22 = vector.load %arg11[%c0_11, %c0_12] : memref<4x256xf32, #tpu.memory_space<vmem>>, vector<4x256xf32>
    tpu.vector_store %arg11[%c0_11, %c0_12], %21 {strides = array<i32>} : memref<4x256xf32, #tpu.memory_space<vmem>>, vector<4x256xf32>,
    %cst_13 = arith.constant 9.99999997E-7 : f32
    %cst_14 = arith.constant 3.000000e+01 : f32
    %23 = vector.broadcast %cst_13 : f32 to vector<4x256xf32>
    %24 = arith.maximumf %23, %21 : vector<4x256xf32>
    %25 = vector.broadcast %cst_14 : f32 to vector<4x256xf32>
    %26 = arith.minimumf %25, %24 : vector<4x256xf32>
    %cst_15 = arith.constant 1.000000e+00 : f32
    %27 = vector.broadcast %cst_15 : f32 to vector<4x256xf32>
    %28 = arith.divf %27, %26 : vector<4x256xf32>
    %cst_16 = arith.constant 1.000000e+00 : f32
    %29 = vector.broadcast %cst_16 : f32 to vector<4x256xf32>
    %30 = arith.subf %26, %29 : vector<4x256xf32>
    %cst_17 = arith.constant 1.000000e+00 : f32
    %31 = vector.broadcast %cst_17 : f32 to vector<4x256xf32>
    %32 = arith.mulf %31, %30 : vector<4x256xf32>
    %cst_18 = arith.constant 60.4583321 : f32
    %33 = vector.broadcast %cst_18 : f32 to vector<4x256xf32>
    %34 = arith.addf %32, %33 : vector<4x256xf32>
    %35 = arith.mulf %34, %30 : vector<4x256xf32>
    %cst_19 = arith.constant 1599.04248 : f32
    %36 = vector.broadcast %cst_19 : f32 to vector<4x256xf32>
    %37 = arith.addf %35, %36 : vector<4x256xf32>
    %38 = arith.mulf %37, %30 : vector<4x256xf32>
    %cst_20 = arith.constant 24165.5098 : f32
    %39 = vector.broadcast %cst_20 : f32 to vector<4x256xf32>
    %40 = arith.addf %38, %39 : vector<4x256xf32>
    %41 = arith.mulf %40, %30 : vector<4x256xf32>
    %cst_21 = arith.constant 228235.219 : f32
    %42 = vector.broadcast %cst_21 : f32 to vector<4x256xf32>
    %43 = arith.addf %41, %42 : vector<4x256xf32>
    %44 = arith.mulf %43, %30 : vector<4x256xf32>
    %cst_22 = arith.constant 1379496.25 : f32
    %45 = vector.broadcast %cst_22 : f32 to vector<4x256xf32>
    %46 = arith.addf %44, %45 : vector<4x256xf32>
    %47 = arith.mulf %46, %30 : vector<4x256xf32>
    %cst_23 = arith.constant 0x4A9F05EA : f32
    %48 = vector.broadcast %cst_23 : f32 to vector<4x256xf32>
    %49 = arith.addf %47, %48 : vector<4x256xf32>
    %50 = arith.mulf %49, %30 : vector<4x256xf32>
    %cst_24 = arith.constant 0x4B2B9D51 : f32
    %51 = vector.broadcast %cst_24 : f32 to vector<4x256xf32>
    %52 = arith.addf %50, %51 : vector<4x256xf32>
    %53 = arith.mulf %52, %30 : vector<4x256xf32>
    %cst_25 = arith.constant 0x4B220ADA : f32
    %54 = vector.broadcast %cst_25 : f32 to vector<4x256xf32>
    %55 = arith.addf %53, %54 : vector<4x256xf32>
    %cst_26 = arith.constant 1.000000e+00 : f32
    %56 = vector.broadcast %cst_26 : f32 to vector<4x256xf32>
    %57 = arith.addf %30, %56 : vector<4x256xf32>
    %cst_27 = arith.constant 2.000000e+00 : f32
    %58 = vector.broadcast %cst_27 : f32 to vector<4x256xf32>
    %59 = arith.addf %30, %58 : vector<4x256xf32>
    %60 = arith.mulf %57, %59 : vector<4x256xf32>
    %cst_28 = arith.constant 3.000000e+00 : f32
    %61 = vector.broadcast %cst_28 : f32 to vector<4x256xf32>
    %62 = arith.addf %30, %61 : vector<4x256xf32>
    %63 = arith.mulf %60, %62 : vector<4x256xf32>
    %cst_29 = arith.constant 4.000000e+00 : f32
    %64 = vector.broadcast %cst_29 : f32 to vector<4x256xf32>
    %65 = arith.addf %30, %64 : vector<4x256xf32>
    %66 = arith.mulf %63, %65 : vector<4x256xf32>
    %cst_30 = arith.constant 5.000000e+00 : f32
    %67 = vector.broadcast %cst_30 : f32 to vector<4x256xf32>
    %68 = arith.addf %30, %67 : vector<4x256xf32>
    %69 = arith.mulf %66, %68 : vector<4x256xf32>
    %cst_31 = arith.constant 6.000000e+00 : f32
    %70 = vector.broadcast %cst_31 : f32 to vector<4x256xf32>
    %71 = arith.addf %30, %70 : vector<4x256xf32>
    %72 = arith.mulf %69, %71 : vector<4x256xf32>
    %cst_32 = arith.constant 7.000000e+00 : f32
    %73 = vector.broadcast %cst_32 : f32 to vector<4x256xf32>
    %74 = arith.addf %30, %73 : vector<4x256xf32>
    %75 = arith.mulf %72, %74 : vector<4x256xf32>
    %cst_33 = arith.constant 8.000000e+00 : f32
    %76 = vector.broadcast %cst_33 : f32 to vector<4x256xf32>
    %77 = arith.addf %30, %76 : vector<4x256xf32>
    %78 = arith.mulf %75, %77 : vector<4x256xf32>
    %cst_34 = arith.constant 7.500000e+00 : f32
    %79 = vector.broadcast %cst_34 : f32 to vector<4x256xf32>
    %80 = arith.addf %30, %79 : vector<4x256xf32>
    %cst_35 = arith.constant 5.000000e-01 : f32
    %81 = vector.broadcast %cst_35 : f32 to vector<4x256xf32>
    %82 = arith.addf %30, %81 : vector<4x256xf32>
    %83 = math.log %80 : vector<4x256xf32>
    %84 = arith.mulf %82, %83 : vector<4x256xf32>
    %cst_36 = arith.constant 0.918938517 : f32
    %85 = vector.broadcast %cst_36 : f32 to vector<4x256xf32>
    %86 = arith.addf %85, %84 : vector<4x256xf32>
    %87 = arith.subf %86, %80 : vector<4x256xf32>
    %88 = arith.divf %55, %78 : vector<4x256xf32>
    %89 = math.log %88 : vector<4x256xf32>
    %90 = arith.addf %87, %89 : vector<4x256xf32>
    %91 = math.exp %90 : vector<4x256xf32>
    %c0_37 = arith.constant 0 : index
    %c0_38 = arith.constant 0 : index
    %92 = vector.load %arg2[%c0_37, %c0_38] : memref<4x256xf32, #tpu.memory_space<vmem>>, vector<4x256xf32>
    %93 = arith.mulf %91, %92 : vector<4x256xf32>
    %cst_39 = arith.constant 9.99999996E-13 : f32
    %94 = vector.broadcast %cst_39 : f32 to vector<4x256xf32>
    %95 = arith.addf %93, %94 : vector<4x256xf32>
    %c0_40 = arith.constant 0 : index
    %c0_41 = arith.constant 0 : index
    %96 = vector.load %arg7[%c0_40, %c0_41] : memref<4x1xf32, #tpu.memory_space<vmem>>, vector<4x1xf32>
    %97 = arith.mulf %95, %26 : vector<4x256xf32>
    %98 = math.log %97 : vector<4x256xf32>
    %99 = arith.mulf %28, %98 : vector<4x256xf32>
    %100 = math.exp %99 : vector<4x256xf32>
    %101 = vector.broadcast %96 : vector<4x1xf32> to vector<4x256xf32>
    %102 = arith.mulf %101, %100 : vector<4x256xf32>
    %cst_42 = arith.constant dense<0.000000e+00> : vector<256xf32>
    %103 = vector.multi_reduction <add>, %102, %cst_42 [0] : vector<4x256xf32> to vector<256xf32>
    %104 = vector.shape_cast %103 : vector<256xf32> to vector<1x256xf32>
    %cst_43 = arith.constant 9.99999993E-9 : f32
    %105 = vector.broadcast %cst_43 : f32 to vector<1x256xf32>
    %106 = arith.maximumf %104, %105 : vector<1x256xf32>
    %107 = vector.broadcast %106 : vector<1x256xf32> to vector<4x256xf32>
    %108 = arith.divf %102, %107 : vector<4x256xf32>
    %c0_44 = arith.constant 0 : index
    %c0_45 = arith.constant 0 : index
    %109 = vector.load %arg10[%c0_44, %c0_45] : memref<4x256xf32, #tpu.memory_space<vmem>>, vector<4x256xf32>
    tpu.vector_store %arg10[%c0_44, %c0_45], %108 {strides = array<i32>} : memref<4x256xf32, #tpu.memory_space<vmem>>, vector<4x256xf32>,
    %c0_46 = arith.constant 0 : index
    %c0_47 = arith.constant 0 : index
    %110 = vector.load %arg8[%c0_46, %c0_47] : memref<32x4xf32, #tpu.memory_space<vmem>>, vector<32x4xf32>
    %cst_48 = arith.constant dense<0.000000e+00> : vector<32x256xf32>
    %111 = tpu.matmul %110, %108, %cst_48 {dimension_numbers = #tpu.dot_dimension_numbers<[1], [0], [0], [1], [0, 0, 1, 1], [], []>, precision = #tpu.contract_precision<fp32>} : vector<32x4xf32>, vector<4x256xf32>, vector<32x256xf32> -> vector<32x256xf32>
    %c0_49 = arith.constant 0 : index
    %c0_50 = arith.constant 0 : index
    %112 = vector.load %arg9[%c0_49, %c0_50] : memref<32x256xf32, #tpu.memory_space<vmem>>, vector<32x256xf32>
    tpu.vector_store %arg9[%c0_49, %c0_50], %111 {strides = array<i32>} : memref<32x256xf32, #tpu.memory_space<vmem>>, vector<32x256xf32>,
    return
  }
  func.func @transform_0(%arg0: i32) -> (i32, i32) {
    %c0_i32 = arith.constant 0 : i32
    %c0_i32_0 = arith.constant 0 : i32
    return %c0_i32, %arg0 : i32, i32
  }
  func.func @transform_1(%arg0: i32) -> (i32, i32) {
    %c0_i32 = arith.constant 0 : i32
    %c0_i32_0 = arith.constant 0 : i32
    return %c0_i32, %arg0 : i32, i32
  }
  func.func @transform_2(%arg0: i32) -> (i32, i32) {
    %c0_i32 = arith.constant 0 : i32
    %c0_i32_0 = arith.constant 0 : i32
    %c0_i32_1 = arith.constant 0 : i32
    return %c0_i32, %c0_i32_0 : i32, i32
  }
  func.func @transform_3(%arg0: i32) -> (i32, i32) {
    %c0_i32 = arith.constant 0 : i32
    %c0_i32_0 = arith.constant 0 : i32
    %c0_i32_1 = arith.constant 0 : i32
    return %c0_i32, %c0_i32_0 : i32, i32
  }
  func.func @transform_4(%arg0: i32) -> (i32, i32) {
    %c0_i32 = arith.constant 0 : i32
    %c0_i32_0 = arith.constant 0 : i32
    %c0_i32_1 = arith.constant 0 : i32
    return %c0_i32, %c0_i32_0 : i32, i32
  }
  func.func @transform_5(%arg0: i32) -> (i32, i32) {
    %c0_i32 = arith.constant 0 : i32
    %c0_i32_0 = arith.constant 0 : i32
    %c0_i32_1 = arith.constant 0 : i32
    return %c0_i32, %c0_i32_0 : i32, i32
  }
  func.func @transform_6(%arg0: i32) -> (i32, i32) {
    %c0_i32 = arith.constant 0 : i32
    %c0_i32_0 = arith.constant 0 : i32
    %c0_i32_1 = arith.constant 0 : i32
    return %c0_i32, %c0_i32_0 : i32, i32
  }
  func.func @transform_7(%arg0: i32) -> (i32, i32) {
    %c0_i32 = arith.constant 0 : i32
    %c0_i32_0 = arith.constant 0 : i32
    %c0_i32_1 = arith.constant 0 : i32
    return %c0_i32, %c0_i32_0 : i32, i32
  }
  func.func @transform_8(%arg0: i32) -> (i32, i32) {
    %c0_i32 = arith.constant 0 : i32
    %c0_i32_0 = arith.constant 0 : i32
    return %c0_i32, %arg0 : i32, i32
  }
  func.func @transform_9(%arg0: i32) -> (i32, i32) {
    %c0_i32 = arith.constant 0 : i32
    %c0_i32_0 = arith.constant 0 : i32
    return %c0_i32, %arg0 : i32, i32
  }
  func.func @transform_10(%arg0: i32) -> (i32, i32) {
    %c0_i32 = arith.constant 0 : i32
    %c0_i32_0 = arith.constant 0 : i32
    return %c0_i32, %arg0 : i32, i32
  }
}

module attributes {stable_mosaic.version = 11 : i64} {
  func.func @_encoder_stats_kernel(%arg0: i32, %arg1: i32, %arg2: memref<256x32xf32, #tpu.memory_space<vmem>>, %arg3: memref<12x32xf32, #tpu.memory_space<vmem>>, %arg4: memref<8x12xf32, #tpu.memory_space<vmem>>, %arg5: memref<4x8xf32, #tpu.memory_space<vmem>>, %arg6: memref<4x4xf32, #tpu.memory_space<vmem>>, %arg7: memref<12x1xf32, #tpu.memory_space<vmem>>, %arg8: memref<12x1xf32, #tpu.memory_space<vmem>>, %arg9: memref<8x1xf32, #tpu.memory_space<vmem>>, %arg10: memref<8x1xf32, #tpu.memory_space<vmem>>, %arg11: memref<4x1xf32, #tpu.memory_space<vmem>>, %arg12: memref<4x1xf32, #tpu.memory_space<vmem>>, %arg13: memref<4x256xf32, #tpu.memory_space<vmem>>, %arg14: memref<12x1xf32, #tpu.memory_space<vmem>>, %arg15: memref<12x1xf32, #tpu.memory_space<vmem>>, %arg16: memref<8x1xf32, #tpu.memory_space<vmem>>, %arg17: memref<8x1xf32, #tpu.memory_space<vmem>>, %arg18: memref<4x1xf32, #tpu.memory_space<vmem>>, %arg19: memref<4x1xf32, #tpu.memory_space<vmem>>, %arg20: memref<4x1xf32, #tpu.memory_space<vmem>>, %arg21: memref<4x1xf32, #tpu.memory_space<vmem>>) attributes {dimension_semantics = [#tpu.dimension_semantics<arbitrary>, #tpu.dimension_semantics<arbitrary>], iteration_bounds = array<i64: 4, 4>, scalar_prefetch = 0 : i64, scratch_operands = 0 : i64, tpu.core_type = #tpu.core_type<tc>, window_params = [{transform_indices = @transform_0, window_bounds = array<i64: 256, 32>}, {pipeline_mode = #tpu.pipeline_mode<synchronous>, transform_indices = @transform_1, window_bounds = array<i64: 12, 32>}, {pipeline_mode = #tpu.pipeline_mode<synchronous>, transform_indices = @transform_2, window_bounds = array<i64: 8, 12>}, {pipeline_mode = #tpu.pipeline_mode<synchronous>, transform_indices = @transform_3, window_bounds = array<i64: 4, 8>}, {pipeline_mode = #tpu.pipeline_mode<synchronous>, transform_indices = @transform_4, window_bounds = array<i64: 4, 4>}, {pipeline_mode = #tpu.pipeline_mode<synchronous>, transform_indices = @transform_5, window_bounds = array<i64: 12, 1>}, {pipeline_mode = #tpu.pipeline_mode<synchronous>, transform_indices = @transform_6, window_bounds = array<i64: 12, 1>}, {pipeline_mode = #tpu.pipeline_mode<synchronous>, transform_indices = @transform_7, window_bounds = array<i64: 8, 1>}, {pipeline_mode = #tpu.pipeline_mode<synchronous>, transform_indices = @transform_8, window_bounds = array<i64: 8, 1>}, {pipeline_mode = #tpu.pipeline_mode<synchronous>, transform_indices = @transform_9, window_bounds = array<i64: 4, 1>}, {pipeline_mode = #tpu.pipeline_mode<synchronous>, transform_indices = @transform_10, window_bounds = array<i64: 4, 1>}, {transform_indices = @transform_11, window_bounds = array<i64: 4, 256>}, {pipeline_mode = #tpu.pipeline_mode<synchronous>, transform_indices = @transform_12, window_bounds = array<i64: 12, 1>}, {pipeline_mode = #tpu.pipeline_mode<synchronous>, transform_indices = @transform_13, window_bounds = array<i64: 12, 1>}, {pipeline_mode = #tpu.pipeline_mode<synchronous>, transform_indices = @transform_14, window_bounds = array<i64: 8, 1>}, {pipeline_mode = #tpu.pipeline_mode<synchronous>, transform_indices = @transform_15, window_bounds = array<i64: 8, 1>}, {pipeline_mode = #tpu.pipeline_mode<synchronous>, transform_indices = @transform_16, window_bounds = array<i64: 4, 1>}, {pipeline_mode = #tpu.pipeline_mode<synchronous>, transform_indices = @transform_17, window_bounds = array<i64: 4, 1>}, {pipeline_mode = #tpu.pipeline_mode<synchronous>, transform_indices = @transform_18, window_bounds = array<i64: 4, 1>}, {pipeline_mode = #tpu.pipeline_mode<synchronous>, transform_indices = @transform_19, window_bounds = array<i64: 4, 1>}]} {
    %c0_i32 = arith.constant 0 : i32
    %0 = arith.cmpi eq, %arg0, %c0_i32 : i32
    %c0_i32_0 = arith.constant 0 : i32
    %1 = arith.cmpi eq, %arg1, %c0_i32_0 : i32
    %2 = arith.andi %0, %1 : i1
    %3 = arith.extui %2 : i1 to i32
    %c0_i32_1 = arith.constant 0 : i32
    %4 = arith.cmpi ne, %3, %c0_i32_1 : i32
    scf.if %4 {
      %cst_63 = arith.constant 0.000000e+00 : f32
      %98 = vector.broadcast %cst_63 : f32 to vector<12x1xf32>
      %c0_64 = arith.constant 0 : index
      %c0_65 = arith.constant 0 : index
      %99 = vector.load %arg14[%c0_64, %c0_65] : memref<12x1xf32, #tpu.memory_space<vmem>>, vector<12x1xf32>
      tpu.vector_store %arg14[%c0_64, %c0_65], %98 {strides = array<i32>} : memref<12x1xf32, #tpu.memory_space<vmem>>, vector<12x1xf32>,
      %cst_66 = arith.constant 0.000000e+00 : f32
      %100 = vector.broadcast %cst_66 : f32 to vector<12x1xf32>
      %c0_67 = arith.constant 0 : index
      %c0_68 = arith.constant 0 : index
      %101 = vector.load %arg15[%c0_67, %c0_68] : memref<12x1xf32, #tpu.memory_space<vmem>>, vector<12x1xf32>
      tpu.vector_store %arg15[%c0_67, %c0_68], %100 {strides = array<i32>} : memref<12x1xf32, #tpu.memory_space<vmem>>, vector<12x1xf32>,
      %cst_69 = arith.constant 0.000000e+00 : f32
      %102 = vector.broadcast %cst_69 : f32 to vector<8x1xf32>
      %c0_70 = arith.constant 0 : index
      %c0_71 = arith.constant 0 : index
      %103 = vector.load %arg16[%c0_70, %c0_71] : memref<8x1xf32, #tpu.memory_space<vmem>>, vector<8x1xf32>
      tpu.vector_store %arg16[%c0_70, %c0_71], %102 {strides = array<i32>} : memref<8x1xf32, #tpu.memory_space<vmem>>, vector<8x1xf32>,
      %cst_72 = arith.constant 0.000000e+00 : f32
      %104 = vector.broadcast %cst_72 : f32 to vector<8x1xf32>
      %c0_73 = arith.constant 0 : index
      %c0_74 = arith.constant 0 : index
      %105 = vector.load %arg17[%c0_73, %c0_74] : memref<8x1xf32, #tpu.memory_space<vmem>>, vector<8x1xf32>
      tpu.vector_store %arg17[%c0_73, %c0_74], %104 {strides = array<i32>} : memref<8x1xf32, #tpu.memory_space<vmem>>, vector<8x1xf32>,
      %cst_75 = arith.constant 0.000000e+00 : f32
      %106 = vector.broadcast %cst_75 : f32 to vector<4x1xf32>
      %c0_76 = arith.constant 0 : index
      %c0_77 = arith.constant 0 : index
      %107 = vector.load %arg18[%c0_76, %c0_77] : memref<4x1xf32, #tpu.memory_space<vmem>>, vector<4x1xf32>
      tpu.vector_store %arg18[%c0_76, %c0_77], %106 {strides = array<i32>} : memref<4x1xf32, #tpu.memory_space<vmem>>, vector<4x1xf32>,
      %cst_78 = arith.constant 0.000000e+00 : f32
      %108 = vector.broadcast %cst_78 : f32 to vector<4x1xf32>
      %c0_79 = arith.constant 0 : index
      %c0_80 = arith.constant 0 : index
      %109 = vector.load %arg19[%c0_79, %c0_80] : memref<4x1xf32, #tpu.memory_space<vmem>>, vector<4x1xf32>
      tpu.vector_store %arg19[%c0_79, %c0_80], %108 {strides = array<i32>} : memref<4x1xf32, #tpu.memory_space<vmem>>, vector<4x1xf32>,
      %cst_81 = arith.constant 0.000000e+00 : f32
      %110 = vector.broadcast %cst_81 : f32 to vector<4x1xf32>
      %c0_82 = arith.constant 0 : index
      %c0_83 = arith.constant 0 : index
      %111 = vector.load %arg20[%c0_82, %c0_83] : memref<4x1xf32, #tpu.memory_space<vmem>>, vector<4x1xf32>
      tpu.vector_store %arg20[%c0_82, %c0_83], %110 {strides = array<i32>} : memref<4x1xf32, #tpu.memory_space<vmem>>, vector<4x1xf32>,
      %cst_84 = arith.constant 0.000000e+00 : f32
      %112 = vector.broadcast %cst_84 : f32 to vector<4x1xf32>
      %c0_85 = arith.constant 0 : index
      %c0_86 = arith.constant 0 : index
      %113 = vector.load %arg21[%c0_85, %c0_86] : memref<4x1xf32, #tpu.memory_space<vmem>>, vector<4x1xf32>
      tpu.vector_store %arg21[%c0_85, %c0_86], %112 {strides = array<i32>} : memref<4x1xf32, #tpu.memory_space<vmem>>, vector<4x1xf32>,
    } else {
    }
    %c0 = arith.constant 0 : index
    %c0_2 = arith.constant 0 : index
    %5 = vector.load %arg2[%c0, %c0_2] : memref<256x32xf32, #tpu.memory_space<vmem>>, vector<256x32xf32>
    %c0_3 = arith.constant 0 : index
    %c0_4 = arith.constant 0 : index
    %6 = vector.load %arg3[%c0_3, %c0_4] : memref<12x32xf32, #tpu.memory_space<vmem>>, vector<12x32xf32>
    %cst = arith.constant dense<0.000000e+00> : vector<12x256xf32>
    %7 = tpu.matmul %6, %5, %cst {dimension_numbers = #tpu.dot_dimension_numbers<[1], [1], [0], [0], [0, 0, 1, 0], [], []>, precision = #tpu.contract_precision<fp32>} : vector<12x32xf32>, vector<256x32xf32>, vector<12x256xf32> -> vector<12x256xf32>
    %c0_i32_5 = arith.constant 0 : i32
    %8 = arith.cmpi eq, %arg0, %c0_i32_5 : i32
    %9 = arith.extui %8 : i1 to i32
    %c0_i32_6 = arith.constant 0 : i32
    %10 = arith.cmpi ne, %9, %c0_i32_6 : i32
    scf.if %10 {
      %c0_63 = arith.constant 0 : index
      %c0_64 = arith.constant 0 : index
      %98 = vector.load %arg14[%c0_63, %c0_64] : memref<12x1xf32, #tpu.memory_space<vmem>>, vector<12x1xf32>
      %cst_65 = arith.constant dense<0.000000e+00> : vector<12xf32>
      %99 = vector.multi_reduction <add>, %7, %cst_65 [1] : vector<12x256xf32> to vector<12xf32>
      %100 = vector.shape_cast %99 : vector<12xf32> to vector<12x1xf32>
      %101 = arith.addf %98, %100 : vector<12x1xf32>
      %c0_66 = arith.constant 0 : index
      %c0_67 = arith.constant 0 : index
      %102 = vector.load %arg14[%c0_66, %c0_67] : memref<12x1xf32, #tpu.memory_space<vmem>>, vector<12x1xf32>
      tpu.vector_store %arg14[%c0_66, %c0_67], %101 {strides = array<i32>} : memref<12x1xf32, #tpu.memory_space<vmem>>, vector<12x1xf32>,
      %c0_68 = arith.constant 0 : index
      %c0_69 = arith.constant 0 : index
      %103 = vector.load %arg15[%c0_68, %c0_69] : memref<12x1xf32, #tpu.memory_space<vmem>>, vector<12x1xf32>
      %104 = arith.mulf %7, %7 : vector<12x256xf32>
      %cst_70 = arith.constant dense<0.000000e+00> : vector<12xf32>
      %105 = vector.multi_reduction <add>, %104, %cst_70 [1] : vector<12x256xf32> to vector<12xf32>
      %106 = vector.shape_cast %105 : vector<12xf32> to vector<12x1xf32>
      %107 = arith.addf %103, %106 : vector<12x1xf32>
      %c0_71 = arith.constant 0 : index
      %c0_72 = arith.constant 0 : index
      %108 = vector.load %arg15[%c0_71, %c0_72] : memref<12x1xf32, #tpu.memory_space<vmem>>, vector<12x1xf32>
      tpu.vector_store %arg15[%c0_71, %c0_72], %107 {strides = array<i32>} : memref<12x1xf32, #tpu.memory_space<vmem>>, vector<12x1xf32>,
    } else {
    }
    %c0_i32_7 = arith.constant 0 : i32
    %11 = arith.cmpi eq, %arg0, %c0_i32_7 : i32
    %c3_i32 = arith.constant 3 : i32
    %12 = arith.cmpi eq, %arg1, %c3_i32 : i32
    %13 = arith.andi %11, %12 : i1
    %14 = arith.extui %13 : i1 to i32
    %c0_i32_8 = arith.constant 0 : i32
    %15 = arith.cmpi ne, %14, %c0_i32_8 : i32
    scf.if %15 {
      %c0_63 = arith.constant 0 : index
      %c0_64 = arith.constant 0 : index
      %98 = vector.load %arg14[%c0_63, %c0_64] : memref<12x1xf32, #tpu.memory_space<vmem>>, vector<12x1xf32>
      %cst_65 = arith.constant 9.765625E-4 : f32
      %99 = vector.broadcast %cst_65 : f32 to vector<12x1xf32>
      %100 = arith.mulf %98, %99 : vector<12x1xf32>
      %c0_66 = arith.constant 0 : index
      %c0_67 = arith.constant 0 : index
      %101 = vector.load %arg15[%c0_66, %c0_67] : memref<12x1xf32, #tpu.memory_space<vmem>>, vector<12x1xf32>
      %cst_68 = arith.constant 9.765625E-4 : f32
      %102 = vector.broadcast %cst_68 : f32 to vector<12x1xf32>
      %103 = arith.mulf %101, %102 : vector<12x1xf32>
      %104 = arith.mulf %100, %100 : vector<12x1xf32>
      %105 = arith.subf %103, %104 : vector<12x1xf32>
      %c0_69 = arith.constant 0 : index
      %c0_70 = arith.constant 0 : index
      %106 = vector.load %arg14[%c0_69, %c0_70] : memref<12x1xf32, #tpu.memory_space<vmem>>, vector<12x1xf32>
      tpu.vector_store %arg14[%c0_69, %c0_70], %100 {strides = array<i32>} : memref<12x1xf32, #tpu.memory_space<vmem>>, vector<12x1xf32>,
      %cst_71 = arith.constant 9.99999974E-6 : f32
      %107 = vector.broadcast %cst_71 : f32 to vector<12x1xf32>
      %108 = arith.addf %105, %107 : vector<12x1xf32>
      %109 = math.rsqrt %108 : vector<12x1xf32>
      %c0_72 = arith.constant 0 : index
      %c0_73 = arith.constant 0 : index
      %110 = vector.load %arg15[%c0_72, %c0_73] : memref<12x1xf32, #tpu.memory_space<vmem>>, vector<12x1xf32>
      tpu.vector_store %arg15[%c0_72, %c0_73], %109 {strides = array<i32>} : memref<12x1xf32, #tpu.memory_space<vmem>>, vector<12x1xf32>,
    } else {
    }
    %c0_9 = arith.constant 0 : index
    %c0_10 = arith.constant 0 : index
    %16 = vector.load %arg14[%c0_9, %c0_10] : memref<12x1xf32, #tpu.memory_space<vmem>>, vector<12x1xf32>
    %17 = vector.broadcast %16 : vector<12x1xf32> to vector<12x256xf32>
    %18 = arith.subf %7, %17 : vector<12x256xf32>
    %c0_11 = arith.constant 0 : index
    %c0_12 = arith.constant 0 : index
    %19 = vector.load %arg15[%c0_11, %c0_12] : memref<12x1xf32, #tpu.memory_space<vmem>>, vector<12x1xf32>
    %20 = vector.broadcast %19 : vector<12x1xf32> to vector<12x256xf32>
    %21 = arith.mulf %18, %20 : vector<12x256xf32>
    %c0_13 = arith.constant 0 : index
    %c0_14 = arith.constant 0 : index
    %22 = vector.load %arg7[%c0_13, %c0_14] : memref<12x1xf32, #tpu.memory_space<vmem>>, vector<12x1xf32>
    %23 = vector.broadcast %22 : vector<12x1xf32> to vector<12x256xf32>
    %24 = arith.mulf %21, %23 : vector<12x256xf32>
    %c0_15 = arith.constant 0 : index
    %c0_16 = arith.constant 0 : index
    %25 = vector.load %arg8[%c0_15, %c0_16] : memref<12x1xf32, #tpu.memory_space<vmem>>, vector<12x1xf32>
    %26 = vector.broadcast %25 : vector<12x1xf32> to vector<12x256xf32>
    %27 = arith.addf %24, %26 : vector<12x256xf32>
    %cst_17 = arith.constant 0.000000e+00 : f32
    %28 = vector.broadcast %cst_17 : f32 to vector<12x256xf32>
    %29 = arith.cmpf oge, %27, %28 : vector<12x256xf32>
    %cst_18 = arith.constant 0.00999999977 : f32
    %30 = vector.broadcast %cst_18 : f32 to vector<12x256xf32>
    %31 = arith.mulf %30, %27 : vector<12x256xf32>
    %32 = arith.select %29, %27, %31 : vector<12x256xi1>, vector<12x256xf32>
    %c0_19 = arith.constant 0 : index
    %c0_20 = arith.constant 0 : index
    %33 = vector.load %arg4[%c0_19, %c0_20] : memref<8x12xf32, #tpu.memory_space<vmem>>, vector<8x12xf32>
    %cst_21 = arith.constant dense<0.000000e+00> : vector<8x256xf32>
    %34 = tpu.matmul %33, %32, %cst_21 {dimension_numbers = #tpu.dot_dimension_numbers<[1], [0], [0], [1], [0, 0, 1, 1], [], []>, precision = #tpu.contract_precision<fp32>} : vector<8x12xf32>, vector<12x256xf32>, vector<8x256xf32> -> vector<8x256xf32>
    %c1_i32 = arith.constant 1 : i32
    %35 = arith.cmpi eq, %arg0, %c1_i32 : i32
    %36 = arith.extui %35 : i1 to i32
    %c0_i32_22 = arith.constant 0 : i32
    %37 = arith.cmpi ne, %36, %c0_i32_22 : i32
    scf.if %37 {
      %c0_63 = arith.constant 0 : index
      %c0_64 = arith.constant 0 : index
      %98 = vector.load %arg16[%c0_63, %c0_64] : memref<8x1xf32, #tpu.memory_space<vmem>>, vector<8x1xf32>
      %cst_65 = arith.constant dense<0.000000e+00> : vector<8xf32>
      %99 = vector.multi_reduction <add>, %34, %cst_65 [1] : vector<8x256xf32> to vector<8xf32>
      %100 = vector.shape_cast %99 : vector<8xf32> to vector<8x1xf32>
      %101 = arith.addf %98, %100 : vector<8x1xf32>
      %c0_66 = arith.constant 0 : index
      %c0_67 = arith.constant 0 : index
      %102 = vector.load %arg16[%c0_66, %c0_67] : memref<8x1xf32, #tpu.memory_space<vmem>>, vector<8x1xf32>
      tpu.vector_store %arg16[%c0_66, %c0_67], %101 {strides = array<i32>} : memref<8x1xf32, #tpu.memory_space<vmem>>, vector<8x1xf32>,
      %c0_68 = arith.constant 0 : index
      %c0_69 = arith.constant 0 : index
      %103 = vector.load %arg17[%c0_68, %c0_69] : memref<8x1xf32, #tpu.memory_space<vmem>>, vector<8x1xf32>
      %104 = arith.mulf %34, %34 : vector<8x256xf32>
      %cst_70 = arith.constant dense<0.000000e+00> : vector<8xf32>
      %105 = vector.multi_reduction <add>, %104, %cst_70 [1] : vector<8x256xf32> to vector<8xf32>
      %106 = vector.shape_cast %105 : vector<8xf32> to vector<8x1xf32>
      %107 = arith.addf %103, %106 : vector<8x1xf32>
      %c0_71 = arith.constant 0 : index
      %c0_72 = arith.constant 0 : index
      %108 = vector.load %arg17[%c0_71, %c0_72] : memref<8x1xf32, #tpu.memory_space<vmem>>, vector<8x1xf32>
      tpu.vector_store %arg17[%c0_71, %c0_72], %107 {strides = array<i32>} : memref<8x1xf32, #tpu.memory_space<vmem>>, vector<8x1xf32>,
    } else {
    }
    %c1_i32_23 = arith.constant 1 : i32
    %38 = arith.cmpi eq, %arg0, %c1_i32_23 : i32
    %c3_i32_24 = arith.constant 3 : i32
    %39 = arith.cmpi eq, %arg1, %c3_i32_24 : i32
    %40 = arith.andi %38, %39 : i1
    %41 = arith.extui %40 : i1 to i32
    %c0_i32_25 = arith.constant 0 : i32
    %42 = arith.cmpi ne, %41, %c0_i32_25 : i32
    scf.if %42 {
      %c0_63 = arith.constant 0 : index
      %c0_64 = arith.constant 0 : index
      %98 = vector.load %arg16[%c0_63, %c0_64] : memref<8x1xf32, #tpu.memory_space<vmem>>, vector<8x1xf32>
      %cst_65 = arith.constant 9.765625E-4 : f32
      %99 = vector.broadcast %cst_65 : f32 to vector<8x1xf32>
      %100 = arith.mulf %98, %99 : vector<8x1xf32>
      %c0_66 = arith.constant 0 : index
      %c0_67 = arith.constant 0 : index
      %101 = vector.load %arg17[%c0_66, %c0_67] : memref<8x1xf32, #tpu.memory_space<vmem>>, vector<8x1xf32>
      %cst_68 = arith.constant 9.765625E-4 : f32
      %102 = vector.broadcast %cst_68 : f32 to vector<8x1xf32>
      %103 = arith.mulf %101, %102 : vector<8x1xf32>
      %104 = arith.mulf %100, %100 : vector<8x1xf32>
      %105 = arith.subf %103, %104 : vector<8x1xf32>
      %c0_69 = arith.constant 0 : index
      %c0_70 = arith.constant 0 : index
      %106 = vector.load %arg16[%c0_69, %c0_70] : memref<8x1xf32, #tpu.memory_space<vmem>>, vector<8x1xf32>
      tpu.vector_store %arg16[%c0_69, %c0_70], %100 {strides = array<i32>} : memref<8x1xf32, #tpu.memory_space<vmem>>, vector<8x1xf32>,
      %cst_71 = arith.constant 9.99999974E-6 : f32
      %107 = vector.broadcast %cst_71 : f32 to vector<8x1xf32>
      %108 = arith.addf %105, %107 : vector<8x1xf32>
      %109 = math.rsqrt %108 : vector<8x1xf32>
      %c0_72 = arith.constant 0 : index
      %c0_73 = arith.constant 0 : index
      %110 = vector.load %arg17[%c0_72, %c0_73] : memref<8x1xf32, #tpu.memory_space<vmem>>, vector<8x1xf32>
      tpu.vector_store %arg17[%c0_72, %c0_73], %109 {strides = array<i32>} : memref<8x1xf32, #tpu.memory_space<vmem>>, vector<8x1xf32>,
    } else {
    }
    %c0_26 = arith.constant 0 : index
    %c0_27 = arith.constant 0 : index
    %43 = vector.load %arg16[%c0_26, %c0_27] : memref<8x1xf32, #tpu.memory_space<vmem>>, vector<8x1xf32>
    %44 = vector.broadcast %43 : vector<8x1xf32> to vector<8x256xf32>
    %45 = arith.subf %34, %44 : vector<8x256xf32>
    %c0_28 = arith.constant 0 : index
    %c0_29 = arith.constant 0 : index
    %46 = vector.load %arg17[%c0_28, %c0_29] : memref<8x1xf32, #tpu.memory_space<vmem>>, vector<8x1xf32>
    %47 = vector.broadcast %46 : vector<8x1xf32> to vector<8x256xf32>
    %48 = arith.mulf %45, %47 : vector<8x256xf32>
    %c0_30 = arith.constant 0 : index
    %c0_31 = arith.constant 0 : index
    %49 = vector.load %arg9[%c0_30, %c0_31] : memref<8x1xf32, #tpu.memory_space<vmem>>, vector<8x1xf32>
    %50 = vector.broadcast %49 : vector<8x1xf32> to vector<8x256xf32>
    %51 = arith.mulf %48, %50 : vector<8x256xf32>
    %c0_32 = arith.constant 0 : index
    %c0_33 = arith.constant 0 : index
    %52 = vector.load %arg10[%c0_32, %c0_33] : memref<8x1xf32, #tpu.memory_space<vmem>>, vector<8x1xf32>
    %53 = vector.broadcast %52 : vector<8x1xf32> to vector<8x256xf32>
    %54 = arith.addf %51, %53 : vector<8x256xf32>
    %cst_34 = arith.constant 0.000000e+00 : f32
    %55 = vector.broadcast %cst_34 : f32 to vector<8x256xf32>
    %56 = arith.cmpf oge, %54, %55 : vector<8x256xf32>
    %cst_35 = arith.constant 0.00999999977 : f32
    %57 = vector.broadcast %cst_35 : f32 to vector<8x256xf32>
    %58 = arith.mulf %57, %54 : vector<8x256xf32>
    %59 = arith.select %56, %54, %58 : vector<8x256xi1>, vector<8x256xf32>
    %c0_36 = arith.constant 0 : index
    %c0_37 = arith.constant 0 : index
    %60 = vector.load %arg5[%c0_36, %c0_37] : memref<4x8xf32, #tpu.memory_space<vmem>>, vector<4x8xf32>
    %cst_38 = arith.constant dense<0.000000e+00> : vector<4x256xf32>
    %61 = tpu.matmul %60, %59, %cst_38 {dimension_numbers = #tpu.dot_dimension_numbers<[1], [0], [0], [1], [0, 0, 1, 1], [], []>, precision = #tpu.contract_precision<fp32>} : vector<4x8xf32>, vector<8x256xf32>, vector<4x256xf32> -> vector<4x256xf32>
    %c2_i32 = arith.constant 2 : i32
    %62 = arith.cmpi eq, %arg0, %c2_i32 : i32
    %63 = arith.extui %62 : i1 to i32
    %c0_i32_39 = arith.constant 0 : i32
    %64 = arith.cmpi ne, %63, %c0_i32_39 : i32
    scf.if %64 {
      %c0_63 = arith.constant 0 : index
      %c0_64 = arith.constant 0 : index
      %98 = vector.load %arg18[%c0_63, %c0_64] : memref<4x1xf32, #tpu.memory_space<vmem>>, vector<4x1xf32>
      %cst_65 = arith.constant dense<0.000000e+00> : vector<4xf32>
      %99 = vector.multi_reduction <add>, %61, %cst_65 [1] : vector<4x256xf32> to vector<4xf32>
      %100 = vector.shape_cast %99 : vector<4xf32> to vector<4x1xf32>
      %101 = arith.addf %98, %100 : vector<4x1xf32>
      %c0_66 = arith.constant 0 : index
      %c0_67 = arith.constant 0 : index
      %102 = vector.load %arg18[%c0_66, %c0_67] : memref<4x1xf32, #tpu.memory_space<vmem>>, vector<4x1xf32>
      tpu.vector_store %arg18[%c0_66, %c0_67], %101 {strides = array<i32>} : memref<4x1xf32, #tpu.memory_space<vmem>>, vector<4x1xf32>,
      %c0_68 = arith.constant 0 : index
      %c0_69 = arith.constant 0 : index
      %103 = vector.load %arg19[%c0_68, %c0_69] : memref<4x1xf32, #tpu.memory_space<vmem>>, vector<4x1xf32>
      %104 = arith.mulf %61, %61 : vector<4x256xf32>
      %cst_70 = arith.constant dense<0.000000e+00> : vector<4xf32>
      %105 = vector.multi_reduction <add>, %104, %cst_70 [1] : vector<4x256xf32> to vector<4xf32>
      %106 = vector.shape_cast %105 : vector<4xf32> to vector<4x1xf32>
      %107 = arith.addf %103, %106 : vector<4x1xf32>
      %c0_71 = arith.constant 0 : index
      %c0_72 = arith.constant 0 : index
      %108 = vector.load %arg19[%c0_71, %c0_72] : memref<4x1xf32, #tpu.memory_space<vmem>>, vector<4x1xf32>
      tpu.vector_store %arg19[%c0_71, %c0_72], %107 {strides = array<i32>} : memref<4x1xf32, #tpu.memory_space<vmem>>, vector<4x1xf32>,
    } else {
    }
    %c2_i32_40 = arith.constant 2 : i32
    %65 = arith.cmpi eq, %arg0, %c2_i32_40 : i32
    %c3_i32_41 = arith.constant 3 : i32
    %66 = arith.cmpi eq, %arg1, %c3_i32_41 : i32
    %67 = arith.andi %65, %66 : i1
    %68 = arith.extui %67 : i1 to i32
    %c0_i32_42 = arith.constant 0 : i32
    %69 = arith.cmpi ne, %68, %c0_i32_42 : i32
    scf.if %69 {
      %c0_63 = arith.constant 0 : index
      %c0_64 = arith.constant 0 : index
      %98 = vector.load %arg18[%c0_63, %c0_64] : memref<4x1xf32, #tpu.memory_space<vmem>>, vector<4x1xf32>
      %cst_65 = arith.constant 9.765625E-4 : f32
      %99 = vector.broadcast %cst_65 : f32 to vector<4x1xf32>
      %100 = arith.mulf %98, %99 : vector<4x1xf32>
      %c0_66 = arith.constant 0 : index
      %c0_67 = arith.constant 0 : index
      %101 = vector.load %arg19[%c0_66, %c0_67] : memref<4x1xf32, #tpu.memory_space<vmem>>, vector<4x1xf32>
      %cst_68 = arith.constant 9.765625E-4 : f32
      %102 = vector.broadcast %cst_68 : f32 to vector<4x1xf32>
      %103 = arith.mulf %101, %102 : vector<4x1xf32>
      %104 = arith.mulf %100, %100 : vector<4x1xf32>
      %105 = arith.subf %103, %104 : vector<4x1xf32>
      %c0_69 = arith.constant 0 : index
      %c0_70 = arith.constant 0 : index
      %106 = vector.load %arg18[%c0_69, %c0_70] : memref<4x1xf32, #tpu.memory_space<vmem>>, vector<4x1xf32>
      tpu.vector_store %arg18[%c0_69, %c0_70], %100 {strides = array<i32>} : memref<4x1xf32, #tpu.memory_space<vmem>>, vector<4x1xf32>,
      %cst_71 = arith.constant 9.99999974E-6 : f32
      %107 = vector.broadcast %cst_71 : f32 to vector<4x1xf32>
      %108 = arith.addf %105, %107 : vector<4x1xf32>
      %109 = math.rsqrt %108 : vector<4x1xf32>
      %c0_72 = arith.constant 0 : index
      %c0_73 = arith.constant 0 : index
      %110 = vector.load %arg19[%c0_72, %c0_73] : memref<4x1xf32, #tpu.memory_space<vmem>>, vector<4x1xf32>
      tpu.vector_store %arg19[%c0_72, %c0_73], %109 {strides = array<i32>} : memref<4x1xf32, #tpu.memory_space<vmem>>, vector<4x1xf32>,
    } else {
    }
    %c0_43 = arith.constant 0 : index
    %c0_44 = arith.constant 0 : index
    %70 = vector.load %arg18[%c0_43, %c0_44] : memref<4x1xf32, #tpu.memory_space<vmem>>, vector<4x1xf32>
    %71 = vector.broadcast %70 : vector<4x1xf32> to vector<4x256xf32>
    %72 = arith.subf %61, %71 : vector<4x256xf32>
    %c0_45 = arith.constant 0 : index
    %c0_46 = arith.constant 0 : index
    %73 = vector.load %arg19[%c0_45, %c0_46] : memref<4x1xf32, #tpu.memory_space<vmem>>, vector<4x1xf32>
    %74 = vector.broadcast %73 : vector<4x1xf32> to vector<4x256xf32>
    %75 = arith.mulf %72, %74 : vector<4x256xf32>
    %c0_47 = arith.constant 0 : index
    %c0_48 = arith.constant 0 : index
    %76 = vector.load %arg11[%c0_47, %c0_48] : memref<4x1xf32, #tpu.memory_space<vmem>>, vector<4x1xf32>
    %77 = vector.broadcast %76 : vector<4x1xf32> to vector<4x256xf32>
    %78 = arith.mulf %75, %77 : vector<4x256xf32>
    %c0_49 = arith.constant 0 : index
    %c0_50 = arith.constant 0 : index
    %79 = vector.load %arg12[%c0_49, %c0_50] : memref<4x1xf32, #tpu.memory_space<vmem>>, vector<4x1xf32>
    %80 = vector.broadcast %79 : vector<4x1xf32> to vector<4x256xf32>
    %81 = arith.addf %78, %80 : vector<4x256xf32>
    %cst_51 = arith.constant 0.000000e+00 : f32
    %82 = vector.broadcast %cst_51 : f32 to vector<4x256xf32>
    %83 = arith.cmpf oge, %81, %82 : vector<4x256xf32>
    %cst_52 = arith.constant 0.00999999977 : f32
    %84 = vector.broadcast %cst_52 : f32 to vector<4x256xf32>
    %85 = arith.mulf %84, %81 : vector<4x256xf32>
    %86 = arith.select %83, %81, %85 : vector<4x256xi1>, vector<4x256xf32>
    %c0_53 = arith.constant 0 : index
    %c0_54 = arith.constant 0 : index
    %87 = vector.load %arg6[%c0_53, %c0_54] : memref<4x4xf32, #tpu.memory_space<vmem>>, vector<4x4xf32>
    %cst_55 = arith.constant dense<0.000000e+00> : vector<4x256xf32>
    %88 = tpu.matmul %87, %86, %cst_55 {dimension_numbers = #tpu.dot_dimension_numbers<[1], [0], [0], [1], [0, 0, 1, 1], [], []>, precision = #tpu.contract_precision<fp32>} : vector<4x4xf32>, vector<4x256xf32>, vector<4x256xf32> -> vector<4x256xf32>
    %c0_56 = arith.constant 0 : index
    %c0_57 = arith.constant 0 : index
    %89 = vector.load %arg13[%c0_56, %c0_57] : memref<4x256xf32, #tpu.memory_space<vmem>>, vector<4x256xf32>
    tpu.vector_store %arg13[%c0_56, %c0_57], %88 {strides = array<i32>} : memref<4x256xf32, #tpu.memory_space<vmem>>, vector<4x256xf32>,
    %c3_i32_58 = arith.constant 3 : i32
    %90 = arith.cmpi eq, %arg0, %c3_i32_58 : i32
    %91 = arith.extui %90 : i1 to i32
    %c0_i32_59 = arith.constant 0 : i32
    %92 = arith.cmpi ne, %91, %c0_i32_59 : i32
    scf.if %92 {
      %c0_63 = arith.constant 0 : index
      %c0_64 = arith.constant 0 : index
      %98 = vector.load %arg20[%c0_63, %c0_64] : memref<4x1xf32, #tpu.memory_space<vmem>>, vector<4x1xf32>
      %cst_65 = arith.constant dense<0.000000e+00> : vector<4xf32>
      %99 = vector.multi_reduction <add>, %88, %cst_65 [1] : vector<4x256xf32> to vector<4xf32>
      %100 = vector.shape_cast %99 : vector<4xf32> to vector<4x1xf32>
      %101 = arith.addf %98, %100 : vector<4x1xf32>
      %c0_66 = arith.constant 0 : index
      %c0_67 = arith.constant 0 : index
      %102 = vector.load %arg20[%c0_66, %c0_67] : memref<4x1xf32, #tpu.memory_space<vmem>>, vector<4x1xf32>
      tpu.vector_store %arg20[%c0_66, %c0_67], %101 {strides = array<i32>} : memref<4x1xf32, #tpu.memory_space<vmem>>, vector<4x1xf32>,
      %c0_68 = arith.constant 0 : index
      %c0_69 = arith.constant 0 : index
      %103 = vector.load %arg21[%c0_68, %c0_69] : memref<4x1xf32, #tpu.memory_space<vmem>>, vector<4x1xf32>
      %104 = arith.mulf %88, %88 : vector<4x256xf32>
      %cst_70 = arith.constant dense<0.000000e+00> : vector<4xf32>
      %105 = vector.multi_reduction <add>, %104, %cst_70 [1] : vector<4x256xf32> to vector<4xf32>
      %106 = vector.shape_cast %105 : vector<4xf32> to vector<4x1xf32>
      %107 = arith.addf %103, %106 : vector<4x1xf32>
      %c0_71 = arith.constant 0 : index
      %c0_72 = arith.constant 0 : index
      %108 = vector.load %arg21[%c0_71, %c0_72] : memref<4x1xf32, #tpu.memory_space<vmem>>, vector<4x1xf32>
      tpu.vector_store %arg21[%c0_71, %c0_72], %107 {strides = array<i32>} : memref<4x1xf32, #tpu.memory_space<vmem>>, vector<4x1xf32>,
    } else {
    }
    %c3_i32_60 = arith.constant 3 : i32
    %93 = arith.cmpi eq, %arg0, %c3_i32_60 : i32
    %c3_i32_61 = arith.constant 3 : i32
    %94 = arith.cmpi eq, %arg1, %c3_i32_61 : i32
    %95 = arith.andi %93, %94 : i1
    %96 = arith.extui %95 : i1 to i32
    %c0_i32_62 = arith.constant 0 : i32
    %97 = arith.cmpi ne, %96, %c0_i32_62 : i32
    scf.if %97 {
      %c0_63 = arith.constant 0 : index
      %c0_64 = arith.constant 0 : index
      %98 = vector.load %arg20[%c0_63, %c0_64] : memref<4x1xf32, #tpu.memory_space<vmem>>, vector<4x1xf32>
      %cst_65 = arith.constant 9.765625E-4 : f32
      %99 = vector.broadcast %cst_65 : f32 to vector<4x1xf32>
      %100 = arith.mulf %98, %99 : vector<4x1xf32>
      %c0_66 = arith.constant 0 : index
      %c0_67 = arith.constant 0 : index
      %101 = vector.load %arg21[%c0_66, %c0_67] : memref<4x1xf32, #tpu.memory_space<vmem>>, vector<4x1xf32>
      %cst_68 = arith.constant 9.765625E-4 : f32
      %102 = vector.broadcast %cst_68 : f32 to vector<4x1xf32>
      %103 = arith.mulf %101, %102 : vector<4x1xf32>
      %104 = arith.mulf %100, %100 : vector<4x1xf32>
      %105 = arith.subf %103, %104 : vector<4x1xf32>
      %c0_69 = arith.constant 0 : index
      %c0_70 = arith.constant 0 : index
      %106 = vector.load %arg20[%c0_69, %c0_70] : memref<4x1xf32, #tpu.memory_space<vmem>>, vector<4x1xf32>
      tpu.vector_store %arg20[%c0_69, %c0_70], %100 {strides = array<i32>} : memref<4x1xf32, #tpu.memory_space<vmem>>, vector<4x1xf32>,
      %cst_71 = arith.constant 9.99999974E-6 : f32
      %107 = vector.broadcast %cst_71 : f32 to vector<4x1xf32>
      %108 = arith.addf %105, %107 : vector<4x1xf32>
      %109 = math.rsqrt %108 : vector<4x1xf32>
      %c0_72 = arith.constant 0 : index
      %c0_73 = arith.constant 0 : index
      %110 = vector.load %arg21[%c0_72, %c0_73] : memref<4x1xf32, #tpu.memory_space<vmem>>, vector<4x1xf32>
      tpu.vector_store %arg21[%c0_72, %c0_73], %109 {strides = array<i32>} : memref<4x1xf32, #tpu.memory_space<vmem>>, vector<4x1xf32>,
    } else {
    }
    return
  }
  func.func @transform_0(%arg0: i32, %arg1: i32) -> (i32, i32) {
    %c0_i32 = arith.constant 0 : i32
    %c0_i32_0 = arith.constant 0 : i32
    return %arg1, %c0_i32 : i32, i32
  }
  func.func @transform_1(%arg0: i32, %arg1: i32) -> (i32, i32) {
    %c0_i32 = arith.constant 0 : i32
    %c0_i32_0 = arith.constant 0 : i32
    %c0_i32_1 = arith.constant 0 : i32
    return %c0_i32, %c0_i32_0 : i32, i32
  }
  func.func @transform_2(%arg0: i32, %arg1: i32) -> (i32, i32) {
    %c0_i32 = arith.constant 0 : i32
    %c0_i32_0 = arith.constant 0 : i32
    %c0_i32_1 = arith.constant 0 : i32
    return %c0_i32, %c0_i32_0 : i32, i32
  }
  func.func @transform_3(%arg0: i32, %arg1: i32) -> (i32, i32) {
    %c0_i32 = arith.constant 0 : i32
    %c0_i32_0 = arith.constant 0 : i32
    %c0_i32_1 = arith.constant 0 : i32
    return %c0_i32, %c0_i32_0 : i32, i32
  }
  func.func @transform_4(%arg0: i32, %arg1: i32) -> (i32, i32) {
    %c0_i32 = arith.constant 0 : i32
    %c0_i32_0 = arith.constant 0 : i32
    %c0_i32_1 = arith.constant 0 : i32
    return %c0_i32, %c0_i32_0 : i32, i32
  }
  func.func @transform_5(%arg0: i32, %arg1: i32) -> (i32, i32) {
    %c0_i32 = arith.constant 0 : i32
    %c0_i32_0 = arith.constant 0 : i32
    %c0_i32_1 = arith.constant 0 : i32
    return %c0_i32, %c0_i32_0 : i32, i32
  }
  func.func @transform_6(%arg0: i32, %arg1: i32) -> (i32, i32) {
    %c0_i32 = arith.constant 0 : i32
    %c0_i32_0 = arith.constant 0 : i32
    %c0_i32_1 = arith.constant 0 : i32
    return %c0_i32, %c0_i32_0 : i32, i32
  }
  func.func @transform_7(%arg0: i32, %arg1: i32) -> (i32, i32) {
    %c0_i32 = arith.constant 0 : i32
    %c0_i32_0 = arith.constant 0 : i32
    %c0_i32_1 = arith.constant 0 : i32
    return %c0_i32, %c0_i32_0 : i32, i32
  }
  func.func @transform_8(%arg0: i32, %arg1: i32) -> (i32, i32) {
    %c0_i32 = arith.constant 0 : i32
    %c0_i32_0 = arith.constant 0 : i32
    %c0_i32_1 = arith.constant 0 : i32
    return %c0_i32, %c0_i32_0 : i32, i32
  }
  func.func @transform_9(%arg0: i32, %arg1: i32) -> (i32, i32) {
    %c0_i32 = arith.constant 0 : i32
    %c0_i32_0 = arith.constant 0 : i32
    %c0_i32_1 = arith.constant 0 : i32
    return %c0_i32, %c0_i32_0 : i32, i32
  }
  func.func @transform_10(%arg0: i32, %arg1: i32) -> (i32, i32) {
    %c0_i32 = arith.constant 0 : i32
    %c0_i32_0 = arith.constant 0 : i32
    %c0_i32_1 = arith.constant 0 : i32
    return %c0_i32, %c0_i32_0 : i32, i32
  }
  func.func @transform_11(%arg0: i32, %arg1: i32) -> (i32, i32) {
    %c0_i32 = arith.constant 0 : i32
    %c0_i32_0 = arith.constant 0 : i32
    return %c0_i32, %arg1 : i32, i32
  }
  func.func @transform_12(%arg0: i32, %arg1: i32) -> (i32, i32) {
    %c0_i32 = arith.constant 0 : i32
    %c0_i32_0 = arith.constant 0 : i32
    %c0_i32_1 = arith.constant 0 : i32
    return %c0_i32, %c0_i32_0 : i32, i32
  }
  func.func @transform_13(%arg0: i32, %arg1: i32) -> (i32, i32) {
    %c0_i32 = arith.constant 0 : i32
    %c0_i32_0 = arith.constant 0 : i32
    %c0_i32_1 = arith.constant 0 : i32
    return %c0_i32, %c0_i32_0 : i32, i32
  }
  func.func @transform_14(%arg0: i32, %arg1: i32) -> (i32, i32) {
    %c0_i32 = arith.constant 0 : i32
    %c0_i32_0 = arith.constant 0 : i32
    %c0_i32_1 = arith.constant 0 : i32
    return %c0_i32, %c0_i32_0 : i32, i32
  }
  func.func @transform_15(%arg0: i32, %arg1: i32) -> (i32, i32) {
    %c0_i32 = arith.constant 0 : i32
    %c0_i32_0 = arith.constant 0 : i32
    %c0_i32_1 = arith.constant 0 : i32
    return %c0_i32, %c0_i32_0 : i32, i32
  }
  func.func @transform_16(%arg0: i32, %arg1: i32) -> (i32, i32) {
    %c0_i32 = arith.constant 0 : i32
    %c0_i32_0 = arith.constant 0 : i32
    %c0_i32_1 = arith.constant 0 : i32
    return %c0_i32, %c0_i32_0 : i32, i32
  }
  func.func @transform_17(%arg0: i32, %arg1: i32) -> (i32, i32) {
    %c0_i32 = arith.constant 0 : i32
    %c0_i32_0 = arith.constant 0 : i32
    %c0_i32_1 = arith.constant 0 : i32
    return %c0_i32, %c0_i32_0 : i32, i32
  }
  func.func @transform_18(%arg0: i32, %arg1: i32) -> (i32, i32) {
    %c0_i32 = arith.constant 0 : i32
    %c0_i32_0 = arith.constant 0 : i32
    %c0_i32_1 = arith.constant 0 : i32
    return %c0_i32, %c0_i32_0 : i32, i32
  }
  func.func @transform_19(%arg0: i32, %arg1: i32) -> (i32, i32) {
    %c0_i32 = arith.constant 0 : i32
    %c0_i32_0 = arith.constant 0 : i32
    %c0_i32_1 = arith.constant 0 : i32
    return %c0_i32, %c0_i32_0 : i32, i32
  }
}

</mosaic_0001>

<llo_original>
// kernel: dirvae_forward.3
$region0: #{dirvae_forward.3}
  #allocation0 [shape = 'u32[]', space=smem, size = 0x4, offset = 0x4, fixed_abs, tag = 'smem constant byte address 0x4 - core index']
  #allocation1 [shape = 'u32[72,128]{1,0:T(1,128)}', space=vmem, size = 0x9000, scoped, tag = 'internal scratch']
  %s0 = inlined_call_operand.vmem [shape: f32[4,1024], index: 0, kind: input, shape index: {}]
  %s1 = inlined_call_operand.vmem [shape: f32[4,1024], index: 1, kind: input, shape index: {}]
  %s2 = inlined_call_operand.vmem [shape: f32[4,1], index: 2, kind: input, shape index: {}]
  %s3 = inlined_call_operand.vmem [shape: f32[4,1], index: 3, kind: input, shape index: {}]
  %s4 = inlined_call_operand.vmem [shape: f32[4,1], index: 4, kind: input, shape index: {}]
  %s5 = inlined_call_operand.vmem [shape: f32[4,1], index: 5, kind: input, shape index: {}]
  %s6 = inlined_call_operand.vmem [shape: f32[4,1], index: 6, kind: input, shape index: {}]
  %s7 = inlined_call_operand.vmem [shape: f32[32,4], index: 7, kind: input, shape index: {}]
  %s8 = inlined_call_operand.hbm [shape: f32[32,1024], index: 8, kind: output, shape index: {0}]
  %s9 = inlined_call_operand.hbm [shape: f32[4,1024], index: 9, kind: output, shape index: {1}]
  %s10 = inlined_call_operand.hbm [shape: f32[4,1024], index: 10, kind: output, shape index: {2}]
  %11 = xla_tuple %s8, %s9, %s10
  %s12 = sld [smem:[#allocation0]]
  $region81: #{dirvae_forward.3} parent=0
    _
  %s14 = ssub.s32 1, %s12
  %s15 = scalar_select 0, %s14, %s12
  $region1: #{dirvae_forward.3} parent=0
    #allocation2 [shape = 'u8[65536]{0}', space=vmem, size = 0x10000, scoped, tag = 'output window, operand 0']
    #allocation3 [shape = 's32[2]{0}', space=sflag, size = 0x8, scoped, tag = 'scoped memory for dirvae_forward.3']
    #allocation4 [shape = 'u8[8192]{0}', space=vmem, size = 0x2000, scoped, tag = 'output window, operand 1']
    #allocation5 [shape = 's32[2]{0}', space=sflag, size = 0x8, scoped, tag = 'scoped memory for dirvae_forward.3']
    #allocation6 [shape = 'u8[8192]{0}', space=vmem, size = 0x2000, scoped, tag = 'output window, operand 2']
    %16 = vsyncpa [#allocation3], 0
    %s17 = scalar_lea.sflag [#allocation3], 1
    %18 = vsyncpa %s17, 0
    %19 = vsyncpa [#allocation5], 0
    %s20 = scalar_lea.sflag [#allocation5], 1
    %21 = vsyncpa %s20, 0
    loop: start=0, step=1, limit=6
    $region2: #{dirvae_forward.3} parent=1 // loop_pre_header
      _
    $region3: #{dirvae_forward.3} parent=1 // loop_header
      %s23 = sphi 0, %s27
      %p24 = scmp.ge.s32.totalorder %s23, 6
      %s33 = sphi 0, %s35
      %s36 = sphi 0, %s33
      %s37 = sphi 0, %s36
      %s53 = sphi 0, %s37
      %s59 = sphi 0, %s61
      %s62 = sphi 0, %s59
      %s63 = sphi 0, %s62
      %s79 = sphi 0, %s63
      %s83 = sphi 0, %s83
      %s85 = sphi 0, %s83
      %s86 = sphi 0, %s85
      %s100 = sphi 0, %s86
      %s104 = sphi 0, %s104
      %s106 = sphi 0, %s104
      %s107 = sphi 0, %s106
      %s121 = sphi 0, %s107
      %s125 = sphi 0, %s125
      %s127 = sphi 0, %s125
      %s128 = sphi 0, %s127
      %s142 = sphi 0, %s128
      %s146 = sphi 0, %s146
      %s148 = sphi 0, %s146
      %s149 = sphi 0, %s148
      %s163 = sphi 0, %s149
      %s167 = sphi 0, %s167
      %s169 = sphi 0, %s167
      %s170 = sphi 0, %s169
      %s184 = sphi 0, %s170
      %s188 = sphi 0, %s188
      %s190 = sphi 0, %s188
      %s191 = sphi 0, %s190
      %s205 = sphi 0, %s191
      %s211 = sphi 0, %s213
      %s214 = sphi 0, %s211
      %s215 = sphi 0, %s214
      %s231 = sphi 0, %s215
      %s237 = sphi 0, %s239
      %s240 = sphi 0, %s237
      %s241 = sphi 0, %s240
      %s257 = sphi 0, %s241
      %s263 = sphi 0, %s265
      %s266 = sphi 0, %s263
      %s267 = sphi 0, %s266
      %s283 = sphi 0, %s267
    $region4: #{dirvae_forward.3} parent=1 // loop_header_branch
      %26 = sbr.rel (%p24) target = $region8
    $region5: #{dirvae_forward.3} parent=1 // loop_body
      %s28 = ssub.s32 %s23, 1
      %s29 = ssub.s32 %s23, 2
      %s30 = sadd.s32 %s23, 1
      %s31 = ssub.s32 %s23, %s30
      %p32 = scmp.eq.s32.totalorder %s31, 0
      %s34 = sadd.s32 %s33, 1
      %s35 = scalar_select %p32, %s33, %s34
      %p38 = pneg %p32
      %p39 = scmp.eq.s32.totalorder %s23, 3
      %p40 = por %p38, %p39
      %p41 = scmp.ne.s32.totalorder %s33, %s36
      %p42 = scmp.eq.s32.totalorder %s23, 0
      %p43 = por %p41, %p42
      %p44 = scmp.ne.s32.totalorder %s33, %s36
      %p45 = scmp.eq.s32.totalorder %s28, 3
      %p46 = por %p44, %p45
      %p47 = scmp.ne.s32.totalorder %s36, %s37
      %p48 = scmp.eq.s32.totalorder %s28, 0
      %p49 = por %p47, %p48
      %p50 = scmp.ne.s32.totalorder %s36, %s37
      %p51 = scmp.eq.s32.totalorder %s29, 3
      %p52 = por %p50, %p51
      %p54 = scmp.ne.s32.totalorder %s37, %s53
      %p55 = scmp.eq.s32.totalorder %s29, 0
      %p56 = por %p54, %p55
      %s57 = ssub.s32 %s23, %s30
      %p58 = scmp.eq.s32.totalorder %s57, 0
      %s60 = sadd.s32 %s59, 1
      %s61 = scalar_select %p58, %s59, %s60
      %p64 = pneg %p58
      %p65 = scmp.eq.s32.totalorder %s23, 3
      %p66 = por %p64, %p65
      %p67 = scmp.ne.s32.totalorder %s59, %s62
      %p68 = scmp.eq.s32.totalorder %s23, 0
      %p69 = por %p67, %p68
      %p70 = scmp.ne.s32.totalorder %s59, %s62
      %p71 = scmp.eq.s32.totalorder %s28, 3
      %p72 = por %p70, %p71
      %p73 = scmp.ne.s32.totalorder %s62, %s63
      %p74 = scmp.eq.s32.totalorder %s28, 0
      %p75 = por %p73, %p74
      %p76 = scmp.ne.s32.totalorder %s62, %s63
      %p77 = scmp.eq.s32.totalorder %s29, 3
      %p78 = por %p76, %p77
      %p80 = scmp.ne.s32.totalorder %s63, %s79
      %p81 = scmp.eq.s32.totalorder %s29, 0
      %p82 = por %p80, %p81
      %s84 = sadd.s32 %s83, 1
      %p87 = scmp.eq.s32.totalorder %s23, 3
      %p88 = scmp.ne.s32.totalorder %s83, %s85
      %p89 = scmp.eq.s32.totalorder %s23, 0
      %p90 = por %p88, %p89
      %p91 = scmp.ne.s32.totalorder %s83, %s85
      %p92 = scmp.eq.s32.totalorder %s28, 3
      %p93 = por %p91, %p92
      %p94 = scmp.ne.s32.totalorder %s85, %s86
      %p95 = scmp.eq.s32.totalorder %s28, 0
      %p96 = por %p94, %p95
      %p97 = scmp.ne.s32.totalorder %s85, %s86
      %p98 = scmp.eq.s32.totalorder %s29, 3
      %p99 = por %p97, %p98
      %p101 = scmp.ne.s32.totalorder %s86, %s100
      %p102 = scmp.eq.s32.totalorder %s29, 0
      %p103 = por %p101, %p102
      %s105 = sadd.s32 %s104, 1
      %p108 = scmp.eq.s32.totalorder %s23, 3
      %p109 = scmp.ne.s32.totalorder %s104, %s106
      %p110 = scmp.eq.s32.totalorder %s23, 0
      %p111 = por %p109, %p110
      %p112 = scmp.ne.s32.totalorder %s104, %s106
      %p113 = scmp.eq.s32.totalorder %s28, 3
      %p114 = por %p112, %p113
      %p115 = scmp.ne.s32.totalorder %s106, %s107
      %p116 = scmp.eq.s32.totalorder %s28, 0
      %p117 = por %p115, %p116
      %p118 = scmp.ne.s32.totalorder %s106, %s107
      %p119 = scmp.eq.s32.totalorder %s29, 3
      %p120 = por %p118, %p119
      %p122 = scmp.ne.s32.totalorder %s107, %s121
      %p123 = scmp.eq.s32.totalorder %s29, 0
      %p124 = por %p122, %p123
      %s126 = sadd.s32 %s125, 1
      %p129 = scmp.eq.s32.totalorder %s23, 3
      %p130 = scmp.ne.s32.totalorder %s125, %s127
      %p131 = scmp.eq.s32.totalorder %s23, 0
      %p132 = por %p130, %p131
      %p133 = scmp.ne.s32.totalorder %s125, %s127
      %p134 = scmp.eq.s32.totalorder %s28, 3
      %p135 = por %p133, %p134
      %p136 = scmp.ne.s32.totalorder %s127, %s128
      %p137 = scmp.eq.s32.totalorder %s28, 0
      %p138 = por %p136, %p137
      %p139 = scmp.ne.s32.totalorder %s127, %s128
      %p140 = scmp.eq.s32.totalorder %s29, 3
      %p141 = por %p139, %p140
      %p143 = scmp.ne.s32.totalorder %s128, %s142
      %p144 = scmp.eq.s32.totalorder %s29, 0
      %p145 = por %p143, %p144
      %s147 = sadd.s32 %s146, 1
      %p150 = scmp.eq.s32.totalorder %s23, 3
      %p151 = scmp.ne.s32.totalorder %s146, %s148
      %p152 = scmp.eq.s32.totalorder %s23, 0
      %p153 = por %p151, %p152
      %p154 = scmp.ne.s32.totalorder %s146, %s148
      %p155 = scmp.eq.s32.totalorder %s28, 3
      %p156 = por %p154, %p155
      %p157 = scmp.ne.s32.totalorder %s148, %s149
      %p158 = scmp.eq.s32.totalorder %s28, 0
      %p159 = por %p157, %p158
      %p160 = scmp.ne.s32.totalorder %s148, %s149
      %p161 = scmp.eq.s32.totalorder %s29, 3
      %p162 = por %p160, %p161
      %p164 = scmp.ne.s32.totalorder %s149, %s163
      %p165 = scmp.eq.s32.totalorder %s29, 0
      %p166 = por %p164, %p165
      %s168 = sadd.s32 %s167, 1
      %p171 = scmp.eq.s32.totalorder %s23, 3
      %p172 = scmp.ne.s32.totalorder %s167, %s169
      %p173 = scmp.eq.s32.totalorder %s23, 0
      %p174 = por %p172, %p173
      %p175 = scmp.ne.s32.totalorder %s167, %s169
      %p176 = scmp.eq.s32.totalorder %s28, 3
      %p177 = por %p175, %p176
      %p178 = scmp.ne.s32.totalorder %s169, %s170
      %p179 = scmp.eq.s32.totalorder %s28, 0
      %p180 = por %p178, %p179
      %p181 = scmp.ne.s32.totalorder %s169, %s170
      %p182 = scmp.eq.s32.totalorder %s29, 3
      %p183 = por %p181, %p182
      %p185 = scmp.ne.s32.totalorder %s170, %s184
      %p186 = scmp.eq.s32.totalorder %s29, 0
      %p187 = por %p185, %p186
      %s189 = sadd.s32 %s188, 1
      %p192 = scmp.eq.s32.totalorder %s23, 3
      %p193 = scmp.ne.s32.totalorder %s188, %s190
      %p194 = scmp.eq.s32.totalorder %s23, 0
      %p195 = por %p193, %p194
      %p196 = scmp.ne.s32.totalorder %s188, %s190
      %p197 = scmp.eq.s32.totalorder %s28, 3
      %p198 = por %p196, %p197
      %p199 = scmp.ne.s32.totalorder %s190, %s191
      %p200 = scmp.eq.s32.totalorder %s28, 0
      %p201 = por %p199, %p200
      %p202 = scmp.ne.s32.totalorder %s190, %s191
      %p203 = scmp.eq.s32.totalorder %s29, 3
      %p204 = por %p202, %p203
      %p206 = scmp.ne.s32.totalorder %s191, %s205
      %p207 = scmp.eq.s32.totalorder %s29, 0
      %p208 = por %p206, %p207
      %s209 = ssub.s32 %s23, %s30
      %p210 = scmp.eq.s32.totalorder %s209, 0
      %s212 = sadd.s32 %s211, 1
      %s213 = scalar_select %p210, %s211, %s212
      %p216 = pneg %p210
      %p217 = scmp.eq.s32.totalorder %s23, 3
      %p218 = por %p216, %p217
      %p219 = scmp.ne.s32.totalorder %s211, %s214
      %p220 = scmp.eq.s32.totalorder %s23, 0
      %p221 = por %p219, %p220
      %p222 = scmp.ne.s32.totalorder %s211, %s214
      %p223 = scmp.eq.s32.totalorder %s28, 3
      %p224 = por %p222, %p223
      %p225 = scmp.ne.s32.totalorder %s214, %s215
      %p226 = scmp.eq.s32.totalorder %s28, 0
      %p227 = por %p225, %p226
      %p228 = scmp.ne.s32.totalorder %s214, %s215
      %p229 = scmp.eq.s32.totalorder %s29, 3
      %p230 = por %p228, %p229
      %p232 = scmp.ne.s32.totalorder %s215, %s231
      %p233 = scmp.eq.s32.totalorder %s29, 0
      %p234 = por %p232, %p233
      %s235 = ssub.s32 %s23, %s30
      %p236 = scmp.eq.s32.totalorder %s235, 0
      %s238 = sadd.s32 %s237, 1
      %s239 = scalar_select %p236, %s237, %s238
      %p242 = pneg %p236
      %p243 = scmp.eq.s32.totalorder %s23, 3
      %p244 = por %p242, %p243
      %p245 = scmp.ne.s32.totalorder %s237, %s240
      %p246 = scmp.eq.s32.totalorder %s23, 0
      %p247 = por %p245, %p246
      %p248 = scmp.ne.s32.totalorder %s237, %s240
      %p249 = scmp.eq.s32.totalorder %s28, 3
      %p250 = por %p248, %p249
      %p251 = scmp.ne.s32.totalorder %s240, %s241
      %p252 = scmp.eq.s32.totalorder %s28, 0
      %p253 = por %p251, %p252
      %p254 = scmp.ne.s32.totalorder %s240, %s241
      %p255 = scmp.eq.s32.totalorder %s29, 3
      %p256 = por %p254, %p255
      %p258 = scmp.ne.s32.totalorder %s241, %s257
      %p259 = scmp.eq.s32.totalorder %s29, 0
      %p260 = por %p258, %p259
      %s261 = ssub.s32 %s23, %s30
      %p262 = scmp.eq.s32.totalorder %s261, 0
      %s264 = sadd.s32 %s263, 1
      %s265 = scalar_select %p262, %s263, %s264
      %p268 = pneg %p262
      %p269 = scmp.eq.s32.totalorder %s23, 3
      %p270 = por %p268, %p269
      %p271 = scmp.ne.s32.totalorder %s263, %s266
      %p272 = scmp.eq.s32.totalorder %s23, 0
      %p273 = por %p271, %p272
      %p274 = scmp.ne.s32.totalorder %s263, %s266
      %p275 = scmp.eq.s32.totalorder %s28, 3
      %p276 = por %p274, %p275
      %p277 = scmp.ne.s32.totalorder %s266, %s267
      %p278 = scmp.eq.s32.totalorder %s28, 0
      %p279 = por %p277, %p278
      %p280 = scmp.ne.s32.totalorder %s266, %s267
      %p281 = scmp.eq.s32.totalorder %s29, 3
      %p282 = por %p280, %p281
      %p284 = scmp.ne.s32.totalorder %s267, %s283
      %p285 = scmp.eq.s32.totalorder %s29, 0
      %p286 = por %p284, %p285
      %p287 = scmp.le.s32.totalorder 1, %s23
      %p288 = scmp.lt.s32.totalorder %s23, 5
      %p289 = pnand %p287, %p288
      %p290 = pneg %p289
      // Predicated region
      $region9: #{dirvae_forward.3} parent=5 // pred_check
        _
      $region10: #{dirvae_forward.3} parent=5 // pred_check_branch
        %292 = sbr.rel (%p289) target = $region12
      $region11: #{dirvae_forward.3} parent=5 // pred_region
        %s293 = ssub.s32 %s23, 1
        // Predicated region
        $region13: #{dirvae_forward.3} parent=11 // pred_check
          %p294 = pneg %p96
        $region14: #{dirvae_forward.3} parent=11 // pred_check_branch
          %296 = sbr.rel (%p294) target = $region16
        $region15: #{dirvae_forward.3} parent=11 // pred_region
          _
        $region16: #{dirvae_forward.3} parent=11 // pred_fallthru
          _
        // Predicated region
        $region17: #{dirvae_forward.3} parent=11 // pred_check
          %p297 = pneg %p117
        $region18: #{dirvae_forward.3} parent=11 // pred_check_branch
          %299 = sbr.rel (%p297) target = $region20
        $region19: #{dirvae_forward.3} parent=11 // pred_region
          _
        $region20: #{dirvae_forward.3} parent=11 // pred_fallthru
          _
        // Predicated region
        $region21: #{dirvae_forward.3} parent=11 // pred_check
          %p300 = pneg %p138
        $region22: #{dirvae_forward.3} parent=11 // pred_check_branch
          %302 = sbr.rel (%p300) target = $region24
        $region23: #{dirvae_forward.3} parent=11 // pred_region
          _
        $region24: #{dirvae_forward.3} parent=11 // pred_fallthru
          _
        // Predicated region
        $region25: #{dirvae_forward.3} parent=11 // pred_check
          %p303 = pneg %p159
        $region26: #{dirvae_forward.3} parent=11 // pred_check_branch
          %305 = sbr.rel (%p303) target = $region28
        $region27: #{dirvae_forward.3} parent=11 // pred_region
          _
        $region28: #{dirvae_forward.3} parent=11 // pred_fallthru
          _
        // Predicated region
        $region29: #{dirvae_forward.3} parent=11 // pred_check
          %p306 = pneg %p180
        $region30: #{dirvae_forward.3} parent=11 // pred_check_branch
          %308 = sbr.rel (%p306) target = $region32
        $region31: #{dirvae_forward.3} parent=11 // pred_region
          _
        $region32: #{dirvae_forward.3} parent=11 // pred_fallthru
          _
        // Predicated region
        $region33: #{dirvae_forward.3} parent=11 // pred_check
          %p309 = pneg %p201
        $region34: #{dirvae_forward.3} parent=11 // pred_check_branch
          %311 = sbr.rel (%p309) target = $region36
        $region35: #{dirvae_forward.3} parent=11 // pred_region
          _
        $region36: #{dirvae_forward.3} parent=11 // pred_fallthru
          _
      $region12: #{dirvae_forward.3} parent=5 // pred_fallthru
        _
      %p312 = scmp.lt.s32.totalorder %s23, 4
      // Predicated region
      $region37: #{dirvae_forward.3} parent=5 // pred_check
        %p313 = pneg %p312
      $region38: #{dirvae_forward.3} parent=5 // pred_check_branch
        %315 = sbr.rel (%p313) target = $region40
      $region39: #{dirvae_forward.3} parent=5 // pred_region
        // Predicated region
        $region41: #{dirvae_forward.3} parent=39 // pred_check
          %p316 = pneg %p43
        $region42: #{dirvae_forward.3} parent=39 // pred_check_branch
          %318 = sbr.rel (%p316) target = $region44
        $region43: #{dirvae_forward.3} parent=39 // pred_region
          %s319 = smul.u32 2, %s23
          %p320 = scmp.lt.s32.totalorder %s319, 7
          %s321 = scalar_select %p320, %s319, 7
          %s322 = smul.addr %s321, 4
          %s323 = scalar_lea.vmem %s0, %s322
          %s324 = smul.u32 2, %s23
        $region44: #{dirvae_forward.3} parent=39 // pred_fallthru
          _
        // Predicated region
        $region45: #{dirvae_forward.3} parent=39 // pred_check
          %p325 = pneg %p69
        $region46: #{dirvae_forward.3} parent=39 // pred_check_branch
          %327 = sbr.rel (%p325) target = $region48
        $region47: #{dirvae_forward.3} parent=39 // pred_region
          %s328 = smul.u32 2, %s23
          %p329 = scmp.lt.s32.totalorder %s328, 7
          %s330 = scalar_select %p329, %s328, 7
          %s331 = smul.addr %s330, 4
          %s332 = scalar_lea.vmem %s1, %s331
          %s333 = smul.u32 2, %s23
        $region48: #{dirvae_forward.3} parent=39 // pred_fallthru
          _
      $region40: #{dirvae_forward.3} parent=5 // pred_fallthru
        _
      %p334 = scmp.le.s32.totalorder 1, %s23
      %p335 = scmp.lt.s32.totalorder %s23, 5
      %p336 = pnand %p334, %p335
      %p337 = pneg %p336
      // Predicated region
      $region49: #{dirvae_forward.3} parent=5 // pred_check
        _
      $region50: #{dirvae_forward.3} parent=5 // pred_check_branch
        %339 = sbr.rel (%p336) target = $region52
      $region51: #{dirvae_forward.3} parent=5 // pred_region
        %s340 = ssub.s32 %s23, 1
        %s341 = smul.u32 2, %s28
        %p342 = scmp.lt.s32.totalorder %s341, 7
        %s343 = scalar_select %p342, %s341, 7
        %s344 = smul.addr %s343, 4
        %s345 = scalar_lea.vmem %s0, %s344
        %p346 = pneg %p49
        %p347 = pneg %p46
        %s348 = smul.u32 2, %s28
        %p349 = scmp.lt.s32.totalorder %s348, 7
        %s350 = scalar_select %p349, %s348, 7
        %s351 = smul.addr %s350, 4
        %s352 = scalar_lea.vmem %s1, %s351
        %p353 = pneg %p75
        %p354 = pneg %p72
        %p355 = pneg %p96
        %p356 = pneg %p93
        %p357 = pneg %p117
        %p358 = pneg %p114
        %p359 = pneg %p138
        %p360 = pneg %p135
        %p361 = pneg %p159
        %p362 = pneg %p156
        %p363 = pneg %p180
        %p364 = pneg %p177
        %p365 = pneg %p201
        %p366 = pneg %p198
        %p367 = pneg %p227
        %p368 = pneg %p224
        %s369 = sand.u32 %s214, 1
        %s370 = scalar_lea.sflag [#allocation3], %s369
        %s371 = sand.u32 %s214, 1
        %s372 = smul.addr %s371, 64
        %s373 = scalar_lea.vmem [#allocation2], %s372
        %p374 = pneg %p253
        %p375 = pneg %p250
        %s376 = sand.u32 %s28, 1
        %s377 = scalar_lea.sflag [#allocation5], %s376
        %s378 = sand.u32 %s240, 1
        %s379 = smul.addr %s378, 8
        %s380 = scalar_lea.vmem [#allocation4], %s379
        %p381 = pneg %p279
        %p382 = pneg %p276
        %s383 = sand.u32 %s28, 1
        %s384 = scalar_lea.sflag [#allocation5], %s383
        %s385 = sand.u32 %s266, 1
        %s386 = smul.addr %s385, 8
        %s387 = scalar_lea.vmem [#allocation6], %s386
        %s388 = smul.u32 2, %s28
        %p389 = scmp.lt.s32.totalorder %s388, 7
        %s390 = scalar_select %p389, %s388, 7
        %s391 = smul.addr %s390, 4
        %s392 = scalar_lea.vmem %s0, %s391
        %s393 = smul.u32 2, %s28
        %s394 = smul.u32 2, %s28
        %p395 = scmp.lt.s32.totalorder %s394, 7
        %s396 = scalar_select %p395, %s394, 7
        %s397 = smul.addr %s396, 4
        %s398 = scalar_lea.vmem %s1, %s397
        %s399 = smul.u32 2, %s28
        %s400 = smul.u32 2, %s28
        %s401 = smul.u32 2, %s28
        %s402 = smul.u32 2, %s28
        %v403 = vld [vmem:[%s392] sm:$0xff]
        %v404 = vld [vmem:[%s2] sm:$0xf]
        %406 = vset.pattern.permute.xlu0 0
        %407 = vperm.xlu0 %406, %v404
        %v408 = vpop.permute.xlu0 %407
        %v410 = vunpack.c.l.s4 839922192
        %v411 = vunpack.c.0.s8 %v410
        %v412 = vperm.slane %v408, %v411
        %v414 = vsub.f32 %v403, %v412
        %v415 = vld [vmem:[%s3] sm:$0xf]
        %417 = vset.pattern.permute.xlu0 0
        %418 = vperm.xlu0 %417, %v415
        %v419 = vpop.permute.xlu0 %418
        %v421 = vunpack.c.l.s4 839922192
        %v422 = vunpack.c.0.s8 %v421
        %v423 = vperm.slane %v419, %v422
        %v425 = vmul.f32 %v414, %v423
        %v426 = vld [vmem:[%s4] sm:$0xf]
        %428 = vset.pattern.permute.xlu0 0
        %429 = vperm.xlu0 %428, %v426
        %v430 = vpop.permute.xlu0 %429
        %v432 = vunpack.c.l.s4 839922192
        %v433 = vunpack.c.0.s8 %v432
        %v434 = vperm.slane %v430, %v433
        %v436 = vmul.f32 %v425, %v434
        %v437 = vld [vmem:[%s5] sm:$0xf]
        %439 = vset.pattern.permute.xlu0 0
        %440 = vperm.xlu0 %439, %v437
        %v441 = vpop.permute.xlu0 %440
        %v443 = vunpack.c.l.s4 839922192
        %v444 = vunpack.c.0.s8 %v443
        %v445 = vperm.slane %v441, %v444
        %v447 = vadd.f32 %v436, %v445
        %vm448 = vcmp.gt.f32.partialorder %v447, 20.0
        %v449 = vmin.f32 %v447, 20.0
        %v450 = vmul.f32 %v449, 1.442695
        %v451 = vpow.pop %v450
        %v452 = vadd.f32 %v451, 1.0
        %v453 = vlog2.pop %v452
        %v454 = vmul.f32 %v453, 0.6931472
        %v455 = vsel %vm448, %v447, %v454
        %456 = vst [vmem:[%s387] sm:$0xff] %v455
        %v457 = vmax.f32 %v455, 1e-06
        %v458 = vmin.f32 %v457, 30.0
        %v459 = vrcp.pop %v458
        %v460 = vmul.f32 %v458, %v459
        %v461 = vsub.f32 1.0, %v460
        %v462 = vmul.f32 %v459, %v461
        %v463 = vadd.f32 %v459, %v462
        %vm464 = vweird.f32 %v458
        %vm465 = vweird.f32 %v459
        %vm466 = vmor %vm464, %vm465
        %v467 = vsel %vm466, %v459, %v463
        %v468 = vand.u32 2147483647, %v458
        %vm469 = vcmp.eq.f32.partialorder %v468, 8.507059e+37
        %v470 = vand.u32 %v458, 2147483648
        %v471 = vor.u32 1.1754944e-38, %v470
        %v472 = vsel %vm469, %v471, %v467
        %v473 = vmul.f32 1.0, %v472
        %v474 = vsub.f32 %v458, 1.0
        %v475 = vadd.f32 %v474, 60.458332
        %v476 = vmul.f32 %v475, %v474
        %v477 = vadd.f32 %v476, 1599.0425
        %v478 = vmul.f32 %v477, %v474
        %v479 = vadd.f32 %v478, 24165.51
        %v480 = vmul.f32 %v479, %v474
        %v481 = vadd.f32 %v480, 228235.22
        %v482 = vmul.f32 %v481, %v474
        %v483 = vadd.f32 %v482, 1379496.3
        %v484 = vmul.f32 %v483, %v474
        %v485 = vadd.f32 %v484, 5210869.0
        %v486 = vmul.f32 %v485, %v474
        %v487 = vadd.f32 %v486, 11246929.0
        %v488 = vmul.f32 %v487, %v474
        %v489 = vadd.f32 %v488, 10619610.0
        %v490 = vadd.f32 %v474, 1.0
        %v491 = vadd.f32 %v474, 2.0
        %v492 = vmul.f32 %v490, %v491
        %v493 = vadd.f32 %v474, 3.0
        %v494 = vmul.f32 %v492, %v493
        %v495 = vadd.f32 %v474, 4.0
        %v496 = vmul.f32 %v494, %v495
        %v497 = vadd.f32 %v474, 5.0
        %v498 = vmul.f32 %v496, %v497
        %v499 = vadd.f32 %v474, 6.0
        %v500 = vmul.f32 %v498, %v499
        %v501 = vadd.f32 %v474, 7.0
        %v502 = vmul.f32 %v500, %v501
        %v503 = vadd.f32 %v474, 8.0
        %v504 = vmul.f32 %v502, %v503
        %v505 = vadd.f32 %v474, 7.5
        %v506 = vadd.f32 %v474, 0.5
        %v507 = vlog2.pop %v505
        %v508 = vmul.f32 %v507, 0.6931472
        %v509 = vmul.f32 %v506, %v508
        %v510 = vadd.f32 %v509, 0.9189385
        %v511 = vsub.f32 %v510, %v505
        %v512 = vrcp.pop %v504
        %v513 = vmul.f32 %v504, %v512
        %v514 = vsub.f32 1.0, %v513
        %v515 = vmul.f32 %v512, %v514
        %v516 = vadd.f32 %v512, %v515
        %vm517 = vweird.f32 %v504
        %vm518 = vweird.f32 %v512
        %vm519 = vmor %vm517, %vm518
        %v520 = vsel %vm519, %v512, %v516
        %v521 = vand.u32 2147483647, %v504
        %vm522 = vcmp.eq.f32.partialorder %v521, 8.507059e+37
        %v523 = vand.u32 %v504, 2147483648
        %v524 = vor.u32 1.1754944e-38, %v523
        %v525 = vsel %vm522, %v524, %v520
        %v526 = vmul.f32 %v489, %v525
        %v527 = vlog2.pop %v526
        %v528 = vmul.f32 %v527, 0.6931472
        %v529 = vadd.f32 %v511, %v528
        %v530 = vmul.f32 %v529, 1.442695
        %v531 = vpow.pop %v530
        %v532 = vld [vmem:[%s398] sm:$0xff]
        %v533 = vmul.f32 %v531, %v532
        %v534 = vadd.f32 %v533, 1e-12
        %v535 = vld [vmem:[%s6] sm:$0xf]
        %v536 = vmul.f32 %v534, %v458
        %v537 = vlog2.pop %v536
        %v538 = vmul.f32 %v537, 0.6931472
        %v539 = vmul.f32 %v473, %v538
        %v540 = vmul.f32 %v539, 1.442695
        %v541 = vpow.pop %v540
        %543 = vset.pattern.permute.xlu0 0
        %544 = vperm.xlu0 %543, %v535
        %v545 = vpop.permute.xlu0 %544
        %548 = vst [vmem:[#allocation1] ss:$2 sm:$0xff] %v541
        %v549 = vld.sshfl [vmem:[#allocation1] sm:$0xff pattern:$0x75316420]
        %v550 = vld.sshfl [vmem:[#allocation1 + $0x8] sm:$0xff pattern:$0x75316420]
        %v553 = vmul.f32 %v545, %v549
        %v554 = vmul.f32 %v545, %v550
        %vm555 = vcmask 1043456
        %v556 = vsel %vm555, %v553, 0.0
        %v557 = vrot.slane %v556, 4
        %v558 = vadd.f32 %v556, %v557
        %v559 = vrot.slane %v558, 2
        %v560 = vadd.f32 %v558, %v559
        %v561 = vrot.slane %v560, 1
        %v562 = vadd.f32 %v560, %v561
        %v563 = vsel %vm555, %v554, 0.0
        %v564 = vrot.slane %v563, 4
        %v565 = vadd.f32 %v563, %v564
        %v566 = vrot.slane %v565, 2
        %v567 = vadd.f32 %v565, %v566
        %v568 = vrot.slane %v567, 1
        %v569 = vadd.f32 %v567, %v568
        %v570 = vmax.f32 %v562, 1e-08
        %v571 = vmax.f32 %v569, 1e-08
        %v572 = vrcp.pop %v570
        %v573 = vmul.f32 %v570, %v572
        %v574 = vsub.f32 1.0, %v573
        %v575 = vmul.f32 %v572, %v574
        %v576 = vadd.f32 %v572, %v575
        %vm577 = vweird.f32 %v570
        %vm578 = vweird.f32 %v572
        %vm579 = vmor %vm577, %vm578
        %v580 = vsel %vm579, %v572, %v576
        %v581 = vand.u32 2147483647, %v570
        %vm582 = vcmp.eq.f32.partialorder %v581, 8.507059e+37
        %v583 = vand.u32 %v570, 2147483648
        %v584 = vor.u32 1.1754944e-38, %v583
        %v585 = vsel %vm582, %v584, %v580
        %v586 = vmul.f32 %v553, %v585
        %v587 = vrcp.pop %v571
        %v588 = vmul.f32 %v571, %v587
        %v589 = vsub.f32 1.0, %v588
        %v590 = vmul.f32 %v587, %v589
        %v591 = vadd.f32 %v587, %v590
        %vm592 = vweird.f32 %v571
        %vm593 = vweird.f32 %v587
        %vm594 = vmor %vm592, %vm593
        %v595 = vsel %vm594, %v587, %v591
        %v596 = vand.u32 2147483647, %v571
        %vm597 = vcmp.eq.f32.partialorder %v596, 8.507059e+37
        %v598 = vand.u32 %v571, 2147483648
        %v599 = vor.u32 1.1754944e-38, %v598
        %v600 = vsel %vm597, %v599, %v595
        %v601 = vmul.f32 %v554, %v600
        %v604 = vrot.slane %v601, 4
        %v605 = vsel %vm555, %v586, %v604
        %607 = vst [vmem:[%s380] sm:$0xff] %v605
        %v608 = vld [vmem:[%s7] sm:$0xff]
        %v609 = vld [vmem:[%s7 + $0x8] sm:$0xff]
        %v610 = vld [vmem:[%s7 + $0x10] sm:$0xff]
        %v611 = vld [vmem:[%s7 + $0x18] sm:$0xff]
        %vm612 = vcmask 31744
        %v614 = vsel %vm612, %v608, 0
        %v617 = vsel %vm612, %v609, 0
        %v620 = vsel %vm612, %v610, 0
        %v623 = vsel %vm612, %v611, 0
        %v625 = vsel %vm555, %v586, 0
        %v627 = vsel %vm555, %v601, 0
        %629 = vmatpush.msra.mxu0 0.0
        %630 = vmatpush.msra.mxu0 0.0
        %631 = vmatpush.msra.mxu0 0.0
        %632 = vmatpush.msra.mxu0 0.0
        %633 = vmatpush.msra.mxu0 0.0
        %634 = vmatpush.msra.mxu0 0.0
        %635 = vmatpush.msra.mxu0 0.0
        %636 = vmatpush.msra.mxu0 0.0
        %637 = vmatpush.msra.mxu0 0.0
        %638 = vmatpush.msra.mxu0 0.0
        %639 = vmatpush.msra.mxu0 0.0
        %640 = vmatpush.msra.mxu0 0.0
        %641 = vmatpush.msra.mxu0 0.0
        %642 = vmatpush.msra.mxu0 0.0
        %643 = vmatpush.msra.mxu0 0.0
        %v644 = vand.u32 %v625, 4294901760
        %645 = vmatpush.msra.mxu0 %v644
        %v646 = vand.u32 %v614, 4294901760
        %v647 = vsub.f32 %v614, %v646
        %v648 = vand.u32 %v647, 4294901760
        %v649 = vsub.f32 %v647, %v648
        %v650 = vand.u32 %v649, 4294901760
        %651 = vmatmul.f32.gmra.mxu0 %v650
        %v652 = vpop.f32.mrf.mxu0
        %v653 = vadd.f32 0.0, %v652
        %v654 = vand.u32 %v617, 4294901760
        %v655 = vsub.f32 %v617, %v654
        %v656 = vand.u32 %v655, 4294901760
        %v657 = vsub.f32 %v655, %v656
        %v658 = vand.u32 %v657, 4294901760
        %659 = vmatmul.f32.gmra.mxu0 %v658
        %v660 = vpop.f32.mrf.mxu0
        %v661 = vadd.f32 0.0, %v660
        %v662 = vand.u32 %v620, 4294901760
        %v663 = vsub.f32 %v620, %v662
        %v664 = vand.u32 %v663, 4294901760
        %v665 = vsub.f32 %v663, %v664
        %v666 = vand.u32 %v665, 4294901760
        %667 = vmatmul.f32.gmra.mxu0 %v666
        %v668 = vpop.f32.mrf.mxu0
        %v669 = vadd.f32 0.0, %v668
        %v670 = vand.u32 %v623, 4294901760
        %v671 = vsub.f32 %v623, %v670
        %v672 = vand.u32 %v671, 4294901760
        %v673 = vsub.f32 %v671, %v672
        %v674 = vand.u32 %v673, 4294901760
        %675 = vmatmul.f32.gmra.mxu0 %v674
        %v676 = vpop.f32.mrf.mxu0
        %v677 = vadd.f32 0.0, %v676
        %678 = vdwg.mxu0
        %679 = vmatpush.msra.mxu0 0.0
        %680 = vmatpush.msra.mxu0 0.0
        %681 = vmatpush.msra.mxu0 0.0
        %682 = vmatpush.msra.mxu0 0.0
        %683 = vmatpush.msra.mxu0 0.0
        %684 = vmatpush.msra.mxu0 0.0
        %685 = vmatpush.msra.mxu0 0.0
        %686 = vmatpush.msra.mxu0 0.0
        %687 = vmatpush.msra.mxu0 0.0
        %688 = vmatpush.msra.mxu0 0.0
        %689 = vmatpush.msra.mxu0 0.0
        %690 = vmatpush.msra.mxu0 0.0
        %691 = vmatpush.msra.mxu0 0.0
        %692 = vmatpush.msra.mxu0 0.0
        %693 = vmatpush.msra.mxu0 0.0
        %v694 = vand.u32 %v625, 4294901760
        %v695 = vsub.f32 %v625, %v694
        %v696 = vand.u32 %v695, 4294901760
        %v697 = vsub.f32 %v695, %v696
        %v698 = vand.u32 %v697, 4294901760
        %699 = vmatpush.msra.mxu0 %v698
        %v700 = vand.u32 %v614, 4294901760
        %701 = vmatmul.f32.gmra.mxu0 %v700
        %v702 = vpop.f32.mrf.mxu0
        %v703 = vadd.f32 %v653, %v702
        %v704 = vand.u32 %v617, 4294901760
        %705 = vmatmul.f32.gmra.mxu0 %v704
        %v706 = vpop.f32.mrf.mxu0
        %v707 = vadd.f32 %v661, %v706
        %v708 = vand.u32 %v620, 4294901760
        %709 = vmatmul.f32.gmra.mxu0 %v708
        %v710 = vpop.f32.mrf.mxu0
        %v711 = vadd.f32 %v669, %v710
        %v712 = vand.u32 %v623, 4294901760
        %713 = vmatmul.f32.gmra.mxu0 %v712
        %v714 = vpop.f32.mrf.mxu0
        %v715 = vadd.f32 %v677, %v714
        %716 = vdwg.mxu0
        %717 = vmatpush.msra.mxu0 0.0
        %718 = vmatpush.msra.mxu0 0.0
        %719 = vmatpush.msra.mxu0 0.0
        %720 = vmatpush.msra.mxu0 0.0
        %721 = vmatpush.msra.mxu0 0.0
        %722 = vmatpush.msra.mxu0 0.0
        %723 = vmatpush.msra.mxu0 0.0
        %724 = vmatpush.msra.mxu0 0.0
        %725 = vmatpush.msra.mxu0 0.0
        %726 = vmatpush.msra.mxu0 0.0
        %727 = vmatpush.msra.mxu0 0.0
        %728 = vmatpush.msra.mxu0 0.0
        %729 = vmatpush.msra.mxu0 0.0
        %730 = vmatpush.msra.mxu0 0.0
        %731 = vmatpush.msra.mxu0 0.0
        %v732 = vand.u32 %v625, 4294901760
        %v733 = vsub.f32 %v625, %v732
        %734 = vmatpush.msra.mxu0 %v733
        %v735 = vand.u32 %v614, 4294901760
        %v736 = vsub.f32 %v614, %v735
        %737 = vmatmul.f32.gmra.mxu0 %v736
        %v738 = vpop.f32.mrf.mxu0
        %v739 = vadd.f32 %v703, %v738
        %v740 = vand.u32 %v617, 4294901760
        %v741 = vsub.f32 %v617, %v740
        %742 = vmatmul.f32.gmra.mxu0 %v741
        %v743 = vpop.f32.mrf.mxu0
        %v744 = vadd.f32 %v707, %v743
        %v745 = vand.u32 %v620, 4294901760
        %v746 = vsub.f32 %v620, %v745
        %747 = vmatmul.f32.gmra.mxu0 %v746
        %v748 = vpop.f32.mrf.mxu0
        %v749 = vadd.f32 %v711, %v748
        %v750 = vand.u32 %v623, 4294901760
        %v751 = vsub.f32 %v623, %v750
        %752 = vmatmul.f32.gmra.mxu0 %v751
        %v753 = vpop.f32.mrf.mxu0
        %v754 = vadd.f32 %v715, %v753
        %755 = vdwg.mxu0
        %756 = vmatpush.msra.mxu0 0.0
        %757 = vmatpush.msra.mxu0 0.0
        %758 = vmatpush.msra.mxu0 0.0
        %759 = vmatpush.msra.mxu0 0.0
        %760 = vmatpush.msra.mxu0 0.0
        %761 = vmatpush.msra.mxu0 0.0
        %762 = vmatpush.msra.mxu0 0.0
        %763 = vmatpush.msra.mxu0 0.0
        %764 = vmatpush.msra.mxu0 0.0
        %765 = vmatpush.msra.mxu0 0.0
        %766 = vmatpush.msra.mxu0 0.0
        %767 = vmatpush.msra.mxu0 0.0
        %768 = vmatpush.msra.mxu0 0.0
        %769 = vmatpush.msra.mxu0 0.0
        %770 = vmatpush.msra.mxu0 0.0
        %v771 = vand.u32 %v625, 4294901760
        %772 = vmatpush.msra.mxu0 %v771
        %v773 = vand.u32 %v614, 4294901760
        %v774 = vsub.f32 %v614, %v773
        %v775 = vand.u32 %v774, 4294901760
        %776 = vmatmul.f32.gmra.mxu0 %v775
        %v777 = vpop.f32.mrf.mxu0
        %v778 = vadd.f32 %v739, %v777
        %v779 = vand.u32 %v617, 4294901760
        %v780 = vsub.f32 %v617, %v779
        %v781 = vand.u32 %v780, 4294901760
        %782 = vmatmul.f32.gmra.mxu0 %v781
        %v783 = vpop.f32.mrf.mxu0
        %v784 = vadd.f32 %v744, %v783
        %v785 = vand.u32 %v620, 4294901760
        %v786 = vsub.f32 %v620, %v785
        %v787 = vand.u32 %v786, 4294901760
        %788 = vmatmul.f32.gmra.mxu0 %v787
        %v789 = vpop.f32.mrf.mxu0
        %v790 = vadd.f32 %v749, %v789
        %v791 = vand.u32 %v623, 4294901760
        %v792 = vsub.f32 %v623, %v791
        %v793 = vand.u32 %v792, 4294901760
        %794 = vmatmul.f32.gmra.mxu0 %v793
        %v795 = vpop.f32.mrf.mxu0
        %v796 = vadd.f32 %v754, %v795
        %797 = vdwg.mxu0
        %798 = vmatpush.msra.mxu0 0.0
        %799 = vmatpush.msra.mxu0 0.0
        %800 = vmatpush.msra.mxu0 0.0
        %801 = vmatpush.msra.mxu0 0.0
        %802 = vmatpush.msra.mxu0 0.0
        %803 = vmatpush.msra.mxu0 0.0
        %804 = vmatpush.msra.mxu0 0.0
        %805 = vmatpush.msra.mxu0 0.0
        %806 = vmatpush.msra.mxu0 0.0
        %807 = vmatpush.msra.mxu0 0.0
        %808 = vmatpush.msra.mxu0 0.0
        %809 = vmatpush.msra.mxu0 0.0
        %810 = vmatpush.msra.mxu0 0.0
        %811 = vmatpush.msra.mxu0 0.0
        %812 = vmatpush.msra.mxu0 0.0
        %v813 = vand.u32 %v625, 4294901760
        %v814 = vsub.f32 %v625, %v813
        %v815 = vand.u32 %v814, 4294901760
        %816 = vmatpush.msra.mxu0 %v815
        %v817 = vand.u32 %v614, 4294901760
        %818 = vmatmul.f32.gmra.mxu0 %v817
        %v819 = vpop.f32.mrf.mxu0
        %v820 = vadd.f32 %v778, %v819
        %v821 = vand.u32 %v617, 4294901760
        %822 = vmatmul.f32.gmra.mxu0 %v821
        %v823 = vpop.f32.mrf.mxu0
        %v824 = vadd.f32 %v784, %v823
        %v825 = vand.u32 %v620, 4294901760
        %826 = vmatmul.f32.gmra.mxu0 %v825
        %v827 = vpop.f32.mrf.mxu0
        %v828 = vadd.f32 %v790, %v827
        %v829 = vand.u32 %v623, 4294901760
        %830 = vmatmul.f32.gmra.mxu0 %v829
        %v831 = vpop.f32.mrf.mxu0
        %v832 = vadd.f32 %v796, %v831
        %833 = vdwg.mxu0
        %834 = vmatpush.msra.mxu0 0.0
        %835 = vmatpush.msra.mxu0 0.0
        %836 = vmatpush.msra.mxu0 0.0
        %837 = vmatpush.msra.mxu0 0.0
        %838 = vmatpush.msra.mxu0 0.0
        %839 = vmatpush.msra.mxu0 0.0
        %840 = vmatpush.msra.mxu0 0.0
        %841 = vmatpush.msra.mxu0 0.0
        %842 = vmatpush.msra.mxu0 0.0
        %843 = vmatpush.msra.mxu0 0.0
        %844 = vmatpush.msra.mxu0 0.0
        %845 = vmatpush.msra.mxu0 0.0
        %846 = vmatpush.msra.mxu0 0.0
        %847 = vmatpush.msra.mxu0 0.0
        %848 = vmatpush.msra.mxu0 0.0
        %v849 = vand.u32 %v625, 4294901760
        %850 = vmatpush.msra.mxu0 %v849
        %v851 = vand.u32 %v614, 4294901760
        %852 = vmatmul.f32.gmra.mxu0 %v851
        %v853 = vpop.f32.mrf.mxu0
        %v854 = vadd.f32 %v820, %v853
        %v855 = vand.u32 %v617, 4294901760
        %856 = vmatmul.f32.gmra.mxu0 %v855
        %v857 = vpop.f32.mrf.mxu0
        %v858 = vadd.f32 %v824, %v857
        %v859 = vand.u32 %v620, 4294901760
        %860 = vmatmul.f32.gmra.mxu0 %v859
        %v861 = vpop.f32.mrf.mxu0
        %v862 = vadd.f32 %v828, %v861
        %v863 = vand.u32 %v623, 4294901760
        %864 = vmatmul.f32.gmra.mxu0 %v863
        %v865 = vpop.f32.mrf.mxu0
        %v866 = vadd.f32 %v832, %v865
        %867 = vdwg.mxu0
        %868 = vmatpush.msra.mxu0 0.0
        %869 = vmatpush.msra.mxu0 0.0
        %870 = vmatpush.msra.mxu0 0.0
        %871 = vmatpush.msra.mxu0 0.0
        %872 = vmatpush.msra.mxu0 0.0
        %873 = vmatpush.msra.mxu0 0.0
        %874 = vmatpush.msra.mxu0 0.0
        %875 = vmatpush.msra.mxu0 0.0
        %876 = vmatpush.msra.mxu0 0.0
        %877 = vmatpush.msra.mxu0 0.0
        %878 = vmatpush.msra.mxu0 0.0
        %879 = vmatpush.msra.mxu0 0.0
        %880 = vmatpush.msra.mxu0 0.0
        %881 = vmatpush.msra.mxu0 0.0
        %882 = vmatpush.msra.mxu0 0.0
        %v883 = vand.u32 %v627, 4294901760
        %884 = vmatpush.msra.mxu0 %v883
        %v885 = vand.u32 %v614, 4294901760
        %v886 = vsub.f32 %v614, %v885
        %v887 = vand.u32 %v886, 4294901760
        %v888 = vsub.f32 %v886, %v887
        %v889 = vand.u32 %v888, 4294901760
        %890 = vmatmul.f32.gmra.mxu0 %v889
        %v891 = vpop.f32.mrf.mxu0
        %v892 = vadd.f32 0.0, %v891
        %v893 = vand.u32 %v617, 4294901760
        %v894 = vsub.f32 %v617, %v893
        %v895 = vand.u32 %v894, 4294901760
        %v896 = vsub.f32 %v894, %v895
        %v897 = vand.u32 %v896, 4294901760
        %898 = vmatmul.f32.gmra.mxu0 %v897
        %v899 = vpop.f32.mrf.mxu0
        %v900 = vadd.f32 0.0, %v899
        %v901 = vand.u32 %v620, 4294901760
        %v902 = vsub.f32 %v620, %v901
        %v903 = vand.u32 %v902, 4294901760
        %v904 = vsub.f32 %v902, %v903
        %v905 = vand.u32 %v904, 4294901760
        %906 = vmatmul.f32.gmra.mxu0 %v905
        %v907 = vpop.f32.mrf.mxu0
        %v908 = vadd.f32 0.0, %v907
        %v909 = vand.u32 %v623, 4294901760
        %v910 = vsub.f32 %v623, %v909
        %v911 = vand.u32 %v910, 4294901760
        %v912 = vsub.f32 %v910, %v911
        %v913 = vand.u32 %v912, 4294901760
        %914 = vmatmul.f32.gmra.mxu0 %v913
        %v915 = vpop.f32.mrf.mxu0
        %v916 = vadd.f32 0.0, %v915
        %917 = vdwg.mxu0
        %918 = vmatpush.msra.mxu0 0.0
        %919 = vmatpush.msra.mxu0 0.0
        %920 = vmatpush.msra.mxu0 0.0
        %921 = vmatpush.msra.mxu0 0.0
        %922 = vmatpush.msra.mxu0 0.0
        %923 = vmatpush.msra.mxu0 0.0
        %924 = vmatpush.msra.mxu0 0.0
        %925 = vmatpush.msra.mxu0 0.0
        %926 = vmatpush.msra.mxu0 0.0
        %927 = vmatpush.msra.mxu0 0.0
        %928 = vmatpush.msra.mxu0 0.0
        %929 = vmatpush.msra.mxu0 0.0
        %930 = vmatpush.msra.mxu0 0.0
        %931 = vmatpush.msra.mxu0 0.0
        %932 = vmatpush.msra.mxu0 0.0
        %v933 = vand.u32 %v627, 4294901760
        %v934 = vsub.f32 %v627, %v933
        %v935 = vand.u32 %v934, 4294901760
        %v936 = vsub.f32 %v934, %v935
        %v937 = vand.u32 %v936, 4294901760
        %938 = vmatpush.msra.mxu0 %v937
        %v939 = vand.u32 %v614, 4294901760
        %940 = vmatmul.f32.gmra.mxu0 %v939
        %v941 = vpop.f32.mrf.mxu0
        %v942 = vadd.f32 %v892, %v941
        %v943 = vand.u32 %v617, 4294901760
        %944 = vmatmul.f32.gmra.mxu0 %v943
        %v945 = vpop.f32.mrf.mxu0
        %v946 = vadd.f32 %v900, %v945
        %v947 = vand.u32 %v620, 4294901760
        %948 = vmatmul.f32.gmra.mxu0 %v947
        %v949 = vpop.f32.mrf.mxu0
        %v950 = vadd.f32 %v908, %v949
        %v951 = vand.u32 %v623, 4294901760
        %952 = vmatmul.f32.gmra.mxu0 %v951
        %v953 = vpop.f32.mrf.mxu0
        %v954 = vadd.f32 %v916, %v953
        %955 = vdwg.mxu0
        %956 = vmatpush.msra.mxu0 0.0
        %957 = vmatpush.msra.mxu0 0.0
        %958 = vmatpush.msra.mxu0 0.0
        %959 = vmatpush.msra.mxu0 0.0
        %960 = vmatpush.msra.mxu0 0.0
        %961 = vmatpush.msra.mxu0 0.0
        %962 = vmatpush.msra.mxu0 0.0
        %963 = vmatpush.msra.mxu0 0.0
        %964 = vmatpush.msra.mxu0 0.0
        %965 = vmatpush.msra.mxu0 0.0
        %966 = vmatpush.msra.mxu0 0.0
        %967 = vmatpush.msra.mxu0 0.0
        %968 = vmatpush.msra.mxu0 0.0
        %969 = vmatpush.msra.mxu0 0.0
        %970 = vmatpush.msra.mxu0 0.0
        %v971 = vand.u32 %v627, 4294901760
        %v972 = vsub.f32 %v627, %v971
        %973 = vmatpush.msra.mxu0 %v972
        %v974 = vand.u32 %v614, 4294901760
        %v975 = vsub.f32 %v614, %v974
        %976 = vmatmul.f32.gmra.mxu0 %v975
        %v977 = vpop.f32.mrf.mxu0
        %v978 = vadd.f32 %v942, %v977
        %v979 = vand.u32 %v617, 4294901760
        %v980 = vsub.f32 %v617, %v979
        %981 = vmatmul.f32.gmra.mxu0 %v980
        %v982 = vpop.f32.mrf.mxu0
        %v983 = vadd.f32 %v946, %v982
        %v984 = vand.u32 %v620, 4294901760
        %v985 = vsub.f32 %v620, %v984
        %986 = vmatmul.f32.gmra.mxu0 %v985
        %v987 = vpop.f32.mrf.mxu0
        %v988 = vadd.f32 %v950, %v987
        %v989 = vand.u32 %v623, 4294901760
        %v990 = vsub.f32 %v623, %v989
        %991 = vmatmul.f32.gmra.mxu0 %v990
        %v992 = vpop.f32.mrf.mxu0
        %v993 = vadd.f32 %v954, %v992
        %994 = vdwg.mxu0
        %995 = vmatpush.msra.mxu0 0.0
        %996 = vmatpush.msra.mxu0 0.0
        %997 = vmatpush.msra.mxu0 0.0
        %998 = vmatpush.msra.mxu0 0.0
        %999 = vmatpush.msra.mxu0 0.0
        %1000 = vmatpush.msra.mxu0 0.0
        %1001 = vmatpush.msra.mxu0 0.0
        %1002 = vmatpush.msra.mxu0 0.0
        %1003 = vmatpush.msra.mxu0 0.0
        %1004 = vmatpush.msra.mxu0 0.0
        %1005 = vmatpush.msra.mxu0 0.0
        %1006 = vmatpush.msra.mxu0 0.0
        %1007 = vmatpush.msra.mxu0 0.0
        %1008 = vmatpush.msra.mxu0 0.0
        %1009 = vmatpush.msra.mxu0 0.0
        %v1010 = vand.u32 %v627, 4294901760
        %1011 = vmatpush.msra.mxu0 %v1010
        %v1012 = vand.u32 %v614, 4294901760
        %v1013 = vsub.f32 %v614, %v1012
        %v1014 = vand.u32 %v1013, 4294901760
        %1015 = vmatmul.f32.gmra.mxu0 %v1014
        %v1016 = vpop.f32.mrf.mxu0
        %v1017 = vadd.f32 %v978, %v1016
        %v1018 = vand.u32 %v617, 4294901760
        %v1019 = vsub.f32 %v617, %v1018
        %v1020 = vand.u32 %v1019, 4294901760
        %1021 = vmatmul.f32.gmra.mxu0 %v1020
        %v1022 = vpop.f32.mrf.mxu0
        %v1023 = vadd.f32 %v983, %v1022
        %v1024 = vand.u32 %v620, 4294901760
        %v1025 = vsub.f32 %v620, %v1024
        %v1026 = vand.u32 %v1025, 4294901760
        %1027 = vmatmul.f32.gmra.mxu0 %v1026
        %v1028 = vpop.f32.mrf.mxu0
        %v1029 = vadd.f32 %v988, %v1028
        %v1030 = vand.u32 %v623, 4294901760
        %v1031 = vsub.f32 %v623, %v1030
        %v1032 = vand.u32 %v1031, 4294901760
        %1033 = vmatmul.f32.gmra.mxu0 %v1032
        %v1034 = vpop.f32.mrf.mxu0
        %v1035 = vadd.f32 %v993, %v1034
        %1036 = vdwg.mxu0
        %1037 = vmatpush.msra.mxu0 0.0
        %1038 = vmatpush.msra.mxu0 0.0
        %1039 = vmatpush.msra.mxu0 0.0
        %1040 = vmatpush.msra.mxu0 0.0
        %1041 = vmatpush.msra.mxu0 0.0
        %1042 = vmatpush.msra.mxu0 0.0
        %1043 = vmatpush.msra.mxu0 0.0
        %1044 = vmatpush.msra.mxu0 0.0
        %1045 = vmatpush.msra.mxu0 0.0
        %1046 = vmatpush.msra.mxu0 0.0
        %1047 = vmatpush.msra.mxu0 0.0
        %1048 = vmatpush.msra.mxu0 0.0
        %1049 = vmatpush.msra.mxu0 0.0
        %1050 = vmatpush.msra.mxu0 0.0
        %1051 = vmatpush.msra.mxu0 0.0
        %v1052 = vand.u32 %v627, 4294901760
        %v1053 = vsub.f32 %v627, %v1052
        %v1054 = vand.u32 %v1053, 4294901760
        %1055 = vmatpush.msra.mxu0 %v1054
        %v1056 = vand.u32 %v614, 4294901760
        %1057 = vmatmul.f32.gmra.mxu0 %v1056
        %v1058 = vpop.f32.mrf.mxu0
        %v1059 = vadd.f32 %v1017, %v1058
        %v1060 = vand.u32 %v617, 4294901760
        %1061 = vmatmul.f32.gmra.mxu0 %v1060
        %v1062 = vpop.f32.mrf.mxu0
        %v1063 = vadd.f32 %v1023, %v1062
        %v1064 = vand.u32 %v620, 4294901760
        %1065 = vmatmul.f32.gmra.mxu0 %v1064
        %v1066 = vpop.f32.mrf.mxu0
        %v1067 = vadd.f32 %v1029, %v1066
        %v1068 = vand.u32 %v623, 4294901760
        %1069 = vmatmul.f32.gmra.mxu0 %v1068
        %v1070 = vpop.f32.mrf.mxu0
        %v1071 = vadd.f32 %v1035, %v1070
        %1072 = vdwg.mxu0
        %1073 = vmatpush.msra.mxu0 0.0
        %1074 = vmatpush.msra.mxu0 0.0
        %1075 = vmatpush.msra.mxu0 0.0
        %1076 = vmatpush.msra.mxu0 0.0
        %1077 = vmatpush.msra.mxu0 0.0
        %1078 = vmatpush.msra.mxu0 0.0
        %1079 = vmatpush.msra.mxu0 0.0
        %1080 = vmatpush.msra.mxu0 0.0
        %1081 = vmatpush.msra.mxu0 0.0
        %1082 = vmatpush.msra.mxu0 0.0
        %1083 = vmatpush.msra.mxu0 0.0
        %1084 = vmatpush.msra.mxu0 0.0
        %1085 = vmatpush.msra.mxu0 0.0
        %1086 = vmatpush.msra.mxu0 0.0
        %1087 = vmatpush.msra.mxu0 0.0
        %v1088 = vand.u32 %v627, 4294901760
        %1089 = vmatpush.msra.mxu0 %v1088
        %v1090 = vand.u32 %v614, 4294901760
        %1091 = vmatmul.f32.gmra.mxu0 %v1090
        %v1092 = vpop.f32.mrf.mxu0
        %v1093 = vadd.f32 %v1059, %v1092
        %v1094 = vand.u32 %v617, 4294901760
        %1095 = vmatmul.f32.gmra.mxu0 %v1094
        %v1096 = vpop.f32.mrf.mxu0
        %v1097 = vadd.f32 %v1063, %v1096
        %v1098 = vand.u32 %v620, 4294901760
        %1099 = vmatmul.f32.gmra.mxu0 %v1098
        %v1100 = vpop.f32.mrf.mxu0
        %v1101 = vadd.f32 %v1067, %v1100
        %v1102 = vand.u32 %v623, 4294901760
        %1103 = vmatmul.f32.gmra.mxu0 %v1102
        %v1104 = vpop.f32.mrf.mxu0
        %v1105 = vadd.f32 %v1071, %v1104
        %1106 = vdwg.mxu0
        %1107 = vst [vmem:[%s373] sm:$0xff] %v854
        %1108 = vst [vmem:[%s373 + $0x8] sm:$0xff] %v1093
        %1109 = vst [vmem:[%s373 + $0x10] sm:$0xff] %v858
        %1110 = vst [vmem:[%s373 + $0x18] sm:$0xff] %v1097
        %1111 = vst [vmem:[%s373 + $0x20] sm:$0xff] %v862
        %1112 = vst [vmem:[%s373 + $0x28] sm:$0xff] %v1101
        %1113 = vst [vmem:[%s373 + $0x30] sm:$0xff] %v866
        %1114 = vst [vmem:[%s373 + $0x38] sm:$0xff] %v1105
        %s1115 = sand.u32 %s214, 1
        %s1116 = scalar_lea.sflag [#allocation3], %s1115
        %s1117 = sand.u32 %s214, 1
        %s1118 = smul.addr %s1117, 64
        %s1119 = scalar_lea.vmem [#allocation2], %s1118
        %s1120 = sand.u32 %s28, 1
        %s1121 = scalar_lea.sflag [#allocation5], %s1120
        %s1122 = sand.u32 %s240, 1
        %s1123 = smul.addr %s1122, 8
        %s1124 = scalar_lea.vmem [#allocation4], %s1123
        %s1125 = sand.u32 %s28, 1
        %s1126 = scalar_lea.sflag [#allocation5], %s1125
        %s1127 = sand.u32 %s266, 1
        %s1128 = smul.addr %s1127, 8
        %s1129 = scalar_lea.vmem [#allocation6], %s1128
        // Predicated region
        $region53: #{dirvae_forward.3} parent=51 // pred_check
          %p1130 = pneg %p224
        $region54: #{dirvae_forward.3} parent=51 // pred_check_branch
          %1132 = sbr.rel (%p1130) target = $region56
        $region55: #{dirvae_forward.3} parent=51 // pred_region
          %s1133 = smul.u32 2, %s28
          %1135 = vsyncadd %s1116, 0
          %s1136 = smul.addr %s1133, 8
          %s1137 = scalar_lea.hbm %s8, %s1136
          %s1138 = sshll.u32 %s1119, 4
          %s1139 = int_to_ptr.vmem [resolvable:$true] %s1138
          %s1140 = sshll.u32 %s1137, 4
          %s1141 = int_to_ptr.hbm [resolvable:$true] %s1140
          %1146 = dma.vmem_to_hbm [thread:$0]  %s1139, 1024, %s1141, %s1116, 256, 1024, 16
        $region56: #{dirvae_forward.3} parent=51 // pred_fallthru
          _
        // Predicated region
        $region57: #{dirvae_forward.3} parent=51 // pred_check
          %p1147 = pneg %p250
        $region58: #{dirvae_forward.3} parent=51 // pred_check_branch
          %1149 = sbr.rel (%p1147) target = $region60
        $region59: #{dirvae_forward.3} parent=51 // pred_region
          %s1150 = smul.u32 2, %s28
          %1152 = vsyncadd %s1121, 0
          %s1153 = smul.addr %s1150, 4
          %s1154 = scalar_lea.hbm %s9, %s1153
          %s1156 = sshll.u32 %s1124, 4
          %s1157 = int_to_ptr.vmem [resolvable:$true] %s1156
          %s1158 = sshll.u32 %s1154, 4
          %s1159 = int_to_ptr.hbm [resolvable:$true] %s1158
          %1161 = dma.vmem_to_hbm [thread:$0]  %s1157, 128, %s1159, %s1121
        $region60: #{dirvae_forward.3} parent=51 // pred_fallthru
          _
        // Predicated region
        $region61: #{dirvae_forward.3} parent=51 // pred_check
          %p1162 = pneg %p276
        $region62: #{dirvae_forward.3} parent=51 // pred_check_branch
          %1164 = sbr.rel (%p1162) target = $region64
        $region63: #{dirvae_forward.3} parent=51 // pred_region
          %s1165 = smul.u32 2, %s28
          %1167 = vsyncadd %s1126, 0
          %s1168 = smul.addr %s1165, 4
          %s1169 = scalar_lea.hbm %s10, %s1168
          %s1171 = sshll.u32 %s1129, 4
          %s1172 = int_to_ptr.vmem [resolvable:$true] %s1171
          %s1173 = sshll.u32 %s1169, 4
          %s1174 = int_to_ptr.hbm [resolvable:$true] %s1173
          %1176 = dma.vmem_to_hbm [thread:$0]  %s1172, 128, %s1174, %s1126
        $region64: #{dirvae_forward.3} parent=51 // pred_fallthru
          _
      $region52: #{dirvae_forward.3} parent=5 // pred_fallthru
        _
      %p1177 = scmp.le.s32.totalorder 2, %s23
      // Predicated region
      $region65: #{dirvae_forward.3} parent=5 // pred_check
        %p1178 = pneg %p1177
      $region66: #{dirvae_forward.3} parent=5 // pred_check_branch
        %1180 = sbr.rel (%p1178) target = $region68
      $region67: #{dirvae_forward.3} parent=5 // pred_region
        %s1181 = ssub.s32 %s23, 2
        // Predicated region
        $region69: #{dirvae_forward.3} parent=67 // pred_check
          %p1182 = pneg %p230
        $region70: #{dirvae_forward.3} parent=67 // pred_check_branch
          %1184 = sbr.rel (%p1182) target = $region72
        $region71: #{dirvae_forward.3} parent=67 // pred_region
          %s1185 = sand.u32 %s215, 1
          %s1186 = scalar_lea.sflag [#allocation3], %s1185
          %s1187 = sand.u32 %s215, 1
          %s1188 = smul.addr %s1187, 64
          %s1189 = scalar_lea.vmem [#allocation2], %s1188
          %1191 = dma.done %s1186, 1024
        $region72: #{dirvae_forward.3} parent=67 // pred_fallthru
          _
        // Predicated region
        $region73: #{dirvae_forward.3} parent=67 // pred_check
          %p1192 = pneg %p256
        $region74: #{dirvae_forward.3} parent=67 // pred_check_branch
          %1194 = sbr.rel (%p1192) target = $region76
        $region75: #{dirvae_forward.3} parent=67 // pred_region
          %s1195 = sand.u32 %s29, 1
          %s1196 = scalar_lea.sflag [#allocation5], %s1195
          %s1197 = sand.u32 %s241, 1
          %s1198 = smul.addr %s1197, 8
          %s1199 = scalar_lea.vmem [#allocation4], %s1198
          %1201 = dma.done %s1196, 128
        $region76: #{dirvae_forward.3} parent=67 // pred_fallthru
          _
        // Predicated region
        $region77: #{dirvae_forward.3} parent=67 // pred_check
          %p1202 = pneg %p282
        $region78: #{dirvae_forward.3} parent=67 // pred_check_branch
          %1204 = sbr.rel (%p1202) target = $region80
        $region79: #{dirvae_forward.3} parent=67 // pred_region
          %s1205 = sand.u32 %s29, 1
          %s1206 = scalar_lea.sflag [#allocation5], %s1205
          %s1207 = sand.u32 %s267, 1
          %s1208 = smul.addr %s1207, 8
          %s1209 = scalar_lea.vmem [#allocation6], %s1208
          %1211 = dma.done %s1206, 128
        $region80: #{dirvae_forward.3} parent=67 // pred_fallthru
          _
      $region68: #{dirvae_forward.3} parent=5 // pred_fallthru
        _
    $region6: #{dirvae_forward.3} parent=1 // loop_footer
      %s27 = sadd.s32 1, %s23
    $region7: #{dirvae_forward.3} parent=1 // loop_footer_branch
      %22 = sbr.rel target = $region3
    $region8: #{dirvae_forward.3} parent=1 // loop_exit
      _
    %1212 = vsyncpa [#allocation3], 1
    %s1213 = scalar_lea.sflag [#allocation3], 1
    %1214 = vsyncpa %s1213, 1
    %1215 = vsyncpa [#allocation5], 1
    %s1216 = scalar_lea.sflag [#allocation5], 1
    %1217 = vsyncpa %s1216, 1

// kernel: dirvae_forward.2
$region0: #{dirvae_forward.2}
  #allocation0 [shape = 'u32[]', space=smem, size = 0x4, offset = 0x4, fixed_abs, tag = 'smem constant byte address 0x4 - core index']
  #allocation1 [shape = 'u32[72,128]{1,0:T(1,128)}', space=vmem, size = 0x9000, scoped, tag = 'internal scratch']
  %s0 = inlined_call_operand.vmem [shape: f32[1024,32], index: 0, kind: input, shape index: {}]
  %s1 = inlined_call_operand.vmem [shape: f32[12,32], index: 1, kind: input, shape index: {}]
  %s2 = inlined_call_operand.vmem [shape: f32[8,12], index: 2, kind: input, shape index: {}]
  %s3 = inlined_call_operand.vmem [shape: f32[4,8], index: 3, kind: input, shape index: {}]
  %s4 = inlined_call_operand.vmem [shape: f32[4,4], index: 4, kind: input, shape index: {}]
  %s5 = inlined_call_operand.vmem [shape: f32[12,1], index: 5, kind: input, shape index: {}]
  %s6 = inlined_call_operand.vmem [shape: f32[12,1], index: 6, kind: input, shape index: {}]
  %s7 = inlined_call_operand.vmem [shape: f32[8,1], index: 7, kind: input, shape index: {}]
  %s8 = inlined_call_operand.vmem [shape: f32[8,1], index: 8, kind: input, shape index: {}]
  %s9 = inlined_call_operand.vmem [shape: f32[4,1], index: 9, kind: input, shape index: {}]
  %s10 = inlined_call_operand.vmem [shape: f32[4,1], index: 10, kind: input, shape index: {}]
  %s11 = inlined_call_operand.vmem [shape: f32[4,1024], index: 11, kind: output, shape index: {0}]
  %s12 = inlined_call_operand.hbm [shape: f32[12,1], index: 12, kind: output, shape index: {1}]
  %s13 = inlined_call_operand.hbm [shape: f32[12,1], index: 13, kind: output, shape index: {2}]
  %s14 = inlined_call_operand.hbm [shape: f32[8,1], index: 14, kind: output, shape index: {3}]
  %s15 = inlined_call_operand.hbm [shape: f32[8,1], index: 15, kind: output, shape index: {4}]
  %s16 = inlined_call_operand.hbm [shape: f32[4,1], index: 16, kind: output, shape index: {5}]
  %s17 = inlined_call_operand.hbm [shape: f32[4,1], index: 17, kind: output, shape index: {6}]
  %s18 = inlined_call_operand.vmem [shape: f32[4,1], index: 18, kind: output, shape index: {7}]
  %s19 = inlined_call_operand.vmem [shape: f32[4,1], index: 19, kind: output, shape index: {8}]
  %20 = xla_tuple %s11, %s12, %s13, %s14, %s15, %s16, %s17, %s18, %s19
  %s21 = sld [smem:[#allocation0]]
  $region177: #{dirvae_forward.2} parent=0
    _
  %s23 = ssub.s32 1, %s21
  %s24 = scalar_select 0, %s23, %s21
  $region1: #{dirvae_forward.2} parent=0
    #allocation2 [shape = 'u8[8192]{0}', space=vmem, size = 0x2000, scoped, tag = 'output window, operand 1, single buffered']
    #allocation3 [shape = 's32[2]{0}', space=sflag, size = 0x8, scoped, tag = 'scoped memory for dirvae_forward.2']
    #allocation4 [shape = 'u8[8192]{0}', space=vmem, size = 0x2000, scoped, tag = 'output window, operand 2, single buffered']
    #allocation5 [shape = 's32[1]{0}', space=sflag, size = 0x4, scoped, tag = 'scoped memory for dirvae_forward.2']
    #allocation6 [shape = 'u8[4096]{0}', space=vmem, size = 0x1000, scoped, tag = 'output window, operand 3, single buffered']
    #allocation7 [shape = 'u8[4096]{0}', space=vmem, size = 0x1000, scoped, tag = 'output window, operand 4, single buffered']
    #allocation8 [shape = 's32[1]{0}', space=sflag, size = 0x4, scoped, tag = 'scoped memory for dirvae_forward.2']
    #allocation9 [shape = 'u8[2048]{0}', space=vmem, size = 0x800, scoped, tag = 'output window, operand 5, single buffered']
    #allocation10 [shape = 'u8[2048]{0}', space=vmem, size = 0x800, scoped, tag = 'output window, operand 6, single buffered']
    #allocation11 [shape = 's32[1]{0}', space=sflag, size = 0x4, scoped, tag = 'scoped memory for dirvae_forward.2']
    %25 = vsyncpa [#allocation3], 0
    %26 = vsyncpa [#allocation5], 0
    %27 = vsyncpa [#allocation8], 0
    %28 = vsyncpa [#allocation11], 0
    loop: start=0, step=1, limit=18
    $region2: #{dirvae_forward.2} parent=1 // loop_pre_header
      _
    $region3: #{dirvae_forward.2} parent=1 // loop_header
      %s30 = sphi 0, %s34
      %p31 = scmp.ge.s32.totalorder %s30, 18
      %s37 = sphi 0, %s49
      %s38 = sphi 0, %s45
      %s39 = sphi 0, %s37
      %s40 = sphi 0, %s38
      %s41 = sphi 0, %s39
      %s42 = sphi 0, %s40
      %s52 = sphi 0, %s54
      %s55 = sphi 0, %s52
      %s56 = sphi 0, %s55
      %s72 = sphi 0, %s56
      %s76 = sphi 0, %s76
      %s78 = sphi 0, %s76
      %s79 = sphi 0, %s78
      %s93 = sphi 0, %s79
      %s97 = sphi 0, %s97
      %s99 = sphi 0, %s97
      %s100 = sphi 0, %s99
      %s114 = sphi 0, %s100
      %s118 = sphi 0, %s118
      %s120 = sphi 0, %s118
      %s121 = sphi 0, %s120
      %s135 = sphi 0, %s121
      %s139 = sphi 0, %s139
      %s141 = sphi 0, %s139
      %s142 = sphi 0, %s141
      %s156 = sphi 0, %s142
      %s160 = sphi 0, %s160
      %s162 = sphi 0, %s160
      %s163 = sphi 0, %s162
      %s177 = sphi 0, %s163
      %s181 = sphi 0, %s181
      %s183 = sphi 0, %s181
      %s184 = sphi 0, %s183
      %s198 = sphi 0, %s184
      %s202 = sphi 0, %s202
      %s204 = sphi 0, %s202
      %s205 = sphi 0, %s204
      %s219 = sphi 0, %s205
      %s223 = sphi 0, %s223
      %s225 = sphi 0, %s223
      %s226 = sphi 0, %s225
      %s240 = sphi 0, %s226
      %s244 = sphi 0, %s244
      %s246 = sphi 0, %s244
      %s247 = sphi 0, %s246
      %s261 = sphi 0, %s247
      %s265 = sphi 0, %s265
      %s267 = sphi 0, %s265
      %s268 = sphi 0, %s267
      %s282 = sphi 0, %s268
      %s288 = sphi 0, %s290
      %s291 = sphi 0, %s288
      %s292 = sphi 0, %s291
      %s308 = sphi 0, %s292
      %s312 = sphi 0, %s312
      %s314 = sphi 0, %s312
      %s315 = sphi 0, %s314
      %s329 = sphi 0, %s315
      %s333 = sphi 0, %s333
      %s335 = sphi 0, %s333
      %s336 = sphi 0, %s335
      %s350 = sphi 0, %s336
      %s354 = sphi 0, %s354
      %s356 = sphi 0, %s354
      %s357 = sphi 0, %s356
      %s371 = sphi 0, %s357
      %s375 = sphi 0, %s375
      %s377 = sphi 0, %s375
      %s378 = sphi 0, %s377
      %s392 = sphi 0, %s378
      %s396 = sphi 0, %s396
      %s398 = sphi 0, %s396
      %s399 = sphi 0, %s398
      %s413 = sphi 0, %s399
      %s417 = sphi 0, %s417
      %s419 = sphi 0, %s417
      %s420 = sphi 0, %s419
      %s434 = sphi 0, %s420
      %s438 = sphi 0, %s438
      %s440 = sphi 0, %s438
      %s441 = sphi 0, %s440
      %s455 = sphi 0, %s441
      %s459 = sphi 0, %s459
      %s461 = sphi 0, %s459
      %s462 = sphi 0, %s461
      %s476 = sphi 0, %s462
    $region4: #{dirvae_forward.2} parent=1 // loop_header_branch
      %33 = sbr.rel (%p31) target = $region8
    $region5: #{dirvae_forward.2} parent=1 // loop_body
      %s35 = ssub.s32 %s30, 1
      %s36 = ssub.s32 %s30, 2
      %s43 = sadd.s32 1, %s38
      %p44 = scmp.ge.s32.totalorder %s43, 4
      %s45 = scalar_select %p44, 0, %s43
      %s46 = sadd.s32 1, %s37
      %s47 = scalar_select %p44, %s46, %s37
      %p48 = scmp.ge.s32.totalorder %s47, 4
      %s49 = scalar_select %p48, 0, %s47
      %s50 = ssub.s32 %s38, %s45
      %p51 = scmp.eq.s32.totalorder %s50, 0
      %s53 = sadd.s32 %s52, 1
      %s54 = scalar_select %p51, %s52, %s53
      %p57 = pneg %p51
      %p58 = scmp.eq.s32.totalorder %s30, 15
      %p59 = por %p57, %p58
      %p60 = scmp.ne.s32.totalorder %s52, %s55
      %p61 = scmp.eq.s32.totalorder %s30, 0
      %p62 = por %p60, %p61
      %p63 = scmp.ne.s32.totalorder %s52, %s55
      %p64 = scmp.eq.s32.totalorder %s35, 15
      %p65 = por %p63, %p64
      %p66 = scmp.ne.s32.totalorder %s55, %s56
      %p67 = scmp.eq.s32.totalorder %s35, 0
      %p68 = por %p66, %p67
      %p69 = scmp.ne.s32.totalorder %s55, %s56
      %p70 = scmp.eq.s32.totalorder %s36, 15
      %p71 = por %p69, %p70
      %p73 = scmp.ne.s32.totalorder %s56, %s72
      %p74 = scmp.eq.s32.totalorder %s36, 0
      %p75 = por %p73, %p74
      %s77 = sadd.s32 %s76, 1
      %p80 = scmp.eq.s32.totalorder %s30, 15
      %p81 = scmp.ne.s32.totalorder %s76, %s78
      %p82 = scmp.eq.s32.totalorder %s30, 0
      %p83 = por %p81, %p82
      %p84 = scmp.ne.s32.totalorder %s76, %s78
      %p85 = scmp.eq.s32.totalorder %s35, 15
      %p86 = por %p84, %p85
      %p87 = scmp.ne.s32.totalorder %s78, %s79
      %p88 = scmp.eq.s32.totalorder %s35, 0
      %p89 = por %p87, %p88
      %p90 = scmp.ne.s32.totalorder %s78, %s79
      %p91 = scmp.eq.s32.totalorder %s36, 15
      %p92 = por %p90, %p91
      %p94 = scmp.ne.s32.totalorder %s79, %s93
      %p95 = scmp.eq.s32.totalorder %s36, 0
      %p96 = por %p94, %p95
      %s98 = sadd.s32 %s97, 1
      %p101 = scmp.eq.s32.totalorder %s30, 15
      %p102 = scmp.ne.s32.totalorder %s97, %s99
      %p103 = scmp.eq.s32.totalorder %s30, 0
      %p104 = por %p102, %p103
      %p105 = scmp.ne.s32.totalorder %s97, %s99
      %p106 = scmp.eq.s32.totalorder %s35, 15
      %p107 = por %p105, %p106
      %p108 = scmp.ne.s32.totalorder %s99, %s100
      %p109 = scmp.eq.s32.totalorder %s35, 0
      %p110 = por %p108, %p109
      %p111 = scmp.ne.s32.totalorder %s99, %s100
      %p112 = scmp.eq.s32.totalorder %s36, 15
      %p113 = por %p111, %p112
      %p115 = scmp.ne.s32.totalorder %s100, %s114
      %p116 = scmp.eq.s32.totalorder %s36, 0
      %p117 = por %p115, %p116
      %s119 = sadd.s32 %s118, 1
      %p122 = scmp.eq.s32.totalorder %s30, 15
      %p123 = scmp.ne.s32.totalorder %s118, %s120
      %p124 = scmp.eq.s32.totalorder %s30, 0
      %p125 = por %p123, %p124
      %p126 = scmp.ne.s32.totalorder %s118, %s120
      %p127 = scmp.eq.s32.totalorder %s35, 15
      %p128 = por %p126, %p127
      %p129 = scmp.ne.s32.totalorder %s120, %s121
      %p130 = scmp.eq.s32.totalorder %s35, 0
      %p131 = por %p129, %p130
      %p132 = scmp.ne.s32.totalorder %s120, %s121
      %p133 = scmp.eq.s32.totalorder %s36, 15
      %p134 = por %p132, %p133
      %p136 = scmp.ne.s32.totalorder %s121, %s135
      %p137 = scmp.eq.s32.totalorder %s36, 0
      %p138 = por %p136, %p137
      %s140 = sadd.s32 %s139, 1
      %p143 = scmp.eq.s32.totalorder %s30, 15
      %p144 = scmp.ne.s32.totalorder %s139, %s141
      %p145 = scmp.eq.s32.totalorder %s30, 0
      %p146 = por %p144, %p145
      %p147 = scmp.ne.s32.totalorder %s139, %s141
      %p148 = scmp.eq.s32.totalorder %s35, 15
      %p149 = por %p147, %p148
      %p150 = scmp.ne.s32.totalorder %s141, %s142
      %p151 = scmp.eq.s32.totalorder %s35, 0
      %p152 = por %p150, %p151
      %p153 = scmp.ne.s32.totalorder %s141, %s142
      %p154 = scmp.eq.s32.totalorder %s36, 15
      %p155 = por %p153, %p154
      %p157 = scmp.ne.s32.totalorder %s142, %s156
      %p158 = scmp.eq.s32.totalorder %s36, 0
      %p159 = por %p157, %p158
      %s161 = sadd.s32 %s160, 1
      %p164 = scmp.eq.s32.totalorder %s30, 15
      %p165 = scmp.ne.s32.totalorder %s160, %s162
      %p166 = scmp.eq.s32.totalorder %s30, 0
      %p167 = por %p165, %p166
      %p168 = scmp.ne.s32.totalorder %s160, %s162
      %p169 = scmp.eq.s32.totalorder %s35, 15
      %p170 = por %p168, %p169
      %p171 = scmp.ne.s32.totalorder %s162, %s163
      %p172 = scmp.eq.s32.totalorder %s35, 0
      %p173 = por %p171, %p172
      %p174 = scmp.ne.s32.totalorder %s162, %s163
      %p175 = scmp.eq.s32.totalorder %s36, 15
      %p176 = por %p174, %p175
      %p178 = scmp.ne.s32.totalorder %s163, %s177
      %p179 = scmp.eq.s32.totalorder %s36, 0
      %p180 = por %p178, %p179
      %s182 = sadd.s32 %s181, 1
      %p185 = scmp.eq.s32.totalorder %s30, 15
      %p186 = scmp.ne.s32.totalorder %s181, %s183
      %p187 = scmp.eq.s32.totalorder %s30, 0
      %p188 = por %p186, %p187
      %p189 = scmp.ne.s32.totalorder %s181, %s183
      %p190 = scmp.eq.s32.totalorder %s35, 15
      %p191 = por %p189, %p190
      %p192 = scmp.ne.s32.totalorder %s183, %s184
      %p193 = scmp.eq.s32.totalorder %s35, 0
      %p194 = por %p192, %p193
      %p195 = scmp.ne.s32.totalorder %s183, %s184
      %p196 = scmp.eq.s32.totalorder %s36, 15
      %p197 = por %p195, %p196
      %p199 = scmp.ne.s32.totalorder %s184, %s198
      %p200 = scmp.eq.s32.totalorder %s36, 0
      %p201 = por %p199, %p200
      %s203 = sadd.s32 %s202, 1
      %p206 = scmp.eq.s32.totalorder %s30, 15
      %p207 = scmp.ne.s32.totalorder %s202, %s204
      %p208 = scmp.eq.s32.totalorder %s30, 0
      %p209 = por %p207, %p208
      %p210 = scmp.ne.s32.totalorder %s202, %s204
      %p211 = scmp.eq.s32.totalorder %s35, 15
      %p212 = por %p210, %p211
      %p213 = scmp.ne.s32.totalorder %s204, %s205
      %p214 = scmp.eq.s32.totalorder %s35, 0
      %p215 = por %p213, %p214
      %p216 = scmp.ne.s32.totalorder %s204, %s205
      %p217 = scmp.eq.s32.totalorder %s36, 15
      %p218 = por %p216, %p217
      %p220 = scmp.ne.s32.totalorder %s205, %s219
      %p221 = scmp.eq.s32.totalorder %s36, 0
      %p222 = por %p220, %p221
      %s224 = sadd.s32 %s223, 1
      %p227 = scmp.eq.s32.totalorder %s30, 15
      %p228 = scmp.ne.s32.totalorder %s223, %s225
      %p229 = scmp.eq.s32.totalorder %s30, 0
      %p230 = por %p228, %p229
      %p231 = scmp.ne.s32.totalorder %s223, %s225
      %p232 = scmp.eq.s32.totalorder %s35, 15
      %p233 = por %p231, %p232
      %p234 = scmp.ne.s32.totalorder %s225, %s226
      %p235 = scmp.eq.s32.totalorder %s35, 0
      %p236 = por %p234, %p235
      %p237 = scmp.ne.s32.totalorder %s225, %s226
      %p238 = scmp.eq.s32.totalorder %s36, 15
      %p239 = por %p237, %p238
      %p241 = scmp.ne.s32.totalorder %s226, %s240
      %p242 = scmp.eq.s32.totalorder %s36, 0
      %p243 = por %p241, %p242
      %s245 = sadd.s32 %s244, 1
      %p248 = scmp.eq.s32.totalorder %s30, 15
      %p249 = scmp.ne.s32.totalorder %s244, %s246
      %p250 = scmp.eq.s32.totalorder %s30, 0
      %p251 = por %p249, %p250
      %p252 = scmp.ne.s32.totalorder %s244, %s246
      %p253 = scmp.eq.s32.totalorder %s35, 15
      %p254 = por %p252, %p253
      %p255 = scmp.ne.s32.totalorder %s246, %s247
      %p256 = scmp.eq.s32.totalorder %s35, 0
      %p257 = por %p255, %p256
      %p258 = scmp.ne.s32.totalorder %s246, %s247
      %p259 = scmp.eq.s32.totalorder %s36, 15
      %p260 = por %p258, %p259
      %p262 = scmp.ne.s32.totalorder %s247, %s261
      %p263 = scmp.eq.s32.totalorder %s36, 0
      %p264 = por %p262, %p263
      %s266 = sadd.s32 %s265, 1
      %p269 = scmp.eq.s32.totalorder %s30, 15
      %p270 = scmp.ne.s32.totalorder %s265, %s267
      %p271 = scmp.eq.s32.totalorder %s30, 0
      %p272 = por %p270, %p271
      %p273 = scmp.ne.s32.totalorder %s265, %s267
      %p274 = scmp.eq.s32.totalorder %s35, 15
      %p275 = por %p273, %p274
      %p276 = scmp.ne.s32.totalorder %s267, %s268
      %p277 = scmp.eq.s32.totalorder %s35, 0
      %p278 = por %p276, %p277
      %p279 = scmp.ne.s32.totalorder %s267, %s268
      %p280 = scmp.eq.s32.totalorder %s36, 15
      %p281 = por %p279, %p280
      %p283 = scmp.ne.s32.totalorder %s268, %s282
      %p284 = scmp.eq.s32.totalorder %s36, 0
      %p285 = por %p283, %p284
      %s286 = ssub.s32 %s38, %s45
      %p287 = scmp.eq.s32.totalorder %s286, 0
      %s289 = sadd.s32 %s288, 1
      %s290 = scalar_select %p287, %s288, %s289
      %p293 = pneg %p287
      %p294 = scmp.eq.s32.totalorder %s30, 15
      %p295 = por %p293, %p294
      %p296 = scmp.ne.s32.totalorder %s288, %s291
      %p297 = scmp.eq.s32.totalorder %s30, 0
      %p298 = por %p296, %p297
      %p299 = scmp.ne.s32.totalorder %s288, %s291
      %p300 = scmp.eq.s32.totalorder %s35, 15
      %p301 = por %p299, %p300
      %p302 = scmp.ne.s32.totalorder %s291, %s292
      %p303 = scmp.eq.s32.totalorder %s35, 0
      %p304 = por %p302, %p303
      %p305 = scmp.ne.s32.totalorder %s291, %s292
      %p306 = scmp.eq.s32.totalorder %s36, 15
      %p307 = por %p305, %p306
      %p309 = scmp.ne.s32.totalorder %s292, %s308
      %p310 = scmp.eq.s32.totalorder %s36, 0
      %p311 = por %p309, %p310
      %s313 = sadd.s32 %s312, 1
      %p316 = scmp.eq.s32.totalorder %s30, 15
      %p317 = scmp.ne.s32.totalorder %s312, %s314
      %p318 = scmp.eq.s32.totalorder %s30, 0
      %p319 = por %p317, %p318
      %p320 = scmp.ne.s32.totalorder %s312, %s314
      %p321 = scmp.eq.s32.totalorder %s35, 15
      %p322 = por %p320, %p321
      %p323 = scmp.ne.s32.totalorder %s314, %s315
      %p324 = scmp.eq.s32.totalorder %s35, 0
      %p325 = por %p323, %p324
      %p326 = scmp.ne.s32.totalorder %s314, %s315
      %p327 = scmp.eq.s32.totalorder %s36, 15
      %p328 = por %p326, %p327
      %p330 = scmp.ne.s32.totalorder %s315, %s329
      %p331 = scmp.eq.s32.totalorder %s36, 0
      %p332 = por %p330, %p331
      %s334 = sadd.s32 %s333, 1
      %p337 = scmp.eq.s32.totalorder %s30, 15
      %p338 = scmp.ne.s32.totalorder %s333, %s335
      %p339 = scmp.eq.s32.totalorder %s30, 0
      %p340 = por %p338, %p339
      %p341 = scmp.ne.s32.totalorder %s333, %s335
      %p342 = scmp.eq.s32.totalorder %s35, 15
      %p343 = por %p341, %p342
      %p344 = scmp.ne.s32.totalorder %s335, %s336
      %p345 = scmp.eq.s32.totalorder %s35, 0
      %p346 = por %p344, %p345
      %p347 = scmp.ne.s32.totalorder %s335, %s336
      %p348 = scmp.eq.s32.totalorder %s36, 15
      %p349 = por %p347, %p348
      %p351 = scmp.ne.s32.totalorder %s336, %s350
      %p352 = scmp.eq.s32.totalorder %s36, 0
      %p353 = por %p351, %p352
      %s355 = sadd.s32 %s354, 1
      %p358 = scmp.eq.s32.totalorder %s30, 15
      %p359 = scmp.ne.s32.totalorder %s354, %s356
      %p360 = scmp.eq.s32.totalorder %s30, 0
      %p361 = por %p359, %p360
      %p362 = scmp.ne.s32.totalorder %s354, %s356
      %p363 = scmp.eq.s32.totalorder %s35, 15
      %p364 = por %p362, %p363
      %p365 = scmp.ne.s32.totalorder %s356, %s357
      %p366 = scmp.eq.s32.totalorder %s35, 0
      %p367 = por %p365, %p366
      %p368 = scmp.ne.s32.totalorder %s356, %s357
      %p369 = scmp.eq.s32.totalorder %s36, 15
      %p370 = por %p368, %p369
      %p372 = scmp.ne.s32.totalorder %s357, %s371
      %p373 = scmp.eq.s32.totalorder %s36, 0
      %p374 = por %p372, %p373
      %s376 = sadd.s32 %s375, 1
      %p379 = scmp.eq.s32.totalorder %s30, 15
      %p380 = scmp.ne.s32.totalorder %s375, %s377
      %p381 = scmp.eq.s32.totalorder %s30, 0
      %p382 = por %p380, %p381
      %p383 = scmp.ne.s32.totalorder %s375, %s377
      %p384 = scmp.eq.s32.totalorder %s35, 15
      %p385 = por %p383, %p384
      %p386 = scmp.ne.s32.totalorder %s377, %s378
      %p387 = scmp.eq.s32.totalorder %s35, 0
      %p388 = por %p386, %p387
      %p389 = scmp.ne.s32.totalorder %s377, %s378
      %p390 = scmp.eq.s32.totalorder %s36, 15
      %p391 = por %p389, %p390
      %p393 = scmp.ne.s32.totalorder %s378, %s392
      %p394 = scmp.eq.s32.totalorder %s36, 0
      %p395 = por %p393, %p394
      %s397 = sadd.s32 %s396, 1
      %p400 = scmp.eq.s32.totalorder %s30, 15
      %p401 = scmp.ne.s32.totalorder %s396, %s398
      %p402 = scmp.eq.s32.totalorder %s30, 0
      %p403 = por %p401, %p402
      %p404 = scmp.ne.s32.totalorder %s396, %s398
      %p405 = scmp.eq.s32.totalorder %s35, 15
      %p406 = por %p404, %p405
      %p407 = scmp.ne.s32.totalorder %s398, %s399
      %p408 = scmp.eq.s32.totalorder %s35, 0
      %p409 = por %p407, %p408
      %p410 = scmp.ne.s32.totalorder %s398, %s399
      %p411 = scmp.eq.s32.totalorder %s36, 15
      %p412 = por %p410, %p411
      %p414 = scmp.ne.s32.totalorder %s399, %s413
      %p415 = scmp.eq.s32.totalorder %s36, 0
      %p416 = por %p414, %p415
      %s418 = sadd.s32 %s417, 1
      %p421 = scmp.eq.s32.totalorder %s30, 15
      %p422 = scmp.ne.s32.totalorder %s417, %s419
      %p423 = scmp.eq.s32.totalorder %s30, 0
      %p424 = por %p422, %p423
      %p425 = scmp.ne.s32.totalorder %s417, %s419
      %p426 = scmp.eq.s32.totalorder %s35, 15
      %p427 = por %p425, %p426
      %p428 = scmp.ne.s32.totalorder %s419, %s420
      %p429 = scmp.eq.s32.totalorder %s35, 0
      %p430 = por %p428, %p429
      %p431 = scmp.ne.s32.totalorder %s419, %s420
      %p432 = scmp.eq.s32.totalorder %s36, 15
      %p433 = por %p431, %p432
      %p435 = scmp.ne.s32.totalorder %s420, %s434
      %p436 = scmp.eq.s32.totalorder %s36, 0
      %p437 = por %p435, %p436
      %s439 = sadd.s32 %s438, 1
      %p442 = scmp.eq.s32.totalorder %s30, 15
      %p443 = scmp.ne.s32.totalorder %s438, %s440
      %p444 = scmp.eq.s32.totalorder %s30, 0
      %p445 = por %p443, %p444
      %p446 = scmp.ne.s32.totalorder %s438, %s440
      %p447 = scmp.eq.s32.totalorder %s35, 15
      %p448 = por %p446, %p447
      %p449 = scmp.ne.s32.totalorder %s440, %s441
      %p450 = scmp.eq.s32.totalorder %s35, 0
      %p451 = por %p449, %p450
      %p452 = scmp.ne.s32.totalorder %s440, %s441
      %p453 = scmp.eq.s32.totalorder %s36, 15
      %p454 = por %p452, %p453
      %p456 = scmp.ne.s32.totalorder %s441, %s455
      %p457 = scmp.eq.s32.totalorder %s36, 0
      %p458 = por %p456, %p457
      %s460 = sadd.s32 %s459, 1
      %p463 = scmp.eq.s32.totalorder %s30, 15
      %p464 = scmp.ne.s32.totalorder %s459, %s461
      %p465 = scmp.eq.s32.totalorder %s30, 0
      %p466 = por %p464, %p465
      %p467 = scmp.ne.s32.totalorder %s459, %s461
      %p468 = scmp.eq.s32.totalorder %s35, 15
      %p469 = por %p467, %p468
      %p470 = scmp.ne.s32.totalorder %s461, %s462
      %p471 = scmp.eq.s32.totalorder %s35, 0
      %p472 = por %p470, %p471
      %p473 = scmp.ne.s32.totalorder %s461, %s462
      %p474 = scmp.eq.s32.totalorder %s36, 15
      %p475 = por %p473, %p474
      %p477 = scmp.ne.s32.totalorder %s462, %s476
      %p478 = scmp.eq.s32.totalorder %s36, 0
      %p479 = por %p477, %p478
      %p480 = scmp.le.s32.totalorder 1, %s30
      %p481 = scmp.lt.s32.totalorder %s30, 17
      %p482 = pnand %p480, %p481
      %p483 = pneg %p482
      // Predicated region
      $region9: #{dirvae_forward.2} parent=5 // pred_check
        _
      $region10: #{dirvae_forward.2} parent=5 // pred_check_branch
        %485 = sbr.rel (%p482) target = $region12
      $region11: #{dirvae_forward.2} parent=5 // pred_region
        %s486 = ssub.s32 %s30, 1
        // Predicated region
        $region13: #{dirvae_forward.2} parent=11 // pred_check
          %p487 = pneg %p89
        $region14: #{dirvae_forward.2} parent=11 // pred_check_branch
          %489 = sbr.rel (%p487) target = $region16
        $region15: #{dirvae_forward.2} parent=11 // pred_region
          _
        $region16: #{dirvae_forward.2} parent=11 // pred_fallthru
          _
        // Predicated region
        $region17: #{dirvae_forward.2} parent=11 // pred_check
          %p490 = pneg %p110
        $region18: #{dirvae_forward.2} parent=11 // pred_check_branch
          %492 = sbr.rel (%p490) target = $region20
        $region19: #{dirvae_forward.2} parent=11 // pred_region
          _
        $region20: #{dirvae_forward.2} parent=11 // pred_fallthru
          _
        // Predicated region
        $region21: #{dirvae_forward.2} parent=11 // pred_check
          %p493 = pneg %p131
        $region22: #{dirvae_forward.2} parent=11 // pred_check_branch
          %495 = sbr.rel (%p493) target = $region24
        $region23: #{dirvae_forward.2} parent=11 // pred_region
          _
        $region24: #{dirvae_forward.2} parent=11 // pred_fallthru
          _
        // Predicated region
        $region25: #{dirvae_forward.2} parent=11 // pred_check
          %p496 = pneg %p152
        $region26: #{dirvae_forward.2} parent=11 // pred_check_branch
          %498 = sbr.rel (%p496) target = $region28
        $region27: #{dirvae_forward.2} parent=11 // pred_region
          _
        $region28: #{dirvae_forward.2} parent=11 // pred_fallthru
          _
        // Predicated region
        $region29: #{dirvae_forward.2} parent=11 // pred_check
          %p499 = pneg %p173
        $region30: #{dirvae_forward.2} parent=11 // pred_check_branch
          %501 = sbr.rel (%p499) target = $region32
        $region31: #{dirvae_forward.2} parent=11 // pred_region
          _
        $region32: #{dirvae_forward.2} parent=11 // pred_fallthru
          _
        // Predicated region
        $region33: #{dirvae_forward.2} parent=11 // pred_check
          %p502 = pneg %p194
        $region34: #{dirvae_forward.2} parent=11 // pred_check_branch
          %504 = sbr.rel (%p502) target = $region36
        $region35: #{dirvae_forward.2} parent=11 // pred_region
          _
        $region36: #{dirvae_forward.2} parent=11 // pred_fallthru
          _
        // Predicated region
        $region37: #{dirvae_forward.2} parent=11 // pred_check
          %p505 = pneg %p215
        $region38: #{dirvae_forward.2} parent=11 // pred_check_branch
          %507 = sbr.rel (%p505) target = $region40
        $region39: #{dirvae_forward.2} parent=11 // pred_region
          _
        $region40: #{dirvae_forward.2} parent=11 // pred_fallthru
          _
        // Predicated region
        $region41: #{dirvae_forward.2} parent=11 // pred_check
          %p508 = pneg %p236
        $region42: #{dirvae_forward.2} parent=11 // pred_check_branch
          %510 = sbr.rel (%p508) target = $region44
        $region43: #{dirvae_forward.2} parent=11 // pred_region
          _
        $region44: #{dirvae_forward.2} parent=11 // pred_fallthru
          _
        // Predicated region
        $region45: #{dirvae_forward.2} parent=11 // pred_check
          %p511 = pneg %p257
        $region46: #{dirvae_forward.2} parent=11 // pred_check_branch
          %513 = sbr.rel (%p511) target = $region48
        $region47: #{dirvae_forward.2} parent=11 // pred_region
          _
        $region48: #{dirvae_forward.2} parent=11 // pred_fallthru
          _
        // Predicated region
        $region49: #{dirvae_forward.2} parent=11 // pred_check
          %p514 = pneg %p278
        $region50: #{dirvae_forward.2} parent=11 // pred_check_branch
          %516 = sbr.rel (%p514) target = $region52
        $region51: #{dirvae_forward.2} parent=11 // pred_region
          _
        $region52: #{dirvae_forward.2} parent=11 // pred_fallthru
          _
      $region12: #{dirvae_forward.2} parent=5 // pred_fallthru
        _
      %p517 = scmp.lt.s32.totalorder %s30, 16
      // Predicated region
      $region53: #{dirvae_forward.2} parent=5 // pred_check
        %p518 = pneg %p517
      $region54: #{dirvae_forward.2} parent=5 // pred_check_branch
        %520 = sbr.rel (%p518) target = $region56
      $region55: #{dirvae_forward.2} parent=5 // pred_region
        // Predicated region
        $region57: #{dirvae_forward.2} parent=55 // pred_check
          %p521 = pneg %p62
        $region58: #{dirvae_forward.2} parent=55 // pred_check_branch
          %523 = sbr.rel (%p521) target = $region60
        $region59: #{dirvae_forward.2} parent=55 // pred_region
          %s524 = smul.u32 32, %s38
          %p525 = scmp.lt.s32.totalorder %s524, 127
          %s526 = scalar_select %p525, %s524, 127
          %s527 = smul.addr %s526, 8
          %s528 = scalar_lea.vmem %s0, %s527
          %s529 = smul.u32 32, %s38
        $region60: #{dirvae_forward.2} parent=55 // pred_fallthru
          _
      $region56: #{dirvae_forward.2} parent=5 // pred_fallthru
        _
      %p530 = scmp.le.s32.totalorder 1, %s30
      %p531 = scmp.lt.s32.totalorder %s30, 17
      %p532 = pnand %p530, %p531
      %p533 = pneg %p532
      // Predicated region
      $region61: #{dirvae_forward.2} parent=5 // pred_check
        _
      $region62: #{dirvae_forward.2} parent=5 // pred_check_branch
        %535 = sbr.rel (%p532) target = $region64
      $region63: #{dirvae_forward.2} parent=5 // pred_region
        %s536 = ssub.s32 %s30, 1
        %s537 = smul.u32 32, %s40
        %p538 = scmp.lt.s32.totalorder %s537, 127
        %s539 = scalar_select %p538, %s537, 127
        %s540 = smul.addr %s539, 8
        %s541 = scalar_lea.vmem %s0, %s540
        %p542 = pneg %p68
        %p543 = pneg %p65
        %p544 = pneg %p89
        %p545 = pneg %p86
        %p546 = pneg %p110
        %p547 = pneg %p107
        %p548 = pneg %p131
        %p549 = pneg %p128
        %p550 = pneg %p152
        %p551 = pneg %p149
        %p552 = pneg %p173
        %p553 = pneg %p170
        %p554 = pneg %p194
        %p555 = pneg %p191
        %p556 = pneg %p215
        %p557 = pneg %p212
        %p558 = pneg %p236
        %p559 = pneg %p233
        %p560 = pneg %p257
        %p561 = pneg %p254
        %p562 = pneg %p278
        %p563 = pneg %p275
        %p564 = pneg %p304
        %p565 = pneg %p301
        %s566 = smul.u32 2, %s40
        %p567 = scmp.lt.s32.totalorder %s566, 7
        %s568 = scalar_select %p567, %s566, 7
        %s569 = smul.addr %s568, 4
        %s570 = scalar_lea.vmem %s11, %s569
        %p571 = pneg %p325
        %p572 = pneg %p322
        %p573 = pneg %p346
        %p574 = pneg %p343
        %p575 = pneg %p367
        %p576 = pneg %p364
        %p577 = pneg %p388
        %p578 = pneg %p385
        %p579 = pneg %p409
        %p580 = pneg %p406
        %p581 = pneg %p430
        %p582 = pneg %p427
        %p583 = pneg %p451
        %p584 = pneg %p448
        %p585 = pneg %p472
        %p586 = pneg %p469
        %s587 = smul.u32 32, %s40
        %p588 = scmp.lt.s32.totalorder %s587, 127
        %s589 = scalar_select %p588, %s587, 127
        %s590 = smul.addr %s589, 8
        %s591 = scalar_lea.vmem %s0, %s590
        %s592 = smul.u32 32, %s40
        %s593 = smul.u32 2, %s40
        %p594 = scmp.lt.s32.totalorder %s593, 7
        %s595 = scalar_select %p594, %s593, 7
        %s596 = smul.addr %s595, 4
        %s597 = scalar_lea.vmem %s11, %s596
        %s598 = smul.u32 2, %s40
        %p599 = scmp.eq.s32.totalorder %s39, 0
        %p600 = scmp.eq.s32.totalorder %s40, 0
        %p601 = pnand %p599, %p600
        %p602 = pneg %p601
        // Predicated region
        $region65: #{dirvae_forward.2} parent=63 // pred_check
          _
        $region66: #{dirvae_forward.2} parent=63 // pred_check_branch
          %604 = sbr.rel (%p601) target = $region68
        $region67: #{dirvae_forward.2} parent=63 // pred_region
          %vm605 = vcmask 7168
          %606 = vst.msk [vmem:[#allocation2] sm:$0xff] %vm605, 0.0
          %vm607 = vcmask 3072
          %608 = vst.msk [vmem:[#allocation2 + $0x8] sm:$0xf] %vm607, 0.0
          %609 = vst.msk [vmem:[#allocation4] sm:$0xff] %vm605, 0.0
          %610 = vst.msk [vmem:[#allocation4 + $0x8] sm:$0xf] %vm607, 0.0
          %611 = vst.msk [vmem:[#allocation6] sm:$0xff] %vm605, 0.0
          %612 = vst.msk [vmem:[#allocation7] sm:$0xff] %vm605, 0.0
          %613 = vst.msk [vmem:[#allocation9] sm:$0xf] %vm607, 0.0
          %614 = vst.msk [vmem:[#allocation10] sm:$0xf] %vm607, 0.0
          %615 = vst.msk [vmem:[%s18] sm:$0xf] %vm607, 0.0
          %616 = vst.msk [vmem:[%s19] sm:$0xf] %vm607, 0.0
        $region68: #{dirvae_forward.2} parent=63 // pred_fallthru
          _
        %v617 = vld [vmem:[%s591] sm:$0xff]
        %v618 = vld [vmem:[%s591 + $0x8] sm:$0xff]
        %v619 = vld [vmem:[%s591 + $0x10] sm:$0xff]
        %v620 = vld [vmem:[%s591 + $0x18] sm:$0xff]
        %v621 = vld [vmem:[%s591 + $0x20] sm:$0xff]
        %v622 = vld [vmem:[%s591 + $0x28] sm:$0xff]
        %v623 = vld [vmem:[%s591 + $0x30] sm:$0xff]
        %v624 = vld [vmem:[%s591 + $0x38] sm:$0xff]
        %v625 = vld [vmem:[%s591 + $0x40] sm:$0xff]
        %v626 = vld [vmem:[%s591 + $0x48] sm:$0xff]
        %v627 = vld [vmem:[%s591 + $0x50] sm:$0xff]
        %v628 = vld [vmem:[%s591 + $0x58] sm:$0xff]
        %v629 = vld [vmem:[%s591 + $0x60] sm:$0xff]
        %v630 = vld [vmem:[%s591 + $0x68] sm:$0xff]
        %v631 = vld [vmem:[%s591 + $0x70] sm:$0xff]
        %v632 = vld [vmem:[%s591 + $0x78] sm:$0xff]
        %v633 = vld [vmem:[%s591 + $0x80] sm:$0xff]
        %v634 = vld [vmem:[%s591 + $0x88] sm:$0xff]
        %v635 = vld [vmem:[%s591 + $0x90] sm:$0xff]
        %v636 = vld [vmem:[%s591 + $0x98] sm:$0xff]
        %v637 = vld [vmem:[%s591 + $0xa0] sm:$0xff]
        %v638 = vld [vmem:[%s591 + $0xa8] sm:$0xff]
        %v639 = vld [vmem:[%s591 + $0xb0] sm:$0xff]
        %v640 = vld [vmem:[%s591 + $0xb8] sm:$0xff]
        %v641 = vld [vmem:[%s591 + $0xc0] sm:$0xff]
        %v642 = vld [vmem:[%s591 + $0xc8] sm:$0xff]
        %v643 = vld [vmem:[%s591 + $0xd0] sm:$0xff]
        %v644 = vld [vmem:[%s591 + $0xd8] sm:$0xff]
        %v645 = vld [vmem:[%s591 + $0xe0] sm:$0xff]
        %v646 = vld [vmem:[%s591 + $0xe8] sm:$0xff]
        %v647 = vld [vmem:[%s591 + $0xf0] sm:$0xff]
        %v648 = vld [vmem:[%s591 + $0xf8] sm:$0xff]
        %v649 = vld [vmem:[%s1] sm:$0xff]
        %v650 = vld [vmem:[%s1 + $0x8] sm:$0xf]
        %vm651 = vcmask 261120
        %v653 = vsel %vm651, %v649, 0
        %v656 = vsel %vm651, %v650, 0
        %v659 = vsel %vm651, %v617, 0
        %v662 = vsel %vm651, %v618, 0
        %v665 = vsel %vm651, %v619, 0
        %v668 = vsel %vm651, %v620, 0
        %v671 = vsel %vm651, %v621, 0
        %v674 = vsel %vm651, %v622, 0
        %v677 = vsel %vm651, %v623, 0
        %v680 = vsel %vm651, %v624, 0
        %v683 = vsel %vm651, %v625, 0
        %v686 = vsel %vm651, %v626, 0
        %v689 = vsel %vm651, %v627, 0
        %v692 = vsel %vm651, %v628, 0
        %v695 = vsel %vm651, %v629, 0
        %v698 = vsel %vm651, %v630, 0
        %v701 = vsel %vm651, %v631, 0
        %v704 = vsel %vm651, %v632, 0
        %v707 = vsel %vm651, %v633, 0
        %v710 = vsel %vm651, %v634, 0
        %v713 = vsel %vm651, %v635, 0
        %v716 = vsel %vm651, %v636, 0
        %v719 = vsel %vm651, %v637, 0
        %v722 = vsel %vm651, %v638, 0
        %v725 = vsel %vm651, %v639, 0
        %v728 = vsel %vm651, %v640, 0
        %v731 = vsel %vm651, %v641, 0
        %v734 = vsel %vm651, %v642, 0
        %v737 = vsel %vm651, %v643, 0
        %v740 = vsel %vm651, %v644, 0
        %v743 = vsel %vm651, %v645, 0
        %v746 = vsel %vm651, %v646, 0
        %v749 = vsel %vm651, %v647, 0
        %v752 = vsel %vm651, %v648, 0
        %v754 = vand.u32 %v704, 4294901760
        %755 = vmatpush.xpose.msra.mxu0 %v754
        %v756 = vand.u32 %v701, 4294901760
        %757 = vmatpush.xpose.msra.mxu0 %v756
        %v758 = vand.u32 %v698, 4294901760
        %759 = vmatpush.xpose.msra.mxu0 %v758
        %v760 = vand.u32 %v695, 4294901760
        %761 = vmatpush.xpose.msra.mxu0 %v760
        %v762 = vand.u32 %v692, 4294901760
        %763 = vmatpush.xpose.msra.mxu0 %v762
        %v764 = vand.u32 %v689, 4294901760
        %765 = vmatpush.xpose.msra.mxu0 %v764
        %v766 = vand.u32 %v686, 4294901760
        %767 = vmatpush.xpose.msra.mxu0 %v766
        %v768 = vand.u32 %v683, 4294901760
        %769 = vmatpush.xpose.msra.mxu0 %v768
        %v770 = vand.u32 %v680, 4294901760
        %771 = vmatpush.xpose.msra.mxu0 %v770
        %v772 = vand.u32 %v677, 4294901760
        %773 = vmatpush.xpose.msra.mxu0 %v772
        %v774 = vand.u32 %v674, 4294901760
        %775 = vmatpush.xpose.msra.mxu0 %v774
        %v776 = vand.u32 %v671, 4294901760
        %777 = vmatpush.xpose.msra.mxu0 %v776
        %v778 = vand.u32 %v668, 4294901760
        %779 = vmatpush.xpose.msra.mxu0 %v778
        %v780 = vand.u32 %v665, 4294901760
        %781 = vmatpush.xpose.msra.mxu0 %v780
        %v782 = vand.u32 %v662, 4294901760
        %783 = vmatpush.xpose.msra.mxu0 %v782
        %v784 = vand.u32 %v659, 4294901760
        %785 = vmatpush.xpose.msra.mxu0 %v784
        %v786 = vand.u32 %v653, 4294901760
        %v787 = vsub.f32 %v653, %v786
        %v788 = vand.u32 %v787, 4294901760
        %v789 = vsub.f32 %v787, %v788
        %v790 = vand.u32 %v789, 4294901760
        %791 = vmatmul.f32.gmra.mxu0 %v790
        %v792 = vpop.f32.mrf.mxu0
        %v793 = vadd.f32 0.0, %v792
        %v794 = vand.u32 %v656, 4294901760
        %v795 = vsub.f32 %v656, %v794
        %v796 = vand.u32 %v795, 4294901760
        %v797 = vsub.f32 %v795, %v796
        %v798 = vand.u32 %v797, 4294901760
        %799 = vmatmul.f32.gmra.mxu0 %v798
        %v800 = vpop.f32.mrf.mxu0
        %v801 = vadd.f32 0.0, %v800
        %802 = vdwg.mxu0
        %v803 = vand.u32 %v704, 4294901760
        %v804 = vsub.f32 %v704, %v803
        %v805 = vand.u32 %v804, 4294901760
        %v806 = vsub.f32 %v804, %v805
        %v807 = vand.u32 %v806, 4294901760
        %808 = vmatpush.xpose.msra.mxu0 %v807
        %v809 = vand.u32 %v701, 4294901760
        %v810 = vsub.f32 %v701, %v809
        %v811 = vand.u32 %v810, 4294901760
        %v812 = vsub.f32 %v810, %v811
        %v813 = vand.u32 %v812, 4294901760
        %814 = vmatpush.xpose.msra.mxu0 %v813
        %v815 = vand.u32 %v698, 4294901760
        %v816 = vsub.f32 %v698, %v815
        %v817 = vand.u32 %v816, 4294901760
        %v818 = vsub.f32 %v816, %v817
        %v819 = vand.u32 %v818, 4294901760
        %820 = vmatpush.xpose.msra.mxu0 %v819
        %v821 = vand.u32 %v695, 4294901760
        %v822 = vsub.f32 %v695, %v821
        %v823 = vand.u32 %v822, 4294901760
        %v824 = vsub.f32 %v822, %v823
        %v825 = vand.u32 %v824, 4294901760
        %826 = vmatpush.xpose.msra.mxu0 %v825
        %v827 = vand.u32 %v692, 4294901760
        %v828 = vsub.f32 %v692, %v827
        %v829 = vand.u32 %v828, 4294901760
        %v830 = vsub.f32 %v828, %v829
        %v831 = vand.u32 %v830, 4294901760
        %832 = vmatpush.xpose.msra.mxu0 %v831
        %v833 = vand.u32 %v689, 4294901760
        %v834 = vsub.f32 %v689, %v833
        %v835 = vand.u32 %v834, 4294901760
        %v836 = vsub.f32 %v834, %v835
        %v837 = vand.u32 %v836, 4294901760
        %838 = vmatpush.xpose.msra.mxu0 %v837
        %v839 = vand.u32 %v686, 4294901760
        %v840 = vsub.f32 %v686, %v839
        %v841 = vand.u32 %v840, 4294901760
        %v842 = vsub.f32 %v840, %v841
        %v843 = vand.u32 %v842, 4294901760
        %844 = vmatpush.xpose.msra.mxu0 %v843
        %v845 = vand.u32 %v683, 4294901760
        %v846 = vsub.f32 %v683, %v845
        %v847 = vand.u32 %v846, 4294901760
        %v848 = vsub.f32 %v846, %v847
        %v849 = vand.u32 %v848, 4294901760
        %850 = vmatpush.xpose.msra.mxu0 %v849
        %v851 = vand.u32 %v680, 4294901760
        %v852 = vsub.f32 %v680, %v851
        %v853 = vand.u32 %v852, 4294901760
        %v854 = vsub.f32 %v852, %v853
        %v855 = vand.u32 %v854, 4294901760
        %856 = vmatpush.xpose.msra.mxu0 %v855
        %v857 = vand.u32 %v677, 4294901760
        %v858 = vsub.f32 %v677, %v857
        %v859 = vand.u32 %v858, 4294901760
        %v860 = vsub.f32 %v858, %v859
        %v861 = vand.u32 %v860, 4294901760
        %862 = vmatpush.xpose.msra.mxu0 %v861
        %v863 = vand.u32 %v674, 4294901760
        %v864 = vsub.f32 %v674, %v863
        %v865 = vand.u32 %v864, 4294901760
        %v866 = vsub.f32 %v864, %v865
        %v867 = vand.u32 %v866, 4294901760
        %868 = vmatpush.xpose.msra.mxu0 %v867
        %v869 = vand.u32 %v671, 4294901760
        %v870 = vsub.f32 %v671, %v869
        %v871 = vand.u32 %v870, 4294901760
        %v872 = vsub.f32 %v870, %v871
        %v873 = vand.u32 %v872, 4294901760
        %874 = vmatpush.xpose.msra.mxu0 %v873
        %v875 = vand.u32 %v668, 4294901760
        %v876 = vsub.f32 %v668, %v875
        %v877 = vand.u32 %v876, 4294901760
        %v878 = vsub.f32 %v876, %v877
        %v879 = vand.u32 %v878, 4294901760
        %880 = vmatpush.xpose.msra.mxu0 %v879
        %v881 = vand.u32 %v665, 4294901760
        %v882 = vsub.f32 %v665, %v881
        %v883 = vand.u32 %v882, 4294901760
        %v884 = vsub.f32 %v882, %v883
        %v885 = vand.u32 %v884, 4294901760
        %886 = vmatpush.xpose.msra.mxu0 %v885
        %v887 = vand.u32 %v662, 4294901760
        %v888 = vsub.f32 %v662, %v887
        %v889 = vand.u32 %v888, 4294901760
        %v890 = vsub.f32 %v888, %v889
        %v891 = vand.u32 %v890, 4294901760
        %892 = vmatpush.xpose.msra.mxu0 %v891
        %v893 = vand.u32 %v659, 4294901760
        %v894 = vsub.f32 %v659, %v893
        %v895 = vand.u32 %v894, 4294901760
        %v896 = vsub.f32 %v894, %v895
        %v897 = vand.u32 %v896, 4294901760
        %898 = vmatpush.xpose.msra.mxu0 %v897
        %v899 = vand.u32 %v653, 4294901760
        %900 = vmatmul.f32.gmra.mxu0 %v899
        %v901 = vpop.f32.mrf.mxu0
        %v902 = vadd.f32 %v793, %v901
        %v903 = vand.u32 %v656, 4294901760
        %904 = vmatmul.f32.gmra.mxu0 %v903
        %v905 = vpop.f32.mrf.mxu0
        %v906 = vadd.f32 %v801, %v905
        %907 = vdwg.mxu0
        %v908 = vand.u32 %v704, 4294901760
        %v909 = vsub.f32 %v704, %v908
        %910 = vmatpush.xpose.msra.mxu0 %v909
        %v911 = vand.u32 %v701, 4294901760
        %v912 = vsub.f32 %v701, %v911
        %913 = vmatpush.xpose.msra.mxu0 %v912
        %v914 = vand.u32 %v698, 4294901760
        %v915 = vsub.f32 %v698, %v914
        %916 = vmatpush.xpose.msra.mxu0 %v915
        %v917 = vand.u32 %v695, 4294901760
        %v918 = vsub.f32 %v695, %v917
        %919 = vmatpush.xpose.msra.mxu0 %v918
        %v920 = vand.u32 %v692, 4294901760
        %v921 = vsub.f32 %v692, %v920
        %922 = vmatpush.xpose.msra.mxu0 %v921
        %v923 = vand.u32 %v689, 4294901760
        %v924 = vsub.f32 %v689, %v923
        %925 = vmatpush.xpose.msra.mxu0 %v924
        %v926 = vand.u32 %v686, 4294901760
        %v927 = vsub.f32 %v686, %v926
        %928 = vmatpush.xpose.msra.mxu0 %v927
        %v929 = vand.u32 %v683, 4294901760
        %v930 = vsub.f32 %v683, %v929
        %931 = vmatpush.xpose.msra.mxu0 %v930
        %v932 = vand.u32 %v680, 4294901760
        %v933 = vsub.f32 %v680, %v932
        %934 = vmatpush.xpose.msra.mxu0 %v933
        %v935 = vand.u32 %v677, 4294901760
        %v936 = vsub.f32 %v677, %v935
        %937 = vmatpush.xpose.msra.mxu0 %v936
        %v938 = vand.u32 %v674, 4294901760
        %v939 = vsub.f32 %v674, %v938
        %940 = vmatpush.xpose.msra.mxu0 %v939
        %v941 = vand.u32 %v671, 4294901760
        %v942 = vsub.f32 %v671, %v941
        %943 = vmatpush.xpose.msra.mxu0 %v942
        %v944 = vand.u32 %v668, 4294901760
        %v945 = vsub.f32 %v668, %v944
        %946 = vmatpush.xpose.msra.mxu0 %v945
        %v947 = vand.u32 %v665, 4294901760
        %v948 = vsub.f32 %v665, %v947
        %949 = vmatpush.xpose.msra.mxu0 %v948
        %v950 = vand.u32 %v662, 4294901760
        %v951 = vsub.f32 %v662, %v950
        %952 = vmatpush.xpose.msra.mxu0 %v951
        %v953 = vand.u32 %v659, 4294901760
        %v954 = vsub.f32 %v659, %v953
        %955 = vmatpush.xpose.msra.mxu0 %v954
        %v956 = vand.u32 %v653, 4294901760
        %v957 = vsub.f32 %v653, %v956
        %958 = vmatmul.f32.gmra.mxu0 %v957
        %v959 = vpop.f32.mrf.mxu0
        %v960 = vadd.f32 %v902, %v959
        %v961 = vand.u32 %v656, 4294901760
        %v962 = vsub.f32 %v656, %v961
        %963 = vmatmul.f32.gmra.mxu0 %v962
        %v964 = vpop.f32.mrf.mxu0
        %v965 = vadd.f32 %v906, %v964
        %966 = vdwg.mxu0
        %v967 = vand.u32 %v704, 4294901760
        %968 = vmatpush.xpose.msra.mxu0 %v967
        %v969 = vand.u32 %v701, 4294901760
        %970 = vmatpush.xpose.msra.mxu0 %v969
        %v971 = vand.u32 %v698, 4294901760
        %972 = vmatpush.xpose.msra.mxu0 %v971
        %v973 = vand.u32 %v695, 4294901760
        %974 = vmatpush.xpose.msra.mxu0 %v973
        %v975 = vand.u32 %v692, 4294901760
        %976 = vmatpush.xpose.msra.mxu0 %v975
        %v977 = vand.u32 %v689, 4294901760
        %978 = vmatpush.xpose.msra.mxu0 %v977
        %v979 = vand.u32 %v686, 4294901760
        %980 = vmatpush.xpose.msra.mxu0 %v979
        %v981 = vand.u32 %v683, 4294901760
        %982 = vmatpush.xpose.msra.mxu0 %v981
        %v983 = vand.u32 %v680, 4294901760
        %984 = vmatpush.xpose.msra.mxu0 %v983
        %v985 = vand.u32 %v677, 4294901760
        %986 = vmatpush.xpose.msra.mxu0 %v985
        %v987 = vand.u32 %v674, 4294901760
        %988 = vmatpush.xpose.msra.mxu0 %v987
        %v989 = vand.u32 %v671, 4294901760
        %990 = vmatpush.xpose.msra.mxu0 %v989
        %v991 = vand.u32 %v668, 4294901760
        %992 = vmatpush.xpose.msra.mxu0 %v991
        %v993 = vand.u32 %v665, 4294901760
        %994 = vmatpush.xpose.msra.mxu0 %v993
        %v995 = vand.u32 %v662, 4294901760
        %996 = vmatpush.xpose.msra.mxu0 %v995
        %v997 = vand.u32 %v659, 4294901760
        %998 = vmatpush.xpose.msra.mxu0 %v997
        %v999 = vand.u32 %v653, 4294901760
        %v1000 = vsub.f32 %v653, %v999
        %v1001 = vand.u32 %v1000, 4294901760
        %1002 = vmatmul.f32.gmra.mxu0 %v1001
        %v1003 = vpop.f32.mrf.mxu0
        %v1004 = vadd.f32 %v960, %v1003
        %v1005 = vand.u32 %v656, 4294901760
        %v1006 = vsub.f32 %v656, %v1005
        %v1007 = vand.u32 %v1006, 4294901760
        %1008 = vmatmul.f32.gmra.mxu0 %v1007
        %v1009 = vpop.f32.mrf.mxu0
        %v1010 = vadd.f32 %v965, %v1009
        %1011 = vdwg.mxu0
        %v1012 = vand.u32 %v704, 4294901760
        %v1013 = vsub.f32 %v704, %v1012
        %v1014 = vand.u32 %v1013, 4294901760
        %1015 = vmatpush.xpose.msra.mxu0 %v1014
        %v1016 = vand.u32 %v701, 4294901760
        %v1017 = vsub.f32 %v701, %v1016
        %v1018 = vand.u32 %v1017, 4294901760
        %1019 = vmatpush.xpose.msra.mxu0 %v1018
        %v1020 = vand.u32 %v698, 4294901760
        %v1021 = vsub.f32 %v698, %v1020
        %v1022 = vand.u32 %v1021, 4294901760
        %1023 = vmatpush.xpose.msra.mxu0 %v1022
        %v1024 = vand.u32 %v695, 4294901760
        %v1025 = vsub.f32 %v695, %v1024
        %v1026 = vand.u32 %v1025, 4294901760
        %1027 = vmatpush.xpose.msra.mxu0 %v1026
        %v1028 = vand.u32 %v692, 4294901760
        %v1029 = vsub.f32 %v692, %v1028
        %v1030 = vand.u32 %v1029, 4294901760
        %1031 = vmatpush.xpose.msra.mxu0 %v1030
        %v1032 = vand.u32 %v689, 4294901760
        %v1033 = vsub.f32 %v689, %v1032
        %v1034 = vand.u32 %v1033, 4294901760
        %1035 = vmatpush.xpose.msra.mxu0 %v1034
        %v1036 = vand.u32 %v686, 4294901760
        %v1037 = vsub.f32 %v686, %v1036
        %v1038 = vand.u32 %v1037, 4294901760
        %1039 = vmatpush.xpose.msra.mxu0 %v1038
        %v1040 = vand.u32 %v683, 4294901760
        %v1041 = vsub.f32 %v683, %v1040
        %v1042 = vand.u32 %v1041, 4294901760
        %1043 = vmatpush.xpose.msra.mxu0 %v1042
        %v1044 = vand.u32 %v680, 4294901760
        %v1045 = vsub.f32 %v680, %v1044
        %v1046 = vand.u32 %v1045, 4294901760
        %1047 = vmatpush.xpose.msra.mxu0 %v1046
        %v1048 = vand.u32 %v677, 4294901760
        %v1049 = vsub.f32 %v677, %v1048
        %v1050 = vand.u32 %v1049, 4294901760
        %1051 = vmatpush.xpose.msra.mxu0 %v1050
        %v1052 = vand.u32 %v674, 4294901760
        %v1053 = vsub.f32 %v674, %v1052
        %v1054 = vand.u32 %v1053, 4294901760
        %1055 = vmatpush.xpose.msra.mxu0 %v1054
        %v1056 = vand.u32 %v671, 4294901760
        %v1057 = vsub.f32 %v671, %v1056
        %v1058 = vand.u32 %v1057, 4294901760
        %1059 = vmatpush.xpose.msra.mxu0 %v1058
        %v1060 = vand.u32 %v668, 4294901760
        %v1061 = vsub.f32 %v668, %v1060
        %v1062 = vand.u32 %v1061, 4294901760
        %1063 = vmatpush.xpose.msra.mxu0 %v1062
        %v1064 = vand.u32 %v665, 4294901760
        %v1065 = vsub.f32 %v665, %v1064
        %v1066 = vand.u32 %v1065, 4294901760
        %1067 = vmatpush.xpose.msra.mxu0 %v1066
        %v1068 = vand.u32 %v662, 4294901760
        %v1069 = vsub.f32 %v662, %v1068
        %v1070 = vand.u32 %v1069, 4294901760
        %1071 = vmatpush.xpose.msra.mxu0 %v1070
        %v1072 = vand.u32 %v659, 4294901760
        %v1073 = vsub.f32 %v659, %v1072
        %v1074 = vand.u32 %v1073, 4294901760
        %1075 = vmatpush.xpose.msra.mxu0 %v1074
        %v1076 = vand.u32 %v653, 4294901760
        %1077 = vmatmul.f32.gmra.mxu0 %v1076
        %v1078 = vpop.f32.mrf.mxu0
        %v1079 = vadd.f32 %v1004, %v1078
        %v1080 = vand.u32 %v656, 4294901760
        %1081 = vmatmul.f32.gmra.mxu0 %v1080
        %v1082 = vpop.f32.mrf.mxu0
        %v1083 = vadd.f32 %v1010, %v1082
        %1084 = vdwg.mxu0
        %v1085 = vand.u32 %v704, 4294901760
        %1086 = vmatpush.xpose.msra.mxu0 %v1085
        %v1087 = vand.u32 %v701, 4294901760
        %1088 = vmatpush.xpose.msra.mxu0 %v1087
        %v1089 = vand.u32 %v698, 4294901760
        %1090 = vmatpush.xpose.msra.mxu0 %v1089
        %v1091 = vand.u32 %v695, 4294901760
        %1092 = vmatpush.xpose.msra.mxu0 %v1091
        %v1093 = vand.u32 %v692, 4294901760
        %1094 = vmatpush.xpose.msra.mxu0 %v1093
        %v1095 = vand.u32 %v689, 4294901760
        %1096 = vmatpush.xpose.msra.mxu0 %v1095
        %v1097 = vand.u32 %v686, 4294901760
        %1098 = vmatpush.xpose.msra.mxu0 %v1097
        %v1099 = vand.u32 %v683, 4294901760
        %1100 = vmatpush.xpose.msra.mxu0 %v1099
        %v1101 = vand.u32 %v680, 4294901760
        %1102 = vmatpush.xpose.msra.mxu0 %v1101
        %v1103 = vand.u32 %v677, 4294901760
        %1104 = vmatpush.xpose.msra.mxu0 %v1103
        %v1105 = vand.u32 %v674, 4294901760
        %1106 = vmatpush.xpose.msra.mxu0 %v1105
        %v1107 = vand.u32 %v671, 4294901760
        %1108 = vmatpush.xpose.msra.mxu0 %v1107
        %v1109 = vand.u32 %v668, 4294901760
        %1110 = vmatpush.xpose.msra.mxu0 %v1109
        %v1111 = vand.u32 %v665, 4294901760
        %1112 = vmatpush.xpose.msra.mxu0 %v1111
        %v1113 = vand.u32 %v662, 4294901760
        %1114 = vmatpush.xpose.msra.mxu0 %v1113
        %v1115 = vand.u32 %v659, 4294901760
        %1116 = vmatpush.xpose.msra.mxu0 %v1115
        %v1117 = vand.u32 %v653, 4294901760
        %1118 = vmatmul.f32.gmra.mxu0 %v1117
        %v1119 = vpop.f32.mrf.mxu0
        %v1120 = vadd.f32 %v1079, %v1119
        %v1121 = vand.u32 %v656, 4294901760
        %1122 = vmatmul.f32.gmra.mxu0 %v1121
        %v1123 = vpop.f32.mrf.mxu0
        %v1124 = vadd.f32 %v1083, %v1123
        %1125 = vdwg.mxu0
        %v1126 = vand.u32 %v752, 4294901760
        %1127 = vmatpush.xpose.msra.mxu0 %v1126
        %v1128 = vand.u32 %v749, 4294901760
        %1129 = vmatpush.xpose.msra.mxu0 %v1128
        %v1130 = vand.u32 %v746, 4294901760
        %1131 = vmatpush.xpose.msra.mxu0 %v1130
        %v1132 = vand.u32 %v743, 4294901760
        %1133 = vmatpush.xpose.msra.mxu0 %v1132
        %v1134 = vand.u32 %v740, 4294901760
        %1135 = vmatpush.xpose.msra.mxu0 %v1134
        %v1136 = vand.u32 %v737, 4294901760
        %1137 = vmatpush.xpose.msra.mxu0 %v1136
        %v1138 = vand.u32 %v734, 4294901760
        %1139 = vmatpush.xpose.msra.mxu0 %v1138
        %v1140 = vand.u32 %v731, 4294901760
        %1141 = vmatpush.xpose.msra.mxu0 %v1140
        %v1142 = vand.u32 %v728, 4294901760
        %1143 = vmatpush.xpose.msra.mxu0 %v1142
        %v1144 = vand.u32 %v725, 4294901760
        %1145 = vmatpush.xpose.msra.mxu0 %v1144
        %v1146 = vand.u32 %v722, 4294901760
        %1147 = vmatpush.xpose.msra.mxu0 %v1146
        %v1148 = vand.u32 %v719, 4294901760
        %1149 = vmatpush.xpose.msra.mxu0 %v1148
        %v1150 = vand.u32 %v716, 4294901760
        %1151 = vmatpush.xpose.msra.mxu0 %v1150
        %v1152 = vand.u32 %v713, 4294901760
        %1153 = vmatpush.xpose.msra.mxu0 %v1152
        %v1154 = vand.u32 %v710, 4294901760
        %1155 = vmatpush.xpose.msra.mxu0 %v1154
        %v1156 = vand.u32 %v707, 4294901760
        %1157 = vmatpush.xpose.msra.mxu0 %v1156
        %v1158 = vand.u32 %v653, 4294901760
        %v1159 = vsub.f32 %v653, %v1158
        %v1160 = vand.u32 %v1159, 4294901760
        %v1161 = vsub.f32 %v1159, %v1160
        %v1162 = vand.u32 %v1161, 4294901760
        %1163 = vmatmul.f32.gmra.mxu0 %v1162
        %v1164 = vpop.f32.mrf.mxu0
        %v1165 = vadd.f32 0.0, %v1164
        %v1166 = vand.u32 %v656, 4294901760
        %v1167 = vsub.f32 %v656, %v1166
        %v1168 = vand.u32 %v1167, 4294901760
        %v1169 = vsub.f32 %v1167, %v1168
        %v1170 = vand.u32 %v1169, 4294901760
        %1171 = vmatmul.f32.gmra.mxu0 %v1170
        %v1172 = vpop.f32.mrf.mxu0
        %v1173 = vadd.f32 0.0, %v1172
        %1174 = vdwg.mxu0
        %v1175 = vand.u32 %v752, 4294901760
        %v1176 = vsub.f32 %v752, %v1175
        %v1177 = vand.u32 %v1176, 4294901760
        %v1178 = vsub.f32 %v1176, %v1177
        %v1179 = vand.u32 %v1178, 4294901760
        %1180 = vmatpush.xpose.msra.mxu0 %v1179
        %v1181 = vand.u32 %v749, 4294901760
        %v1182 = vsub.f32 %v749, %v1181
        %v1183 = vand.u32 %v1182, 4294901760
        %v1184 = vsub.f32 %v1182, %v1183
        %v1185 = vand.u32 %v1184, 4294901760
        %1186 = vmatpush.xpose.msra.mxu0 %v1185
        %v1187 = vand.u32 %v746, 4294901760
        %v1188 = vsub.f32 %v746, %v1187
        %v1189 = vand.u32 %v1188, 4294901760
        %v1190 = vsub.f32 %v1188, %v1189
        %v1191 = vand.u32 %v1190, 4294901760
        %1192 = vmatpush.xpose.msra.mxu0 %v1191
        %v1193 = vand.u32 %v743, 4294901760
        %v1194 = vsub.f32 %v743, %v1193
        %v1195 = vand.u32 %v1194, 4294901760
        %v1196 = vsub.f32 %v1194, %v1195
        %v1197 = vand.u32 %v1196, 4294901760
        %1198 = vmatpush.xpose.msra.mxu0 %v1197
        %v1199 = vand.u32 %v740, 4294901760
        %v1200 = vsub.f32 %v740, %v1199
        %v1201 = vand.u32 %v1200, 4294901760
        %v1202 = vsub.f32 %v1200, %v1201
        %v1203 = vand.u32 %v1202, 4294901760
        %1204 = vmatpush.xpose.msra.mxu0 %v1203
        %v1205 = vand.u32 %v737, 4294901760
        %v1206 = vsub.f32 %v737, %v1205
        %v1207 = vand.u32 %v1206, 4294901760
        %v1208 = vsub.f32 %v1206, %v1207
        %v1209 = vand.u32 %v1208, 4294901760
        %1210 = vmatpush.xpose.msra.mxu0 %v1209
        %v1211 = vand.u32 %v734, 4294901760
        %v1212 = vsub.f32 %v734, %v1211
        %v1213 = vand.u32 %v1212, 4294901760
        %v1214 = vsub.f32 %v1212, %v1213
        %v1215 = vand.u32 %v1214, 4294901760
        %1216 = vmatpush.xpose.msra.mxu0 %v1215
        %v1217 = vand.u32 %v731, 4294901760
        %v1218 = vsub.f32 %v731, %v1217
        %v1219 = vand.u32 %v1218, 4294901760
        %v1220 = vsub.f32 %v1218, %v1219
        %v1221 = vand.u32 %v1220, 4294901760
        %1222 = vmatpush.xpose.msra.mxu0 %v1221
        %v1223 = vand.u32 %v728, 4294901760
        %v1224 = vsub.f32 %v728, %v1223
        %v1225 = vand.u32 %v1224, 4294901760
        %v1226 = vsub.f32 %v1224, %v1225
        %v1227 = vand.u32 %v1226, 4294901760
        %1228 = vmatpush.xpose.msra.mxu0 %v1227
        %v1229 = vand.u32 %v725, 4294901760
        %v1230 = vsub.f32 %v725, %v1229
        %v1231 = vand.u32 %v1230, 4294901760
        %v1232 = vsub.f32 %v1230, %v1231
        %v1233 = vand.u32 %v1232, 4294901760
        %1234 = vmatpush.xpose.msra.mxu0 %v1233
        %v1235 = vand.u32 %v722, 4294901760
        %v1236 = vsub.f32 %v722, %v1235
        %v1237 = vand.u32 %v1236, 4294901760
        %v1238 = vsub.f32 %v1236, %v1237
        %v1239 = vand.u32 %v1238, 4294901760
        %1240 = vmatpush.xpose.msra.mxu0 %v1239
        %v1241 = vand.u32 %v719, 4294901760
        %v1242 = vsub.f32 %v719, %v1241
        %v1243 = vand.u32 %v1242, 4294901760
        %v1244 = vsub.f32 %v1242, %v1243
        %v1245 = vand.u32 %v1244, 4294901760
        %1246 = vmatpush.xpose.msra.mxu0 %v1245
        %v1247 = vand.u32 %v716, 4294901760
        %v1248 = vsub.f32 %v716, %v1247
        %v1249 = vand.u32 %v1248, 4294901760
        %v1250 = vsub.f32 %v1248, %v1249
        %v1251 = vand.u32 %v1250, 4294901760
        %1252 = vmatpush.xpose.msra.mxu0 %v1251
        %v1253 = vand.u32 %v713, 4294901760
        %v1254 = vsub.f32 %v713, %v1253
        %v1255 = vand.u32 %v1254, 4294901760
        %v1256 = vsub.f32 %v1254, %v1255
        %v1257 = vand.u32 %v1256, 4294901760
        %1258 = vmatpush.xpose.msra.mxu0 %v1257
        %v1259 = vand.u32 %v710, 4294901760
        %v1260 = vsub.f32 %v710, %v1259
        %v1261 = vand.u32 %v1260, 4294901760
        %v1262 = vsub.f32 %v1260, %v1261
        %v1263 = vand.u32 %v1262, 4294901760
        %1264 = vmatpush.xpose.msra.mxu0 %v1263
        %v1265 = vand.u32 %v707, 4294901760
        %v1266 = vsub.f32 %v707, %v1265
        %v1267 = vand.u32 %v1266, 4294901760
        %v1268 = vsub.f32 %v1266, %v1267
        %v1269 = vand.u32 %v1268, 4294901760
        %1270 = vmatpush.xpose.msra.mxu0 %v1269
        %v1271 = vand.u32 %v653, 4294901760
        %1272 = vmatmul.f32.gmra.mxu0 %v1271
        %v1273 = vpop.f32.mrf.mxu0
        %v1274 = vadd.f32 %v1165, %v1273
        %v1275 = vand.u32 %v656, 4294901760
        %1276 = vmatmul.f32.gmra.mxu0 %v1275
        %v1277 = vpop.f32.mrf.mxu0
        %v1278 = vadd.f32 %v1173, %v1277
        %1279 = vdwg.mxu0
        %v1280 = vand.u32 %v752, 4294901760
        %v1281 = vsub.f32 %v752, %v1280
        %1282 = vmatpush.xpose.msra.mxu0 %v1281
        %v1283 = vand.u32 %v749, 4294901760
        %v1284 = vsub.f32 %v749, %v1283
        %1285 = vmatpush.xpose.msra.mxu0 %v1284
        %v1286 = vand.u32 %v746, 4294901760
        %v1287 = vsub.f32 %v746, %v1286
        %1288 = vmatpush.xpose.msra.mxu0 %v1287
        %v1289 = vand.u32 %v743, 4294901760
        %v1290 = vsub.f32 %v743, %v1289
        %1291 = vmatpush.xpose.msra.mxu0 %v1290
        %v1292 = vand.u32 %v740, 4294901760
        %v1293 = vsub.f32 %v740, %v1292
        %1294 = vmatpush.xpose.msra.mxu0 %v1293
        %v1295 = vand.u32 %v737, 4294901760
        %v1296 = vsub.f32 %v737, %v1295
        %1297 = vmatpush.xpose.msra.mxu0 %v1296
        %v1298 = vand.u32 %v734, 4294901760
        %v1299 = vsub.f32 %v734, %v1298
        %1300 = vmatpush.xpose.msra.mxu0 %v1299
        %v1301 = vand.u32 %v731, 4294901760
        %v1302 = vsub.f32 %v731, %v1301
        %1303 = vmatpush.xpose.msra.mxu0 %v1302
        %v1304 = vand.u32 %v728, 4294901760
        %v1305 = vsub.f32 %v728, %v1304
        %1306 = vmatpush.xpose.msra.mxu0 %v1305
        %v1307 = vand.u32 %v725, 4294901760
        %v1308 = vsub.f32 %v725, %v1307
        %1309 = vmatpush.xpose.msra.mxu0 %v1308
        %v1310 = vand.u32 %v722, 4294901760
        %v1311 = vsub.f32 %v722, %v1310
        %1312 = vmatpush.xpose.msra.mxu0 %v1311
        %v1313 = vand.u32 %v719, 4294901760
        %v1314 = vsub.f32 %v719, %v1313
        %1315 = vmatpush.xpose.msra.mxu0 %v1314
        %v1316 = vand.u32 %v716, 4294901760
        %v1317 = vsub.f32 %v716, %v1316
        %1318 = vmatpush.xpose.msra.mxu0 %v1317
        %v1319 = vand.u32 %v713, 4294901760
        %v1320 = vsub.f32 %v713, %v1319
        %1321 = vmatpush.xpose.msra.mxu0 %v1320
        %v1322 = vand.u32 %v710, 4294901760
        %v1323 = vsub.f32 %v710, %v1322
        %1324 = vmatpush.xpose.msra.mxu0 %v1323
        %v1325 = vand.u32 %v707, 4294901760
        %v1326 = vsub.f32 %v707, %v1325
        %1327 = vmatpush.xpose.msra.mxu0 %v1326
        %v1328 = vand.u32 %v653, 4294901760
        %v1329 = vsub.f32 %v653, %v1328
        %1330 = vmatmul.f32.gmra.mxu0 %v1329
        %v1331 = vpop.f32.mrf.mxu0
        %v1332 = vadd.f32 %v1274, %v1331
        %v1333 = vand.u32 %v656, 4294901760
        %v1334 = vsub.f32 %v656, %v1333
        %1335 = vmatmul.f32.gmra.mxu0 %v1334
        %v1336 = vpop.f32.mrf.mxu0
        %v1337 = vadd.f32 %v1278, %v1336
        %1338 = vdwg.mxu0
        %v1339 = vand.u32 %v752, 4294901760
        %1340 = vmatpush.xpose.msra.mxu0 %v1339
        %v1341 = vand.u32 %v749, 4294901760
        %1342 = vmatpush.xpose.msra.mxu0 %v1341
        %v1343 = vand.u32 %v746, 4294901760
        %1344 = vmatpush.xpose.msra.mxu0 %v1343
        %v1345 = vand.u32 %v743, 4294901760
        %1346 = vmatpush.xpose.msra.mxu0 %v1345
        %v1347 = vand.u32 %v740, 4294901760
        %1348 = vmatpush.xpose.msra.mxu0 %v1347
        %v1349 = vand.u32 %v737, 4294901760
        %1350 = vmatpush.xpose.msra.mxu0 %v1349
        %v1351 = vand.u32 %v734, 4294901760
        %1352 = vmatpush.xpose.msra.mxu0 %v1351
        %v1353 = vand.u32 %v731, 4294901760
        %1354 = vmatpush.xpose.msra.mxu0 %v1353
        %v1355 = vand.u32 %v728, 4294901760
        %1356 = vmatpush.xpose.msra.mxu0 %v1355
        %v1357 = vand.u32 %v725, 4294901760
        %1358 = vmatpush.xpose.msra.mxu0 %v1357
        %v1359 = vand.u32 %v722, 4294901760
        %1360 = vmatpush.xpose.msra.mxu0 %v1359
        %v1361 = vand.u32 %v719, 4294901760
        %1362 = vmatpush.xpose.msra.mxu0 %v1361
        %v1363 = vand.u32 %v716, 4294901760
        %1364 = vmatpush.xpose.msra.mxu0 %v1363
        %v1365 = vand.u32 %v713, 4294901760
        %1366 = vmatpush.xpose.msra.mxu0 %v1365
        %v1367 = vand.u32 %v710, 4294901760
        %1368 = vmatpush.xpose.msra.mxu0 %v1367
        %v1369 = vand.u32 %v707, 4294901760
        %1370 = vmatpush.xpose.msra.mxu0 %v1369
        %v1371 = vand.u32 %v653, 4294901760
        %v1372 = vsub.f32 %v653, %v1371
        %v1373 = vand.u32 %v1372, 4294901760
        %1374 = vmatmul.f32.gmra.mxu0 %v1373
        %v1375 = vpop.f32.mrf.mxu0
        %v1376 = vadd.f32 %v1332, %v1375
        %v1377 = vand.u32 %v656, 4294901760
        %v1378 = vsub.f32 %v656, %v1377
        %v1379 = vand.u32 %v1378, 4294901760
        %1380 = vmatmul.f32.gmra.mxu0 %v1379
        %v1381 = vpop.f32.mrf.mxu0
        %v1382 = vadd.f32 %v1337, %v1381
        %1383 = vdwg.mxu0
        %v1384 = vand.u32 %v752, 4294901760
        %v1385 = vsub.f32 %v752, %v1384
        %v1386 = vand.u32 %v1385, 4294901760
        %1387 = vmatpush.xpose.msra.mxu0 %v1386
        %v1388 = vand.u32 %v749, 4294901760
        %v1389 = vsub.f32 %v749, %v1388
        %v1390 = vand.u32 %v1389, 4294901760
        %1391 = vmatpush.xpose.msra.mxu0 %v1390
        %v1392 = vand.u32 %v746, 4294901760
        %v1393 = vsub.f32 %v746, %v1392
        %v1394 = vand.u32 %v1393, 4294901760
        %1395 = vmatpush.xpose.msra.mxu0 %v1394
        %v1396 = vand.u32 %v743, 4294901760
        %v1397 = vsub.f32 %v743, %v1396
        %v1398 = vand.u32 %v1397, 4294901760
        %1399 = vmatpush.xpose.msra.mxu0 %v1398
        %v1400 = vand.u32 %v740, 4294901760
        %v1401 = vsub.f32 %v740, %v1400
        %v1402 = vand.u32 %v1401, 4294901760
        %1403 = vmatpush.xpose.msra.mxu0 %v1402
        %v1404 = vand.u32 %v737, 4294901760
        %v1405 = vsub.f32 %v737, %v1404
        %v1406 = vand.u32 %v1405, 4294901760
        %1407 = vmatpush.xpose.msra.mxu0 %v1406
        %v1408 = vand.u32 %v734, 4294901760
        %v1409 = vsub.f32 %v734, %v1408
        %v1410 = vand.u32 %v1409, 4294901760
        %1411 = vmatpush.xpose.msra.mxu0 %v1410
        %v1412 = vand.u32 %v731, 4294901760
        %v1413 = vsub.f32 %v731, %v1412
        %v1414 = vand.u32 %v1413, 4294901760
        %1415 = vmatpush.xpose.msra.mxu0 %v1414
        %v1416 = vand.u32 %v728, 4294901760
        %v1417 = vsub.f32 %v728, %v1416
        %v1418 = vand.u32 %v1417, 4294901760
        %1419 = vmatpush.xpose.msra.mxu0 %v1418
        %v1420 = vand.u32 %v725, 4294901760
        %v1421 = vsub.f32 %v725, %v1420
        %v1422 = vand.u32 %v1421, 4294901760
        %1423 = vmatpush.xpose.msra.mxu0 %v1422
        %v1424 = vand.u32 %v722, 4294901760
        %v1425 = vsub.f32 %v722, %v1424
        %v1426 = vand.u32 %v1425, 4294901760
        %1427 = vmatpush.xpose.msra.mxu0 %v1426
        %v1428 = vand.u32 %v719, 4294901760
        %v1429 = vsub.f32 %v719, %v1428
        %v1430 = vand.u32 %v1429, 4294901760
        %1431 = vmatpush.xpose.msra.mxu0 %v1430
        %v1432 = vand.u32 %v716, 4294901760
        %v1433 = vsub.f32 %v716, %v1432
        %v1434 = vand.u32 %v1433, 4294901760
        %1435 = vmatpush.xpose.msra.mxu0 %v1434
        %v1436 = vand.u32 %v713, 4294901760
        %v1437 = vsub.f32 %v713, %v1436
        %v1438 = vand.u32 %v1437, 4294901760
        %1439 = vmatpush.xpose.msra.mxu0 %v1438
        %v1440 = vand.u32 %v710, 4294901760
        %v1441 = vsub.f32 %v710, %v1440
        %v1442 = vand.u32 %v1441, 4294901760
        %1443 = vmatpush.xpose.msra.mxu0 %v1442
        %v1444 = vand.u32 %v707, 4294901760
        %v1445 = vsub.f32 %v707, %v1444
        %v1446 = vand.u32 %v1445, 4294901760
        %1447 = vmatpush.xpose.msra.mxu0 %v1446
        %v1448 = vand.u32 %v653, 4294901760
        %1449 = vmatmul.f32.gmra.mxu0 %v1448
        %v1450 = vpop.f32.mrf.mxu0
        %v1451 = vadd.f32 %v1376, %v1450
        %v1452 = vand.u32 %v656, 4294901760
        %1453 = vmatmul.f32.gmra.mxu0 %v1452
        %v1454 = vpop.f32.mrf.mxu0
        %v1455 = vadd.f32 %v1382, %v1454
        %1456 = vdwg.mxu0
        %v1457 = vand.u32 %v752, 4294901760
        %1458 = vmatpush.xpose.msra.mxu0 %v1457
        %v1459 = vand.u32 %v749, 4294901760
        %1460 = vmatpush.xpose.msra.mxu0 %v1459
        %v1461 = vand.u32 %v746, 4294901760
        %1462 = vmatpush.xpose.msra.mxu0 %v1461
        %v1463 = vand.u32 %v743, 4294901760
        %1464 = vmatpush.xpose.msra.mxu0 %v1463
        %v1465 = vand.u32 %v740, 4294901760
        %1466 = vmatpush.xpose.msra.mxu0 %v1465
        %v1467 = vand.u32 %v737, 4294901760
        %1468 = vmatpush.xpose.msra.mxu0 %v1467
        %v1469 = vand.u32 %v734, 4294901760
        %1470 = vmatpush.xpose.msra.mxu0 %v1469
        %v1471 = vand.u32 %v731, 4294901760
        %1472 = vmatpush.xpose.msra.mxu0 %v1471
        %v1473 = vand.u32 %v728, 4294901760
        %1474 = vmatpush.xpose.msra.mxu0 %v1473
        %v1475 = vand.u32 %v725, 4294901760
        %1476 = vmatpush.xpose.msra.mxu0 %v1475
        %v1477 = vand.u32 %v722, 4294901760
        %1478 = vmatpush.xpose.msra.mxu0 %v1477
        %v1479 = vand.u32 %v719, 4294901760
        %1480 = vmatpush.xpose.msra.mxu0 %v1479
        %v1481 = vand.u32 %v716, 4294901760
        %1482 = vmatpush.xpose.msra.mxu0 %v1481
        %v1483 = vand.u32 %v713, 4294901760
        %1484 = vmatpush.xpose.msra.mxu0 %v1483
        %v1485 = vand.u32 %v710, 4294901760
        %1486 = vmatpush.xpose.msra.mxu0 %v1485
        %v1487 = vand.u32 %v707, 4294901760
        %1488 = vmatpush.xpose.msra.mxu0 %v1487
        %v1489 = vand.u32 %v653, 4294901760
        %1490 = vmatmul.f32.gmra.mxu0 %v1489
        %v1491 = vpop.f32.mrf.mxu0
        %v1492 = vadd.f32 %v1451, %v1491
        %v1493 = vand.u32 %v656, 4294901760
        %1494 = vmatmul.f32.gmra.mxu0 %v1493
        %v1495 = vpop.f32.mrf.mxu0
        %v1496 = vadd.f32 %v1455, %v1495
        %1497 = vdwg.mxu0
        // Predicated region
        $region69: #{dirvae_forward.2} parent=63 // pred_check
          %p1498 = pneg %p599
        $region70: #{dirvae_forward.2} parent=63 // pred_check_branch
          %1500 = sbr.rel (%p1498) target = $region72
        $region71: #{dirvae_forward.2} parent=63 // pred_region
          %v1501 = vld [vmem:[#allocation2] sm:$0xff]
          %v1502 = vld [vmem:[#allocation2 + $0x8] sm:$0xf]
          %v1503 = vadd.f32 %v1120, %v1492
          %1504 = vadd.xlane.f32.xlu0 %v1503
          %v1505 = vpop.xlane.xlu0 %1504
          %vm1506 = vcmask 1043456
          %v1507 = vsel %vm1506, %v1124, 0.0
          %v1508 = vsel %vm1506, %v1496, 0.0
          %v1509 = vadd.f32 %v1507, %v1508
          %1510 = vadd.xlane.f32.xlu0 %v1509
          %v1511 = vpop.xlane.xlu0 %1510
          %v1512 = vadd.f32 %v1501, %v1505
          %v1513 = vadd.f32 %v1502, %v1511
          %vm1514 = vcmask 7168
          %1515 = vst.msk [vmem:[#allocation2] sm:$0xff] %vm1514, %v1512
          %vm1516 = vcmask 3072
          %1517 = vst.msk [vmem:[#allocation2 + $0x8] sm:$0xf] %vm1516, %v1513
          %v1518 = vld [vmem:[#allocation4] sm:$0xff]
          %v1519 = vld [vmem:[#allocation4 + $0x8] sm:$0xf]
          %v1520 = vmul.f32 %v1120, %v1120
          %v1521 = vmul.f32 %v1492, %v1492
          %v1522 = vmul.f32 %v1124, %v1124
          %v1523 = vmul.f32 %v1496, %v1496
          %v1524 = vadd.f32 %v1520, %v1521
          %1525 = vadd.xlane.f32.xlu0 %v1524
          %v1526 = vpop.xlane.xlu0 %1525
          %v1527 = vsel %vm1506, %v1522, 0.0
          %v1528 = vsel %vm1506, %v1523, 0.0
          %v1529 = vadd.f32 %v1527, %v1528
          %1530 = vadd.xlane.f32.xlu0 %v1529
          %v1531 = vpop.xlane.xlu0 %1530
          %v1532 = vadd.f32 %v1518, %v1526
          %v1533 = vadd.f32 %v1519, %v1531
          %1534 = vst.msk [vmem:[#allocation4] sm:$0xff] %vm1514, %v1532
          %1535 = vst.msk [vmem:[#allocation4 + $0x8] sm:$0xf] %vm1516, %v1533
        $region72: #{dirvae_forward.2} parent=63 // pred_fallthru
          _
        %p1536 = scmp.eq.s32.totalorder %s40, 3
        %p1537 = pnand %p599, %p1536
        %p1538 = pneg %p1537
        // Predicated region
        $region73: #{dirvae_forward.2} parent=63 // pred_check
          _
        $region74: #{dirvae_forward.2} parent=63 // pred_check_branch
          %1540 = sbr.rel (%p1537) target = $region76
        $region75: #{dirvae_forward.2} parent=63 // pred_region
          %v1541 = vld [vmem:[#allocation2] sm:$0xff]
          %v1542 = vld [vmem:[#allocation2 + $0x8] sm:$0xf]
          %v1543 = vmul.f32 %v1541, 0.0009765625
          %v1544 = vmul.f32 %v1542, 0.0009765625
          %v1545 = vld [vmem:[#allocation4] sm:$0xff]
          %v1546 = vld [vmem:[#allocation4 + $0x8] sm:$0xf]
          %v1547 = vmul.f32 %v1545, 0.0009765625
          %v1548 = vmul.f32 %v1546, 0.0009765625
          %v1549 = vmul.f32 %v1543, %v1543
          %v1550 = vmul.f32 %v1544, %v1544
          %v1551 = vsub.f32 %v1547, %v1549
          %v1552 = vsub.f32 %v1548, %v1550
          %vm1553 = vcmask 7168
          %1554 = vst.msk [vmem:[#allocation2] sm:$0xff] %vm1553, %v1543
          %vm1555 = vcmask 3072
          %1556 = vst.msk [vmem:[#allocation2 + $0x8] sm:$0xf] %vm1555, %v1544
          %v1557 = vadd.f32 %v1551, 1e-05
          %v1558 = vadd.f32 %v1552, 1e-05
          %v1559 = vrsqrt.pop %v1557
          %v1560 = vmul.f32 %v1559, %v1557
          %v1561 = vmul.f32 %v1560, %v1559
          %v1562 = vmul.f32 0.5, %v1561
          %v1563 = vsub.f32 1.5, %v1562
          %v1564 = vmul.f32 %v1559, %v1563
          %vm1565 = vweird.f32 %v1557
          %vm1566 = vweird.f32 %v1559
          %vm1567 = vmor %vm1565, %vm1566
          %v1568 = vsel %vm1567, %v1559, %v1564
          %v1569 = vrsqrt.pop %v1558
          %v1570 = vmul.f32 %v1569, %v1558
          %v1571 = vmul.f32 %v1570, %v1569
          %v1572 = vmul.f32 0.5, %v1571
          %v1573 = vsub.f32 1.5, %v1572
          %v1574 = vmul.f32 %v1569, %v1573
          %vm1575 = vweird.f32 %v1558
          %vm1576 = vweird.f32 %v1569
          %vm1577 = vmor %vm1575, %vm1576
          %v1578 = vsel %vm1577, %v1569, %v1574
          %1579 = vst.msk [vmem:[#allocation4] sm:$0xff] %vm1553, %v1568
          %1580 = vst.msk [vmem:[#allocation4 + $0x8] sm:$0xf] %vm1555, %v1578
        $region76: #{dirvae_forward.2} parent=63 // pred_fallthru
          _
        %v1581 = vld [vmem:[#allocation2] sm:$0xff]
        %v1582 = vld [vmem:[#allocation2 + $0x8] sm:$0xf]
        %1584 = vset.pattern.permute.xlu0 0
        %1585 = vperm.xlu0 %1584, %v1581
        %v1586 = vpop.permute.xlu0 %1585
        %1589 = vset.pattern.permute.xlu0 0
        %1590 = vperm.xlu0 %1589, %v1582
        %v1591 = vpop.permute.xlu0 %1590
        %v1593 = vsub.f32 %v1120, %v1586
        %v1594 = vsub.f32 %v1492, %v1586
        %v1595 = vsub.f32 %v1124, %v1591
        %v1596 = vsub.f32 %v1496, %v1591
        %v1597 = vld [vmem:[#allocation4] sm:$0xff]
        %v1598 = vld [vmem:[#allocation4 + $0x8] sm:$0xf]
        %1600 = vset.pattern.permute.xlu0 0
        %1601 = vperm.xlu0 %1600, %v1597
        %v1602 = vpop.permute.xlu0 %1601
        %1605 = vset.pattern.permute.xlu0 0
        %1606 = vperm.xlu0 %1605, %v1598
        %v1607 = vpop.permute.xlu0 %1606
        %v1609 = vmul.f32 %v1593, %v1602
        %v1610 = vmul.f32 %v1594, %v1602
        %v1611 = vmul.f32 %v1595, %v1607
        %v1612 = vmul.f32 %v1596, %v1607
        %v1613 = vld [vmem:[%s5] sm:$0xff]
        %v1614 = vld [vmem:[%s5 + $0x8] sm:$0xf]
        %1616 = vset.pattern.permute.xlu0 0
        %1617 = vperm.xlu0 %1616, %v1613
        %v1618 = vpop.permute.xlu0 %1617
        %1621 = vset.pattern.permute.xlu0 0
        %1622 = vperm.xlu0 %1621, %v1614
        %v1623 = vpop.permute.xlu0 %1622
        %v1625 = vmul.f32 %v1609, %v1618
        %v1626 = vmul.f32 %v1610, %v1618
        %v1627 = vmul.f32 %v1611, %v1623
        %v1628 = vmul.f32 %v1612, %v1623
        %v1629 = vld [vmem:[%s6] sm:$0xff]
        %v1630 = vld [vmem:[%s6 + $0x8] sm:$0xf]
        %1632 = vset.pattern.permute.xlu0 0
        %1633 = vperm.xlu0 %1632, %v1629
        %v1634 = vpop.permute.xlu0 %1633
        %1637 = vset.pattern.permute.xlu0 0
        %1638 = vperm.xlu0 %1637, %v1630
        %v1639 = vpop.permute.xlu0 %1638
        %v1641 = vadd.f32 %v1625, %v1634
        %v1642 = vadd.f32 %v1626, %v1634
        %v1643 = vadd.f32 %v1627, %v1639
        %v1644 = vadd.f32 %v1628, %v1639
        %vm1645 = vcmp.ge.f32.partialorder %v1641, 0.0
        %vm1646 = vcmp.ge.f32.partialorder %v1642, 0.0
        %vm1647 = vcmp.ge.f32.partialorder %v1643, 0.0
        %vm1648 = vcmp.ge.f32.partialorder %v1644, 0.0
        %v1649 = vmul.f32 %v1641, 0.01
        %v1650 = vmul.f32 %v1642, 0.01
        %v1651 = vmul.f32 %v1643, 0.01
        %v1652 = vmul.f32 %v1644, 0.01
        %v1653 = vsel %vm1645, %v1641, %v1649
        %v1654 = vsel %vm1646, %v1642, %v1650
        %v1655 = vsel %vm1647, %v1643, %v1651
        %v1656 = vsel %vm1648, %v1644, %v1652
        %v1657 = vld [vmem:[%s2] sm:$0xff]
        %vm1658 = vcmask 97280
        %v1660 = vsel %vm1658, %v1657, 0
        %vm1662 = vcmask 1043456
        %v1664 = vsel %vm1662, %v1655, 0
        %v1667 = vsel %vm1662, %v1656, 0
        %1669 = vmatpush.msra.mxu0 0.0
        %1670 = vmatpush.msra.mxu0 0.0
        %1671 = vmatpush.msra.mxu0 0.0
        %1672 = vmatpush.msra.mxu0 0.0
        %1673 = vmatpush.msra.mxu0 0.0
        %1674 = vmatpush.msra.mxu0 0.0
        %1675 = vmatpush.msra.mxu0 0.0
        %1676 = vmatpush.msra.mxu0 0.0
        %1677 = vmatpush.msra.mxu0 0.0
        %1678 = vmatpush.msra.mxu0 0.0
        %1679 = vmatpush.msra.mxu0 0.0
        %1680 = vmatpush.msra.mxu0 0.0
        %1681 = vmatpush.msra.mxu0 0.0
        %1682 = vmatpush.msra.mxu0 0.0
        %v1683 = vand.u32 %v1664, 4294901760
        %1684 = vmatpush.msra.mxu0 %v1683
        %v1685 = vand.u32 %v1653, 4294901760
        %1686 = vmatpush.msra.mxu0 %v1685
        %v1687 = vand.u32 %v1660, 4294901760
        %v1688 = vsub.f32 %v1660, %v1687
        %v1689 = vand.u32 %v1688, 4294901760
        %v1690 = vsub.f32 %v1688, %v1689
        %v1691 = vand.u32 %v1690, 4294901760
        %1692 = vmatmul.f32.gmra.mxu0 %v1691
        %v1693 = vpop.f32.mrf.mxu0
        %v1694 = vadd.f32 0.0, %v1693
        %1695 = vdwg.mxu0
        %1696 = vmatpush.msra.mxu0 0.0
        %1697 = vmatpush.msra.mxu0 0.0
        %1698 = vmatpush.msra.mxu0 0.0
        %1699 = vmatpush.msra.mxu0 0.0
        %1700 = vmatpush.msra.mxu0 0.0
        %1701 = vmatpush.msra.mxu0 0.0
        %1702 = vmatpush.msra.mxu0 0.0
        %1703 = vmatpush.msra.mxu0 0.0
        %1704 = vmatpush.msra.mxu0 0.0
        %1705 = vmatpush.msra.mxu0 0.0
        %1706 = vmatpush.msra.mxu0 0.0
        %1707 = vmatpush.msra.mxu0 0.0
        %1708 = vmatpush.msra.mxu0 0.0
        %1709 = vmatpush.msra.mxu0 0.0
        %v1710 = vand.u32 %v1664, 4294901760
        %v1711 = vsub.f32 %v1664, %v1710
        %v1712 = vand.u32 %v1711, 4294901760
        %v1713 = vsub.f32 %v1711, %v1712
        %v1714 = vand.u32 %v1713, 4294901760
        %1715 = vmatpush.msra.mxu0 %v1714
        %v1716 = vand.u32 %v1653, 4294901760
        %v1717 = vsub.f32 %v1653, %v1716
        %v1718 = vand.u32 %v1717, 4294901760
        %v1719 = vsub.f32 %v1717, %v1718
        %v1720 = vand.u32 %v1719, 4294901760
        %1721 = vmatpush.msra.mxu0 %v1720
        %v1722 = vand.u32 %v1660, 4294901760
        %1723 = vmatmul.f32.gmra.mxu0 %v1722
        %v1724 = vpop.f32.mrf.mxu0
        %v1725 = vadd.f32 %v1694, %v1724
        %1726 = vdwg.mxu0
        %1727 = vmatpush.msra.mxu0 0.0
        %1728 = vmatpush.msra.mxu0 0.0
        %1729 = vmatpush.msra.mxu0 0.0
        %1730 = vmatpush.msra.mxu0 0.0
        %1731 = vmatpush.msra.mxu0 0.0
        %1732 = vmatpush.msra.mxu0 0.0
        %1733 = vmatpush.msra.mxu0 0.0
        %1734 = vmatpush.msra.mxu0 0.0
        %1735 = vmatpush.msra.mxu0 0.0
        %1736 = vmatpush.msra.mxu0 0.0
        %1737 = vmatpush.msra.mxu0 0.0
        %1738 = vmatpush.msra.mxu0 0.0
        %1739 = vmatpush.msra.mxu0 0.0
        %1740 = vmatpush.msra.mxu0 0.0
        %v1741 = vand.u32 %v1664, 4294901760
        %v1742 = vsub.f32 %v1664, %v1741
        %1743 = vmatpush.msra.mxu0 %v1742
        %v1744 = vand.u32 %v1653, 4294901760
        %v1745 = vsub.f32 %v1653, %v1744
        %1746 = vmatpush.msra.mxu0 %v1745
        %v1747 = vand.u32 %v1660, 4294901760
        %v1748 = vsub.f32 %v1660, %v1747
        %1749 = vmatmul.f32.gmra.mxu0 %v1748
        %v1750 = vpop.f32.mrf.mxu0
        %v1751 = vadd.f32 %v1725, %v1750
        %1752 = vdwg.mxu0
        %1753 = vmatpush.msra.mxu0 0.0
        %1754 = vmatpush.msra.mxu0 0.0
        %1755 = vmatpush.msra.mxu0 0.0
        %1756 = vmatpush.msra.mxu0 0.0
        %1757 = vmatpush.msra.mxu0 0.0
        %1758 = vmatpush.msra.mxu0 0.0
        %1759 = vmatpush.msra.mxu0 0.0
        %1760 = vmatpush.msra.mxu0 0.0
        %1761 = vmatpush.msra.mxu0 0.0
        %1762 = vmatpush.msra.mxu0 0.0
        %1763 = vmatpush.msra.mxu0 0.0
        %1764 = vmatpush.msra.mxu0 0.0
        %1765 = vmatpush.msra.mxu0 0.0
        %1766 = vmatpush.msra.mxu0 0.0
        %v1767 = vand.u32 %v1664, 4294901760
        %1768 = vmatpush.msra.mxu0 %v1767
        %v1769 = vand.u32 %v1653, 4294901760
        %1770 = vmatpush.msra.mxu0 %v1769
        %v1771 = vand.u32 %v1660, 4294901760
        %v1772 = vsub.f32 %v1660, %v1771
        %v1773 = vand.u32 %v1772, 4294901760
        %1774 = vmatmul.f32.gmra.mxu0 %v1773
        %v1775 = vpop.f32.mrf.mxu0
        %v1776 = vadd.f32 %v1751, %v1775
        %1777 = vdwg.mxu0
        %1778 = vmatpush.msra.mxu0 0.0
        %1779 = vmatpush.msra.mxu0 0.0
        %1780 = vmatpush.msra.mxu0 0.0
        %1781 = vmatpush.msra.mxu0 0.0
        %1782 = vmatpush.msra.mxu0 0.0
        %1783 = vmatpush.msra.mxu0 0.0
        %1784 = vmatpush.msra.mxu0 0.0
        %1785 = vmatpush.msra.mxu0 0.0
        %1786 = vmatpush.msra.mxu0 0.0
        %1787 = vmatpush.msra.mxu0 0.0
        %1788 = vmatpush.msra.mxu0 0.0
        %1789 = vmatpush.msra.mxu0 0.0
        %1790 = vmatpush.msra.mxu0 0.0
        %1791 = vmatpush.msra.mxu0 0.0
        %v1792 = vand.u32 %v1664, 4294901760
        %v1793 = vsub.f32 %v1664, %v1792
        %v1794 = vand.u32 %v1793, 4294901760
        %1795 = vmatpush.msra.mxu0 %v1794
        %v1796 = vand.u32 %v1653, 4294901760
        %v1797 = vsub.f32 %v1653, %v1796
        %v1798 = vand.u32 %v1797, 4294901760
        %1799 = vmatpush.msra.mxu0 %v1798
        %v1800 = vand.u32 %v1660, 4294901760
        %1801 = vmatmul.f32.gmra.mxu0 %v1800
        %v1802 = vpop.f32.mrf.mxu0
        %v1803 = vadd.f32 %v1776, %v1802
        %1804 = vdwg.mxu0
        %1805 = vmatpush.msra.mxu0 0.0
        %1806 = vmatpush.msra.mxu0 0.0
        %1807 = vmatpush.msra.mxu0 0.0
        %1808 = vmatpush.msra.mxu0 0.0
        %1809 = vmatpush.msra.mxu0 0.0
        %1810 = vmatpush.msra.mxu0 0.0
        %1811 = vmatpush.msra.mxu0 0.0
        %1812 = vmatpush.msra.mxu0 0.0
        %1813 = vmatpush.msra.mxu0 0.0
        %1814 = vmatpush.msra.mxu0 0.0
        %1815 = vmatpush.msra.mxu0 0.0
        %1816 = vmatpush.msra.mxu0 0.0
        %1817 = vmatpush.msra.mxu0 0.0
        %1818 = vmatpush.msra.mxu0 0.0
        %v1819 = vand.u32 %v1664, 4294901760
        %1820 = vmatpush.msra.mxu0 %v1819
        %v1821 = vand.u32 %v1653, 4294901760
        %1822 = vmatpush.msra.mxu0 %v1821
        %v1823 = vand.u32 %v1660, 4294901760
        %1824 = vmatmul.f32.gmra.mxu0 %v1823
        %v1825 = vpop.f32.mrf.mxu0
        %v1826 = vadd.f32 %v1803, %v1825
        %1827 = vdwg.mxu0
        %1828 = vmatpush.msra.mxu0 0.0
        %1829 = vmatpush.msra.mxu0 0.0
        %1830 = vmatpush.msra.mxu0 0.0
        %1831 = vmatpush.msra.mxu0 0.0
        %1832 = vmatpush.msra.mxu0 0.0
        %1833 = vmatpush.msra.mxu0 0.0
        %1834 = vmatpush.msra.mxu0 0.0
        %1835 = vmatpush.msra.mxu0 0.0
        %1836 = vmatpush.msra.mxu0 0.0
        %1837 = vmatpush.msra.mxu0 0.0
        %1838 = vmatpush.msra.mxu0 0.0
        %1839 = vmatpush.msra.mxu0 0.0
        %1840 = vmatpush.msra.mxu0 0.0
        %1841 = vmatpush.msra.mxu0 0.0
        %v1842 = vand.u32 %v1667, 4294901760
        %1843 = vmatpush.msra.mxu0 %v1842
        %v1844 = vand.u32 %v1654, 4294901760
        %1845 = vmatpush.msra.mxu0 %v1844
        %v1846 = vand.u32 %v1660, 4294901760
        %v1847 = vsub.f32 %v1660, %v1846
        %v1848 = vand.u32 %v1847, 4294901760
        %v1849 = vsub.f32 %v1847, %v1848
        %v1850 = vand.u32 %v1849, 4294901760
        %1851 = vmatmul.f32.gmra.mxu0 %v1850
        %v1852 = vpop.f32.mrf.mxu0
        %v1853 = vadd.f32 0.0, %v1852
        %1854 = vdwg.mxu0
        %1855 = vmatpush.msra.mxu0 0.0
        %1856 = vmatpush.msra.mxu0 0.0
        %1857 = vmatpush.msra.mxu0 0.0
        %1858 = vmatpush.msra.mxu0 0.0
        %1859 = vmatpush.msra.mxu0 0.0
        %1860 = vmatpush.msra.mxu0 0.0
        %1861 = vmatpush.msra.mxu0 0.0
        %1862 = vmatpush.msra.mxu0 0.0
        %1863 = vmatpush.msra.mxu0 0.0
        %1864 = vmatpush.msra.mxu0 0.0
        %1865 = vmatpush.msra.mxu0 0.0
        %1866 = vmatpush.msra.mxu0 0.0
        %1867 = vmatpush.msra.mxu0 0.0
        %1868 = vmatpush.msra.mxu0 0.0
        %v1869 = vand.u32 %v1667, 4294901760
        %v1870 = vsub.f32 %v1667, %v1869
        %v1871 = vand.u32 %v1870, 4294901760
        %v1872 = vsub.f32 %v1870, %v1871
        %v1873 = vand.u32 %v1872, 4294901760
        %1874 = vmatpush.msra.mxu0 %v1873
        %v1875 = vand.u32 %v1654, 4294901760
        %v1876 = vsub.f32 %v1654, %v1875
        %v1877 = vand.u32 %v1876, 4294901760
        %v1878 = vsub.f32 %v1876, %v1877
        %v1879 = vand.u32 %v1878, 4294901760
        %1880 = vmatpush.msra.mxu0 %v1879
        %v1881 = vand.u32 %v1660, 4294901760
        %1882 = vmatmul.f32.gmra.mxu0 %v1881
        %v1883 = vpop.f32.mrf.mxu0
        %v1884 = vadd.f32 %v1853, %v1883
        %1885 = vdwg.mxu0
        %1886 = vmatpush.msra.mxu0 0.0
        %1887 = vmatpush.msra.mxu0 0.0
        %1888 = vmatpush.msra.mxu0 0.0
        %1889 = vmatpush.msra.mxu0 0.0
        %1890 = vmatpush.msra.mxu0 0.0
        %1891 = vmatpush.msra.mxu0 0.0
        %1892 = vmatpush.msra.mxu0 0.0
        %1893 = vmatpush.msra.mxu0 0.0
        %1894 = vmatpush.msra.mxu0 0.0
        %1895 = vmatpush.msra.mxu0 0.0
        %1896 = vmatpush.msra.mxu0 0.0
        %1897 = vmatpush.msra.mxu0 0.0
        %1898 = vmatpush.msra.mxu0 0.0
        %1899 = vmatpush.msra.mxu0 0.0
        %v1900 = vand.u32 %v1667, 4294901760
        %v1901 = vsub.f32 %v1667, %v1900
        %1902 = vmatpush.msra.mxu0 %v1901
        %v1903 = vand.u32 %v1654, 4294901760
        %v1904 = vsub.f32 %v1654, %v1903
        %1905 = vmatpush.msra.mxu0 %v1904
        %v1906 = vand.u32 %v1660, 4294901760
        %v1907 = vsub.f32 %v1660, %v1906
        %1908 = vmatmul.f32.gmra.mxu0 %v1907
        %v1909 = vpop.f32.mrf.mxu0
        %v1910 = vadd.f32 %v1884, %v1909
        %1911 = vdwg.mxu0
        %1912 = vmatpush.msra.mxu0 0.0
        %1913 = vmatpush.msra.mxu0 0.0
        %1914 = vmatpush.msra.mxu0 0.0
        %1915 = vmatpush.msra.mxu0 0.0
        %1916 = vmatpush.msra.mxu0 0.0
        %1917 = vmatpush.msra.mxu0 0.0
        %1918 = vmatpush.msra.mxu0 0.0
        %1919 = vmatpush.msra.mxu0 0.0
        %1920 = vmatpush.msra.mxu0 0.0
        %1921 = vmatpush.msra.mxu0 0.0
        %1922 = vmatpush.msra.mxu0 0.0
        %1923 = vmatpush.msra.mxu0 0.0
        %1924 = vmatpush.msra.mxu0 0.0
        %1925 = vmatpush.msra.mxu0 0.0
        %v1926 = vand.u32 %v1667, 4294901760
        %1927 = vmatpush.msra.mxu0 %v1926
        %v1928 = vand.u32 %v1654, 4294901760
        %1929 = vmatpush.msra.mxu0 %v1928
        %v1930 = vand.u32 %v1660, 4294901760
        %v1931 = vsub.f32 %v1660, %v1930
        %v1932 = vand.u32 %v1931, 4294901760
        %1933 = vmatmul.f32.gmra.mxu0 %v1932
        %v1934 = vpop.f32.mrf.mxu0
        %v1935 = vadd.f32 %v1910, %v1934
        %1936 = vdwg.mxu0
        %1937 = vmatpush.msra.mxu0 0.0
        %1938 = vmatpush.msra.mxu0 0.0
        %1939 = vmatpush.msra.mxu0 0.0
        %1940 = vmatpush.msra.mxu0 0.0
        %1941 = vmatpush.msra.mxu0 0.0
        %1942 = vmatpush.msra.mxu0 0.0
        %1943 = vmatpush.msra.mxu0 0.0
        %1944 = vmatpush.msra.mxu0 0.0
        %1945 = vmatpush.msra.mxu0 0.0
        %1946 = vmatpush.msra.mxu0 0.0
        %1947 = vmatpush.msra.mxu0 0.0
        %1948 = vmatpush.msra.mxu0 0.0
        %1949 = vmatpush.msra.mxu0 0.0
        %1950 = vmatpush.msra.mxu0 0.0
        %v1951 = vand.u32 %v1667, 4294901760
        %v1952 = vsub.f32 %v1667, %v1951
        %v1953 = vand.u32 %v1952, 4294901760
        %1954 = vmatpush.msra.mxu0 %v1953
        %v1955 = vand.u32 %v1654, 4294901760
        %v1956 = vsub.f32 %v1654, %v1955
        %v1957 = vand.u32 %v1956, 4294901760
        %1958 = vmatpush.msra.mxu0 %v1957
        %v1959 = vand.u32 %v1660, 4294901760
        %1960 = vmatmul.f32.gmra.mxu0 %v1959
        %v1961 = vpop.f32.mrf.mxu0
        %v1962 = vadd.f32 %v1935, %v1961
        %1963 = vdwg.mxu0
        %1964 = vmatpush.msra.mxu0 0.0
        %1965 = vmatpush.msra.mxu0 0.0
        %1966 = vmatpush.msra.mxu0 0.0
        %1967 = vmatpush.msra.mxu0 0.0
        %1968 = vmatpush.msra.mxu0 0.0
        %1969 = vmatpush.msra.mxu0 0.0
        %1970 = vmatpush.msra.mxu0 0.0
        %1971 = vmatpush.msra.mxu0 0.0
        %1972 = vmatpush.msra.mxu0 0.0
        %1973 = vmatpush.msra.mxu0 0.0
        %1974 = vmatpush.msra.mxu0 0.0
        %1975 = vmatpush.msra.mxu0 0.0
        %1976 = vmatpush.msra.mxu0 0.0
        %1977 = vmatpush.msra.mxu0 0.0
        %v1978 = vand.u32 %v1667, 4294901760
        %1979 = vmatpush.msra.mxu0 %v1978
        %v1980 = vand.u32 %v1654, 4294901760
        %1981 = vmatpush.msra.mxu0 %v1980
        %v1982 = vand.u32 %v1660, 4294901760
        %1983 = vmatmul.f32.gmra.mxu0 %v1982
        %v1984 = vpop.f32.mrf.mxu0
        %v1985 = vadd.f32 %v1962, %v1984
        %1986 = vdwg.mxu0
        %p1987 = scmp.eq.s32.totalorder %s39, 1
        // Predicated region
        $region77: #{dirvae_forward.2} parent=63 // pred_check
          %p1988 = pneg %p1987
        $region78: #{dirvae_forward.2} parent=63 // pred_check_branch
          %1990 = sbr.rel (%p1988) target = $region80
        $region79: #{dirvae_forward.2} parent=63 // pred_region
          %v1991 = vld [vmem:[#allocation6] sm:$0xff]
          %v1992 = vadd.f32 %v1826, %v1985
          %1993 = vadd.xlane.f32.xlu0 %v1992
          %v1994 = vpop.xlane.xlu0 %1993
          %v1995 = vadd.f32 %v1991, %v1994
          %vm1996 = vcmask 7168
          %1997 = vst.msk [vmem:[#allocation6] sm:$0xff] %vm1996, %v1995
          %v1998 = vld [vmem:[#allocation7] sm:$0xff]
          %v1999 = vmul.f32 %v1826, %v1826
          %v2000 = vmul.f32 %v1985, %v1985
          %v2001 = vadd.f32 %v1999, %v2000
          %2002 = vadd.xlane.f32.xlu0 %v2001
          %v2003 = vpop.xlane.xlu0 %2002
          %v2004 = vadd.f32 %v1998, %v2003
          %2005 = vst.msk [vmem:[#allocation7] sm:$0xff] %vm1996, %v2004
        $region80: #{dirvae_forward.2} parent=63 // pred_fallthru
          _
        %p2006 = pnand %p1987, %p1536
        %p2007 = pneg %p2006
        // Predicated region
        $region81: #{dirvae_forward.2} parent=63 // pred_check
          _
        $region82: #{dirvae_forward.2} parent=63 // pred_check_branch
          %2009 = sbr.rel (%p2006) target = $region84
        $region83: #{dirvae_forward.2} parent=63 // pred_region
          %v2010 = vld [vmem:[#allocation6] sm:$0xff]
          %v2011 = vmul.f32 %v2010, 0.0009765625
          %v2012 = vld [vmem:[#allocation7] sm:$0xff]
          %v2013 = vmul.f32 %v2012, 0.0009765625
          %v2014 = vmul.f32 %v2011, %v2011
          %v2015 = vsub.f32 %v2013, %v2014
          %vm2016 = vcmask 7168
          %2017 = vst.msk [vmem:[#allocation6] sm:$0xff] %vm2016, %v2011
          %v2018 = vadd.f32 %v2015, 1e-05
          %v2019 = vrsqrt.pop %v2018
          %v2020 = vmul.f32 %v2019, %v2018
          %v2021 = vmul.f32 %v2020, %v2019
          %v2022 = vmul.f32 0.5, %v2021
          %v2023 = vsub.f32 1.5, %v2022
          %v2024 = vmul.f32 %v2019, %v2023
          %vm2025 = vweird.f32 %v2018
          %vm2026 = vweird.f32 %v2019
          %vm2027 = vmor %vm2025, %vm2026
          %v2028 = vsel %vm2027, %v2019, %v2024
          %2029 = vst.msk [vmem:[#allocation7] sm:$0xff] %vm2016, %v2028
        $region84: #{dirvae_forward.2} parent=63 // pred_fallthru
          _
        %v2030 = vld [vmem:[#allocation6] sm:$0xff]
        %2032 = vset.pattern.permute.xlu0 0
        %2033 = vperm.xlu0 %2032, %v2030
        %v2034 = vpop.permute.xlu0 %2033
        %v2036 = vsub.f32 %v1826, %v2034
        %v2037 = vsub.f32 %v1985, %v2034
        %v2038 = vld [vmem:[#allocation7] sm:$0xff]
        %2040 = vset.pattern.permute.xlu0 0
        %2041 = vperm.xlu0 %2040, %v2038
        %v2042 = vpop.permute.xlu0 %2041
        %v2044 = vmul.f32 %v2036, %v2042
        %v2045 = vmul.f32 %v2037, %v2042
        %v2046 = vld [vmem:[%s7] sm:$0xff]
        %2048 = vset.pattern.permute.xlu0 0
        %2049 = vperm.xlu0 %2048, %v2046
        %v2050 = vpop.permute.xlu0 %2049
        %v2052 = vmul.f32 %v2044, %v2050
        %v2053 = vmul.f32 %v2045, %v2050
        %v2054 = vld [vmem:[%s8] sm:$0xff]
        %2056 = vset.pattern.permute.xlu0 0
        %2057 = vperm.xlu0 %2056, %v2054
        %v2058 = vpop.permute.xlu0 %2057
        %v2060 = vadd.f32 %v2052, %v2058
        %v2061 = vadd.f32 %v2053, %v2058
        %vm2062 = vcmp.ge.f32.partialorder %v2060, 0.0
        %vm2063 = vcmp.ge.f32.partialorder %v2061, 0.0
        %v2064 = vmul.f32 %v2060, 0.01
        %v2065 = vmul.f32 %v2061, 0.01
        %v2066 = vsel %vm2062, %v2060, %v2064
        %v2067 = vsel %vm2063, %v2061, %v2065
        %v2068 = vld [vmem:[%s3] sm:$0xf]
        %vm2069 = vcmask 64512
        %v2071 = vsel %vm2069, %v2068, 0
        %2073 = vmatpush.msra.mxu0 0.0
        %2074 = vmatpush.msra.mxu0 0.0
        %2075 = vmatpush.msra.mxu0 0.0
        %2076 = vmatpush.msra.mxu0 0.0
        %2077 = vmatpush.msra.mxu0 0.0
        %2078 = vmatpush.msra.mxu0 0.0
        %2079 = vmatpush.msra.mxu0 0.0
        %2080 = vmatpush.msra.mxu0 0.0
        %2081 = vmatpush.msra.mxu0 0.0
        %2082 = vmatpush.msra.mxu0 0.0
        %2083 = vmatpush.msra.mxu0 0.0
        %2084 = vmatpush.msra.mxu0 0.0
        %2085 = vmatpush.msra.mxu0 0.0
        %2086 = vmatpush.msra.mxu0 0.0
        %2087 = vmatpush.msra.mxu0 0.0
        %v2088 = vand.u32 %v2066, 4294901760
        %2089 = vmatpush.msra.mxu0 %v2088
        %v2090 = vand.u32 %v2071, 4294901760
        %v2091 = vsub.f32 %v2071, %v2090
        %v2092 = vand.u32 %v2091, 4294901760
        %v2093 = vsub.f32 %v2091, %v2092
        %v2094 = vand.u32 %v2093, 4294901760
        %2095 = vmatmul.f32.gmra.mxu0 %v2094
        %v2096 = vpop.f32.mrf.mxu0
        %v2097 = vadd.f32 0.0, %v2096
        %2098 = vdwg.mxu0
        %2099 = vmatpush.msra.mxu0 0.0
        %2100 = vmatpush.msra.mxu0 0.0
        %2101 = vmatpush.msra.mxu0 0.0
        %2102 = vmatpush.msra.mxu0 0.0
        %2103 = vmatpush.msra.mxu0 0.0
        %2104 = vmatpush.msra.mxu0 0.0
        %2105 = vmatpush.msra.mxu0 0.0
        %2106 = vmatpush.msra.mxu0 0.0
        %2107 = vmatpush.msra.mxu0 0.0
        %2108 = vmatpush.msra.mxu0 0.0
        %2109 = vmatpush.msra.mxu0 0.0
        %2110 = vmatpush.msra.mxu0 0.0
        %2111 = vmatpush.msra.mxu0 0.0
        %2112 = vmatpush.msra.mxu0 0.0
        %2113 = vmatpush.msra.mxu0 0.0
        %v2114 = vand.u32 %v2066, 4294901760
        %v2115 = vsub.f32 %v2066, %v2114
        %v2116 = vand.u32 %v2115, 4294901760
        %v2117 = vsub.f32 %v2115, %v2116
        %v2118 = vand.u32 %v2117, 4294901760
        %2119 = vmatpush.msra.mxu0 %v2118
        %v2120 = vand.u32 %v2071, 4294901760
        %2121 = vmatmul.f32.gmra.mxu0 %v2120
        %v2122 = vpop.f32.mrf.mxu0
        %v2123 = vadd.f32 %v2097, %v2122
        %2124 = vdwg.mxu0
        %2125 = vmatpush.msra.mxu0 0.0
        %2126 = vmatpush.msra.mxu0 0.0
        %2127 = vmatpush.msra.mxu0 0.0
        %2128 = vmatpush.msra.mxu0 0.0
        %2129 = vmatpush.msra.mxu0 0.0
        %2130 = vmatpush.msra.mxu0 0.0
        %2131 = vmatpush.msra.mxu0 0.0
        %2132 = vmatpush.msra.mxu0 0.0
        %2133 = vmatpush.msra.mxu0 0.0
        %2134 = vmatpush.msra.mxu0 0.0
        %2135 = vmatpush.msra.mxu0 0.0
        %2136 = vmatpush.msra.mxu0 0.0
        %2137 = vmatpush.msra.mxu0 0.0
        %2138 = vmatpush.msra.mxu0 0.0
        %2139 = vmatpush.msra.mxu0 0.0
        %v2140 = vand.u32 %v2066, 4294901760
        %v2141 = vsub.f32 %v2066, %v2140
        %2142 = vmatpush.msra.mxu0 %v2141
        %v2143 = vand.u32 %v2071, 4294901760
        %v2144 = vsub.f32 %v2071, %v2143
        %2145 = vmatmul.f32.gmra.mxu0 %v2144
        %v2146 = vpop.f32.mrf.mxu0
        %v2147 = vadd.f32 %v2123, %v2146
        %2148 = vdwg.mxu0
        %2149 = vmatpush.msra.mxu0 0.0
        %2150 = vmatpush.msra.mxu0 0.0
        %2151 = vmatpush.msra.mxu0 0.0
        %2152 = vmatpush.msra.mxu0 0.0
        %2153 = vmatpush.msra.mxu0 0.0
        %2154 = vmatpush.msra.mxu0 0.0
        %2155 = vmatpush.msra.mxu0 0.0
        %2156 = vmatpush.msra.mxu0 0.0
        %2157 = vmatpush.msra.mxu0 0.0
        %2158 = vmatpush.msra.mxu0 0.0
        %2159 = vmatpush.msra.mxu0 0.0
        %2160 = vmatpush.msra.mxu0 0.0
        %2161 = vmatpush.msra.mxu0 0.0
        %2162 = vmatpush.msra.mxu0 0.0
        %2163 = vmatpush.msra.mxu0 0.0
        %v2164 = vand.u32 %v2066, 4294901760
        %2165 = vmatpush.msra.mxu0 %v2164
        %v2166 = vand.u32 %v2071, 4294901760
        %v2167 = vsub.f32 %v2071, %v2166
        %v2168 = vand.u32 %v2167, 4294901760
        %2169 = vmatmul.f32.gmra.mxu0 %v2168
        %v2170 = vpop.f32.mrf.mxu0
        %v2171 = vadd.f32 %v2147, %v2170
        %2172 = vdwg.mxu0
        %2173 = vmatpush.msra.mxu0 0.0
        %2174 = vmatpush.msra.mxu0 0.0
        %2175 = vmatpush.msra.mxu0 0.0
        %2176 = vmatpush.msra.mxu0 0.0
        %2177 = vmatpush.msra.mxu0 0.0
        %2178 = vmatpush.msra.mxu0 0.0
        %2179 = vmatpush.msra.mxu0 0.0
        %2180 = vmatpush.msra.mxu0 0.0
        %2181 = vmatpush.msra.mxu0 0.0
        %2182 = vmatpush.msra.mxu0 0.0
        %2183 = vmatpush.msra.mxu0 0.0
        %2184 = vmatpush.msra.mxu0 0.0
        %2185 = vmatpush.msra.mxu0 0.0
        %2186 = vmatpush.msra.mxu0 0.0
        %2187 = vmatpush.msra.mxu0 0.0
        %v2188 = vand.u32 %v2066, 4294901760
        %v2189 = vsub.f32 %v2066, %v2188
        %v2190 = vand.u32 %v2189, 4294901760
        %2191 = vmatpush.msra.mxu0 %v2190
        %v2192 = vand.u32 %v2071, 4294901760
        %2193 = vmatmul.f32.gmra.mxu0 %v2192
        %v2194 = vpop.f32.mrf.mxu0
        %v2195 = vadd.f32 %v2171, %v2194
        %2196 = vdwg.mxu0
        %2197 = vmatpush.msra.mxu0 0.0
        %2198 = vmatpush.msra.mxu0 0.0
        %2199 = vmatpush.msra.mxu0 0.0
        %2200 = vmatpush.msra.mxu0 0.0
        %2201 = vmatpush.msra.mxu0 0.0
        %2202 = vmatpush.msra.mxu0 0.0
        %2203 = vmatpush.msra.mxu0 0.0
        %2204 = vmatpush.msra.mxu0 0.0
        %2205 = vmatpush.msra.mxu0 0.0
        %2206 = vmatpush.msra.mxu0 0.0
        %2207 = vmatpush.msra.mxu0 0.0
        %2208 = vmatpush.msra.mxu0 0.0
        %2209 = vmatpush.msra.mxu0 0.0
        %2210 = vmatpush.msra.mxu0 0.0
        %2211 = vmatpush.msra.mxu0 0.0
        %v2212 = vand.u32 %v2066, 4294901760
        %2213 = vmatpush.msra.mxu0 %v2212
        %v2214 = vand.u32 %v2071, 4294901760
        %2215 = vmatmul.f32.gmra.mxu0 %v2214
        %v2216 = vpop.f32.mrf.mxu0
        %v2217 = vadd.f32 %v2195, %v2216
        %2218 = vdwg.mxu0
        %2219 = vmatpush.msra.mxu0 0.0
        %2220 = vmatpush.msra.mxu0 0.0
        %2221 = vmatpush.msra.mxu0 0.0
        %2222 = vmatpush.msra.mxu0 0.0
        %2223 = vmatpush.msra.mxu0 0.0
        %2224 = vmatpush.msra.mxu0 0.0
        %2225 = vmatpush.msra.mxu0 0.0
        %2226 = vmatpush.msra.mxu0 0.0
        %2227 = vmatpush.msra.mxu0 0.0
        %2228 = vmatpush.msra.mxu0 0.0
        %2229 = vmatpush.msra.mxu0 0.0
        %2230 = vmatpush.msra.mxu0 0.0
        %2231 = vmatpush.msra.mxu0 0.0
        %2232 = vmatpush.msra.mxu0 0.0
        %2233 = vmatpush.msra.mxu0 0.0
        %v2234 = vand.u32 %v2067, 4294901760
        %2235 = vmatpush.msra.mxu0 %v2234
        %v2236 = vand.u32 %v2071, 4294901760
        %v2237 = vsub.f32 %v2071, %v2236
        %v2238 = vand.u32 %v2237, 4294901760
        %v2239 = vsub.f32 %v2237, %v2238
        %v2240 = vand.u32 %v2239, 4294901760
        %2241 = vmatmul.f32.gmra.mxu0 %v2240
        %v2242 = vpop.f32.mrf.mxu0
        %v2243 = vadd.f32 0.0, %v2242
        %2244 = vdwg.mxu0
        %2245 = vmatpush.msra.mxu0 0.0
        %2246 = vmatpush.msra.mxu0 0.0
        %2247 = vmatpush.msra.mxu0 0.0
        %2248 = vmatpush.msra.mxu0 0.0
        %2249 = vmatpush.msra.mxu0 0.0
        %2250 = vmatpush.msra.mxu0 0.0
        %2251 = vmatpush.msra.mxu0 0.0
        %2252 = vmatpush.msra.mxu0 0.0
        %2253 = vmatpush.msra.mxu0 0.0
        %2254 = vmatpush.msra.mxu0 0.0
        %2255 = vmatpush.msra.mxu0 0.0
        %2256 = vmatpush.msra.mxu0 0.0
        %2257 = vmatpush.msra.mxu0 0.0
        %2258 = vmatpush.msra.mxu0 0.0
        %2259 = vmatpush.msra.mxu0 0.0
        %v2260 = vand.u32 %v2067, 4294901760
        %v2261 = vsub.f32 %v2067, %v2260
        %v2262 = vand.u32 %v2261, 4294901760
        %v2263 = vsub.f32 %v2261, %v2262
        %v2264 = vand.u32 %v2263, 4294901760
        %2265 = vmatpush.msra.mxu0 %v2264
        %v2266 = vand.u32 %v2071, 4294901760
        %2267 = vmatmul.f32.gmra.mxu0 %v2266
        %v2268 = vpop.f32.mrf.mxu0
        %v2269 = vadd.f32 %v2243, %v2268
        %2270 = vdwg.mxu0
        %2271 = vmatpush.msra.mxu0 0.0
        %2272 = vmatpush.msra.mxu0 0.0
        %2273 = vmatpush.msra.mxu0 0.0
        %2274 = vmatpush.msra.mxu0 0.0
        %2275 = vmatpush.msra.mxu0 0.0
        %2276 = vmatpush.msra.mxu0 0.0
        %2277 = vmatpush.msra.mxu0 0.0
        %2278 = vmatpush.msra.mxu0 0.0
        %2279 = vmatpush.msra.mxu0 0.0
        %2280 = vmatpush.msra.mxu0 0.0
        %2281 = vmatpush.msra.mxu0 0.0
        %2282 = vmatpush.msra.mxu0 0.0
        %2283 = vmatpush.msra.mxu0 0.0
        %2284 = vmatpush.msra.mxu0 0.0
        %2285 = vmatpush.msra.mxu0 0.0
        %v2286 = vand.u32 %v2067, 4294901760
        %v2287 = vsub.f32 %v2067, %v2286
        %2288 = vmatpush.msra.mxu0 %v2287
        %v2289 = vand.u32 %v2071, 4294901760
        %v2290 = vsub.f32 %v2071, %v2289
        %2291 = vmatmul.f32.gmra.mxu0 %v2290
        %v2292 = vpop.f32.mrf.mxu0
        %v2293 = vadd.f32 %v2269, %v2292
        %2294 = vdwg.mxu0
        %2295 = vmatpush.msra.mxu0 0.0
        %2296 = vmatpush.msra.mxu0 0.0
        %2297 = vmatpush.msra.mxu0 0.0
        %2298 = vmatpush.msra.mxu0 0.0
        %2299 = vmatpush.msra.mxu0 0.0
        %2300 = vmatpush.msra.mxu0 0.0
        %2301 = vmatpush.msra.mxu0 0.0
        %2302 = vmatpush.msra.mxu0 0.0
        %2303 = vmatpush.msra.mxu0 0.0
        %2304 = vmatpush.msra.mxu0 0.0
        %2305 = vmatpush.msra.mxu0 0.0
        %2306 = vmatpush.msra.mxu0 0.0
        %2307 = vmatpush.msra.mxu0 0.0
        %2308 = vmatpush.msra.mxu0 0.0
        %2309 = vmatpush.msra.mxu0 0.0
        %v2310 = vand.u32 %v2067, 4294901760
        %2311 = vmatpush.msra.mxu0 %v2310
        %v2312 = vand.u32 %v2071, 4294901760
        %v2313 = vsub.f32 %v2071, %v2312
        %v2314 = vand.u32 %v2313, 4294901760
        %2315 = vmatmul.f32.gmra.mxu0 %v2314
        %v2316 = vpop.f32.mrf.mxu0
        %v2317 = vadd.f32 %v2293, %v2316
        %2318 = vdwg.mxu0
        %2319 = vmatpush.msra.mxu0 0.0
        %2320 = vmatpush.msra.mxu0 0.0
        %2321 = vmatpush.msra.mxu0 0.0
        %2322 = vmatpush.msra.mxu0 0.0
        %2323 = vmatpush.msra.mxu0 0.0
        %2324 = vmatpush.msra.mxu0 0.0
        %2325 = vmatpush.msra.mxu0 0.0
        %2326 = vmatpush.msra.mxu0 0.0
        %2327 = vmatpush.msra.mxu0 0.0
        %2328 = vmatpush.msra.mxu0 0.0
        %2329 = vmatpush.msra.mxu0 0.0
        %2330 = vmatpush.msra.mxu0 0.0
        %2331 = vmatpush.msra.mxu0 0.0
        %2332 = vmatpush.msra.mxu0 0.0
        %2333 = vmatpush.msra.mxu0 0.0
        %v2334 = vand.u32 %v2067, 4294901760
        %v2335 = vsub.f32 %v2067, %v2334
        %v2336 = vand.u32 %v2335, 4294901760
        %2337 = vmatpush.msra.mxu0 %v2336
        %v2338 = vand.u32 %v2071, 4294901760
        %2339 = vmatmul.f32.gmra.mxu0 %v2338
        %v2340 = vpop.f32.mrf.mxu0
        %v2341 = vadd.f32 %v2317, %v2340
        %2342 = vdwg.mxu0
        %2343 = vmatpush.msra.mxu0 0.0
        %2344 = vmatpush.msra.mxu0 0.0
        %2345 = vmatpush.msra.mxu0 0.0
        %2346 = vmatpush.msra.mxu0 0.0
        %2347 = vmatpush.msra.mxu0 0.0
        %2348 = vmatpush.msra.mxu0 0.0
        %2349 = vmatpush.msra.mxu0 0.0
        %2350 = vmatpush.msra.mxu0 0.0
        %2351 = vmatpush.msra.mxu0 0.0
        %2352 = vmatpush.msra.mxu0 0.0
        %2353 = vmatpush.msra.mxu0 0.0
        %2354 = vmatpush.msra.mxu0 0.0
        %2355 = vmatpush.msra.mxu0 0.0
        %2356 = vmatpush.msra.mxu0 0.0
        %2357 = vmatpush.msra.mxu0 0.0
        %v2358 = vand.u32 %v2067, 4294901760
        %2359 = vmatpush.msra.mxu0 %v2358
        %v2360 = vand.u32 %v2071, 4294901760
        %2361 = vmatmul.f32.gmra.mxu0 %v2360
        %v2362 = vpop.f32.mrf.mxu0
        %v2363 = vadd.f32 %v2341, %v2362
        %2364 = vdwg.mxu0
        %p2365 = scmp.eq.s32.totalorder %s39, 2
        // Predicated region
        $region85: #{dirvae_forward.2} parent=63 // pred_check
          %p2366 = pneg %p2365
        $region86: #{dirvae_forward.2} parent=63 // pred_check_branch
          %2368 = sbr.rel (%p2366) target = $region88
        $region87: #{dirvae_forward.2} parent=63 // pred_region
          %v2369 = vld [vmem:[#allocation9] sm:$0xf]
          %v2370 = vsel %vm1662, %v2217, 0.0
          %v2371 = vsel %vm1662, %v2363, 0.0
          %v2372 = vadd.f32 %v2370, %v2371
          %2373 = vadd.xlane.f32.xlu0 %v2372
          %v2374 = vpop.xlane.xlu0 %2373
          %v2375 = vadd.f32 %v2369, %v2374
          %vm2376 = vcmask 3072
          %2377 = vst.msk [vmem:[#allocation9] sm:$0xf] %vm2376, %v2375
          %v2378 = vld [vmem:[#allocation10] sm:$0xf]
          %v2379 = vmul.f32 %v2217, %v2217
          %v2380 = vmul.f32 %v2363, %v2363
          %v2381 = vsel %vm1662, %v2379, 0.0
          %v2382 = vsel %vm1662, %v2380, 0.0
          %v2383 = vadd.f32 %v2381, %v2382
          %2384 = vadd.xlane.f32.xlu0 %v2383
          %v2385 = vpop.xlane.xlu0 %2384
          %v2386 = vadd.f32 %v2378, %v2385
          %2387 = vst.msk [vmem:[#allocation10] sm:$0xf] %vm2376, %v2386
        $region88: #{dirvae_forward.2} parent=63 // pred_fallthru
          _
        %p2388 = pnand %p2365, %p1536
        %p2389 = pneg %p2388
        // Predicated region
        $region89: #{dirvae_forward.2} parent=63 // pred_check
          _
        $region90: #{dirvae_forward.2} parent=63 // pred_check_branch
          %2391 = sbr.rel (%p2388) target = $region92
        $region91: #{dirvae_forward.2} parent=63 // pred_region
          %v2392 = vld [vmem:[#allocation9] sm:$0xf]
          %v2393 = vmul.f32 %v2392, 0.0009765625
          %v2394 = vld [vmem:[#allocation10] sm:$0xf]
          %v2395 = vmul.f32 %v2394, 0.0009765625
          %v2396 = vmul.f32 %v2393, %v2393
          %v2397 = vsub.f32 %v2395, %v2396
          %vm2398 = vcmask 3072
          %2399 = vst.msk [vmem:[#allocation9] sm:$0xf] %vm2398, %v2393
          %v2400 = vadd.f32 %v2397, 1e-05
          %v2401 = vrsqrt.pop %v2400
          %v2402 = vmul.f32 %v2401, %v2400
          %v2403 = vmul.f32 %v2402, %v2401
          %v2404 = vmul.f32 0.5, %v2403
          %v2405 = vsub.f32 1.5, %v2404
          %v2406 = vmul.f32 %v2401, %v2405
          %vm2407 = vweird.f32 %v2400
          %vm2408 = vweird.f32 %v2401
          %vm2409 = vmor %vm2407, %vm2408
          %v2410 = vsel %vm2409, %v2401, %v2406
          %2411 = vst.msk [vmem:[#allocation10] sm:$0xf] %vm2398, %v2410
        $region92: #{dirvae_forward.2} parent=63 // pred_fallthru
          _
        %v2412 = vld [vmem:[#allocation9] sm:$0xf]
        %2414 = vset.pattern.permute.xlu0 0
        %2415 = vperm.xlu0 %2414, %v2412
        %v2416 = vpop.permute.xlu0 %2415
        %v2418 = vsub.f32 %v2217, %v2416
        %v2419 = vsub.f32 %v2363, %v2416
        %v2420 = vld [vmem:[#allocation10] sm:$0xf]
        %2422 = vset.pattern.permute.xlu0 0
        %2423 = vperm.xlu0 %2422, %v2420
        %v2424 = vpop.permute.xlu0 %2423
        %v2426 = vmul.f32 %v2418, %v2424
        %v2427 = vmul.f32 %v2419, %v2424
        %v2428 = vld [vmem:[%s9] sm:$0xf]
        %2430 = vset.pattern.permute.xlu0 0
        %2431 = vperm.xlu0 %2430, %v2428
        %v2432 = vpop.permute.xlu0 %2431
        %v2434 = vmul.f32 %v2426, %v2432
        %v2435 = vmul.f32 %v2427, %v2432
        %v2436 = vld [vmem:[%s10] sm:$0xf]
        %2438 = vset.pattern.permute.xlu0 0
        %2439 = vperm.xlu0 %2438, %v2436
        %v2440 = vpop.permute.xlu0 %2439
        %v2442 = vadd.f32 %v2434, %v2440
        %v2443 = vadd.f32 %v2435, %v2440
        %vm2444 = vcmp.ge.f32.partialorder %v2442, 0.0
        %vm2445 = vcmp.ge.f32.partialorder %v2443, 0.0
        %v2446 = vmul.f32 %v2442, 0.01
        %v2447 = vmul.f32 %v2443, 0.01
        %v2448 = vsel %vm2444, %v2442, %v2446
        %v2449 = vsel %vm2445, %v2443, %v2447
        %v2450 = vld [vmem:[%s4] sm:$0xf]
        %vm2451 = vcmask 31744
        %v2453 = vsel %vm2451, %v2450, 0
        %v2456 = vsel %vm1662, %v2448, 0
        %v2459 = vsel %vm1662, %v2449, 0
        %2461 = vmatpush.msra.mxu0 0.0
        %2462 = vmatpush.msra.mxu0 0.0
        %2463 = vmatpush.msra.mxu0 0.0
        %2464 = vmatpush.msra.mxu0 0.0
        %2465 = vmatpush.msra.mxu0 0.0
        %2466 = vmatpush.msra.mxu0 0.0
        %2467 = vmatpush.msra.mxu0 0.0
        %2468 = vmatpush.msra.mxu0 0.0
        %2469 = vmatpush.msra.mxu0 0.0
        %2470 = vmatpush.msra.mxu0 0.0
        %2471 = vmatpush.msra.mxu0 0.0
        %2472 = vmatpush.msra.mxu0 0.0
        %2473 = vmatpush.msra.mxu0 0.0
        %2474 = vmatpush.msra.mxu0 0.0
        %2475 = vmatpush.msra.mxu0 0.0
        %v2476 = vand.u32 %v2456, 4294901760
        %2477 = vmatpush.msra.mxu0 %v2476
        %v2478 = vand.u32 %v2453, 4294901760
        %v2479 = vsub.f32 %v2453, %v2478
        %v2480 = vand.u32 %v2479, 4294901760
        %v2481 = vsub.f32 %v2479, %v2480
        %v2482 = vand.u32 %v2481, 4294901760
        %2483 = vmatmul.f32.gmra.mxu0 %v2482
        %v2484 = vpop.f32.mrf.mxu0
        %v2485 = vadd.f32 0.0, %v2484
        %2486 = vdwg.mxu0
        %2487 = vmatpush.msra.mxu0 0.0
        %2488 = vmatpush.msra.mxu0 0.0
        %2489 = vmatpush.msra.mxu0 0.0
        %2490 = vmatpush.msra.mxu0 0.0
        %2491 = vmatpush.msra.mxu0 0.0
        %2492 = vmatpush.msra.mxu0 0.0
        %2493 = vmatpush.msra.mxu0 0.0
        %2494 = vmatpush.msra.mxu0 0.0
        %2495 = vmatpush.msra.mxu0 0.0
        %2496 = vmatpush.msra.mxu0 0.0
        %2497 = vmatpush.msra.mxu0 0.0
        %2498 = vmatpush.msra.mxu0 0.0
        %2499 = vmatpush.msra.mxu0 0.0
        %2500 = vmatpush.msra.mxu0 0.0
        %2501 = vmatpush.msra.mxu0 0.0
        %v2502 = vand.u32 %v2456, 4294901760
        %v2503 = vsub.f32 %v2456, %v2502
        %v2504 = vand.u32 %v2503, 4294901760
        %v2505 = vsub.f32 %v2503, %v2504
        %v2506 = vand.u32 %v2505, 4294901760
        %2507 = vmatpush.msra.mxu0 %v2506
        %v2508 = vand.u32 %v2453, 4294901760
        %2509 = vmatmul.f32.gmra.mxu0 %v2508
        %v2510 = vpop.f32.mrf.mxu0
        %v2511 = vadd.f32 %v2485, %v2510
        %2512 = vdwg.mxu0
        %2513 = vmatpush.msra.mxu0 0.0
        %2514 = vmatpush.msra.mxu0 0.0
        %2515 = vmatpush.msra.mxu0 0.0
        %2516 = vmatpush.msra.mxu0 0.0
        %2517 = vmatpush.msra.mxu0 0.0
        %2518 = vmatpush.msra.mxu0 0.0
        %2519 = vmatpush.msra.mxu0 0.0
        %2520 = vmatpush.msra.mxu0 0.0
        %2521 = vmatpush.msra.mxu0 0.0
        %2522 = vmatpush.msra.mxu0 0.0
        %2523 = vmatpush.msra.mxu0 0.0
        %2524 = vmatpush.msra.mxu0 0.0
        %2525 = vmatpush.msra.mxu0 0.0
        %2526 = vmatpush.msra.mxu0 0.0
        %2527 = vmatpush.msra.mxu0 0.0
        %v2528 = vand.u32 %v2456, 4294901760
        %v2529 = vsub.f32 %v2456, %v2528
        %2530 = vmatpush.msra.mxu0 %v2529
        %v2531 = vand.u32 %v2453, 4294901760
        %v2532 = vsub.f32 %v2453, %v2531
        %2533 = vmatmul.f32.gmra.mxu0 %v2532
        %v2534 = vpop.f32.mrf.mxu0
        %v2535 = vadd.f32 %v2511, %v2534
        %2536 = vdwg.mxu0
        %2537 = vmatpush.msra.mxu0 0.0
        %2538 = vmatpush.msra.mxu0 0.0
        %2539 = vmatpush.msra.mxu0 0.0
        %2540 = vmatpush.msra.mxu0 0.0
        %2541 = vmatpush.msra.mxu0 0.0
        %2542 = vmatpush.msra.mxu0 0.0
        %2543 = vmatpush.msra.mxu0 0.0
        %2544 = vmatpush.msra.mxu0 0.0
        %2545 = vmatpush.msra.mxu0 0.0
        %2546 = vmatpush.msra.mxu0 0.0
        %2547 = vmatpush.msra.mxu0 0.0
        %2548 = vmatpush.msra.mxu0 0.0
        %2549 = vmatpush.msra.mxu0 0.0
        %2550 = vmatpush.msra.mxu0 0.0
        %2551 = vmatpush.msra.mxu0 0.0
        %v2552 = vand.u32 %v2456, 4294901760
        %2553 = vmatpush.msra.mxu0 %v2552
        %v2554 = vand.u32 %v2453, 4294901760
        %v2555 = vsub.f32 %v2453, %v2554
        %v2556 = vand.u32 %v2555, 4294901760
        %2557 = vmatmul.f32.gmra.mxu0 %v2556
        %v2558 = vpop.f32.mrf.mxu0
        %v2559 = vadd.f32 %v2535, %v2558
        %2560 = vdwg.mxu0
        %2561 = vmatpush.msra.mxu0 0.0
        %2562 = vmatpush.msra.mxu0 0.0
        %2563 = vmatpush.msra.mxu0 0.0
        %2564 = vmatpush.msra.mxu0 0.0
        %2565 = vmatpush.msra.mxu0 0.0
        %2566 = vmatpush.msra.mxu0 0.0
        %2567 = vmatpush.msra.mxu0 0.0
        %2568 = vmatpush.msra.mxu0 0.0
        %2569 = vmatpush.msra.mxu0 0.0
        %2570 = vmatpush.msra.mxu0 0.0
        %2571 = vmatpush.msra.mxu0 0.0
        %2572 = vmatpush.msra.mxu0 0.0
        %2573 = vmatpush.msra.mxu0 0.0
        %2574 = vmatpush.msra.mxu0 0.0
        %2575 = vmatpush.msra.mxu0 0.0
        %v2576 = vand.u32 %v2456, 4294901760
        %v2577 = vsub.f32 %v2456, %v2576
        %v2578 = vand.u32 %v2577, 4294901760
        %2579 = vmatpush.msra.mxu0 %v2578
        %v2580 = vand.u32 %v2453, 4294901760
        %2581 = vmatmul.f32.gmra.mxu0 %v2580
        %v2582 = vpop.f32.mrf.mxu0
        %v2583 = vadd.f32 %v2559, %v2582
        %2584 = vdwg.mxu0
        %2585 = vmatpush.msra.mxu0 0.0
        %2586 = vmatpush.msra.mxu0 0.0
        %2587 = vmatpush.msra.mxu0 0.0
        %2588 = vmatpush.msra.mxu0 0.0
        %2589 = vmatpush.msra.mxu0 0.0
        %2590 = vmatpush.msra.mxu0 0.0
        %2591 = vmatpush.msra.mxu0 0.0
        %2592 = vmatpush.msra.mxu0 0.0
        %2593 = vmatpush.msra.mxu0 0.0
        %2594 = vmatpush.msra.mxu0 0.0
        %2595 = vmatpush.msra.mxu0 0.0
        %2596 = vmatpush.msra.mxu0 0.0
        %2597 = vmatpush.msra.mxu0 0.0
        %2598 = vmatpush.msra.mxu0 0.0
        %2599 = vmatpush.msra.mxu0 0.0
        %v2600 = vand.u32 %v2456, 4294901760
        %2601 = vmatpush.msra.mxu0 %v2600
        %v2602 = vand.u32 %v2453, 4294901760
        %2603 = vmatmul.f32.gmra.mxu0 %v2602
        %v2604 = vpop.f32.mrf.mxu0
        %v2605 = vadd.f32 %v2583, %v2604
        %2606 = vdwg.mxu0
        %2607 = vmatpush.msra.mxu0 0.0
        %2608 = vmatpush.msra.mxu0 0.0
        %2609 = vmatpush.msra.mxu0 0.0
        %2610 = vmatpush.msra.mxu0 0.0
        %2611 = vmatpush.msra.mxu0 0.0
        %2612 = vmatpush.msra.mxu0 0.0
        %2613 = vmatpush.msra.mxu0 0.0
        %2614 = vmatpush.msra.mxu0 0.0
        %2615 = vmatpush.msra.mxu0 0.0
        %2616 = vmatpush.msra.mxu0 0.0
        %2617 = vmatpush.msra.mxu0 0.0
        %2618 = vmatpush.msra.mxu0 0.0
        %2619 = vmatpush.msra.mxu0 0.0
        %2620 = vmatpush.msra.mxu0 0.0
        %2621 = vmatpush.msra.mxu0 0.0
        %v2622 = vand.u32 %v2459, 4294901760
        %2623 = vmatpush.msra.mxu0 %v2622
        %v2624 = vand.u32 %v2453, 4294901760
        %v2625 = vsub.f32 %v2453, %v2624
        %v2626 = vand.u32 %v2625, 4294901760
        %v2627 = vsub.f32 %v2625, %v2626
        %v2628 = vand.u32 %v2627, 4294901760
        %2629 = vmatmul.f32.gmra.mxu0 %v2628
        %v2630 = vpop.f32.mrf.mxu0
        %v2631 = vadd.f32 0.0, %v2630
        %2632 = vdwg.mxu0
        %2633 = vmatpush.msra.mxu0 0.0
        %2634 = vmatpush.msra.mxu0 0.0
        %2635 = vmatpush.msra.mxu0 0.0
        %2636 = vmatpush.msra.mxu0 0.0
        %2637 = vmatpush.msra.mxu0 0.0
        %2638 = vmatpush.msra.mxu0 0.0
        %2639 = vmatpush.msra.mxu0 0.0
        %2640 = vmatpush.msra.mxu0 0.0
        %2641 = vmatpush.msra.mxu0 0.0
        %2642 = vmatpush.msra.mxu0 0.0
        %2643 = vmatpush.msra.mxu0 0.0
        %2644 = vmatpush.msra.mxu0 0.0
        %2645 = vmatpush.msra.mxu0 0.0
        %2646 = vmatpush.msra.mxu0 0.0
        %2647 = vmatpush.msra.mxu0 0.0
        %v2648 = vand.u32 %v2459, 4294901760
        %v2649 = vsub.f32 %v2459, %v2648
        %v2650 = vand.u32 %v2649, 4294901760
        %v2651 = vsub.f32 %v2649, %v2650
        %v2652 = vand.u32 %v2651, 4294901760
        %2653 = vmatpush.msra.mxu0 %v2652
        %v2654 = vand.u32 %v2453, 4294901760
        %2655 = vmatmul.f32.gmra.mxu0 %v2654
        %v2656 = vpop.f32.mrf.mxu0
        %v2657 = vadd.f32 %v2631, %v2656
        %2658 = vdwg.mxu0
        %2659 = vmatpush.msra.mxu0 0.0
        %2660 = vmatpush.msra.mxu0 0.0
        %2661 = vmatpush.msra.mxu0 0.0
        %2662 = vmatpush.msra.mxu0 0.0
        %2663 = vmatpush.msra.mxu0 0.0
        %2664 = vmatpush.msra.mxu0 0.0
        %2665 = vmatpush.msra.mxu0 0.0
        %2666 = vmatpush.msra.mxu0 0.0
        %2667 = vmatpush.msra.mxu0 0.0
        %2668 = vmatpush.msra.mxu0 0.0
        %2669 = vmatpush.msra.mxu0 0.0
        %2670 = vmatpush.msra.mxu0 0.0
        %2671 = vmatpush.msra.mxu0 0.0
        %2672 = vmatpush.msra.mxu0 0.0
        %2673 = vmatpush.msra.mxu0 0.0
        %v2674 = vand.u32 %v2459, 4294901760
        %v2675 = vsub.f32 %v2459, %v2674
        %2676 = vmatpush.msra.mxu0 %v2675
        %v2677 = vand.u32 %v2453, 4294901760
        %v2678 = vsub.f32 %v2453, %v2677
        %2679 = vmatmul.f32.gmra.mxu0 %v2678
        %v2680 = vpop.f32.mrf.mxu0
        %v2681 = vadd.f32 %v2657, %v2680
        %2682 = vdwg.mxu0
        %2683 = vmatpush.msra.mxu0 0.0
        %2684 = vmatpush.msra.mxu0 0.0
        %2685 = vmatpush.msra.mxu0 0.0
        %2686 = vmatpush.msra.mxu0 0.0
        %2687 = vmatpush.msra.mxu0 0.0
        %2688 = vmatpush.msra.mxu0 0.0
        %2689 = vmatpush.msra.mxu0 0.0
        %2690 = vmatpush.msra.mxu0 0.0
        %2691 = vmatpush.msra.mxu0 0.0
        %2692 = vmatpush.msra.mxu0 0.0
        %2693 = vmatpush.msra.mxu0 0.0
        %2694 = vmatpush.msra.mxu0 0.0
        %2695 = vmatpush.msra.mxu0 0.0
        %2696 = vmatpush.msra.mxu0 0.0
        %2697 = vmatpush.msra.mxu0 0.0
        %v2698 = vand.u32 %v2459, 4294901760
        %2699 = vmatpush.msra.mxu0 %v2698
        %v2700 = vand.u32 %v2453, 4294901760
        %v2701 = vsub.f32 %v2453, %v2700
        %v2702 = vand.u32 %v2701, 4294901760
        %2703 = vmatmul.f32.gmra.mxu0 %v2702
        %v2704 = vpop.f32.mrf.mxu0
        %v2705 = vadd.f32 %v2681, %v2704
        %2706 = vdwg.mxu0
        %2707 = vmatpush.msra.mxu0 0.0
        %2708 = vmatpush.msra.mxu0 0.0
        %2709 = vmatpush.msra.mxu0 0.0
        %2710 = vmatpush.msra.mxu0 0.0
        %2711 = vmatpush.msra.mxu0 0.0
        %2712 = vmatpush.msra.mxu0 0.0
        %2713 = vmatpush.msra.mxu0 0.0
        %2714 = vmatpush.msra.mxu0 0.0
        %2715 = vmatpush.msra.mxu0 0.0
        %2716 = vmatpush.msra.mxu0 0.0
        %2717 = vmatpush.msra.mxu0 0.0
        %2718 = vmatpush.msra.mxu0 0.0
        %2719 = vmatpush.msra.mxu0 0.0
        %2720 = vmatpush.msra.mxu0 0.0
        %2721 = vmatpush.msra.mxu0 0.0
        %v2722 = vand.u32 %v2459, 4294901760
        %v2723 = vsub.f32 %v2459, %v2722
        %v2724 = vand.u32 %v2723, 4294901760
        %2725 = vmatpush.msra.mxu0 %v2724
        %v2726 = vand.u32 %v2453, 4294901760
        %2727 = vmatmul.f32.gmra.mxu0 %v2726
        %v2728 = vpop.f32.mrf.mxu0
        %v2729 = vadd.f32 %v2705, %v2728
        %2730 = vdwg.mxu0
        %2731 = vmatpush.msra.mxu0 0.0
        %2732 = vmatpush.msra.mxu0 0.0
        %2733 = vmatpush.msra.mxu0 0.0
        %2734 = vmatpush.msra.mxu0 0.0
        %2735 = vmatpush.msra.mxu0 0.0
        %2736 = vmatpush.msra.mxu0 0.0
        %2737 = vmatpush.msra.mxu0 0.0
        %2738 = vmatpush.msra.mxu0 0.0
        %2739 = vmatpush.msra.mxu0 0.0
        %2740 = vmatpush.msra.mxu0 0.0
        %2741 = vmatpush.msra.mxu0 0.0
        %2742 = vmatpush.msra.mxu0 0.0
        %2743 = vmatpush.msra.mxu0 0.0
        %2744 = vmatpush.msra.mxu0 0.0
        %2745 = vmatpush.msra.mxu0 0.0
        %v2746 = vand.u32 %v2459, 4294901760
        %2747 = vmatpush.msra.mxu0 %v2746
        %v2748 = vand.u32 %v2453, 4294901760
        %2749 = vmatmul.f32.gmra.mxu0 %v2748
        %v2750 = vpop.f32.mrf.mxu0
        %v2751 = vadd.f32 %v2729, %v2750
        %2752 = vdwg.mxu0
        %v2755 = vrot.slane %v2751, 4
        %v2756 = vsel %vm1662, %v2605, %v2755
        %2758 = vst [vmem:[%s597] sm:$0xff] %v2756
        %p2759 = scmp.eq.s32.totalorder %s39, 3
        // Predicated region
        $region93: #{dirvae_forward.2} parent=63 // pred_check
          %p2760 = pneg %p2759
        $region94: #{dirvae_forward.2} parent=63 // pred_check_branch
          %2762 = sbr.rel (%p2760) target = $region96
        $region95: #{dirvae_forward.2} parent=63 // pred_region
          %v2763 = vld [vmem:[%s18] sm:$0xf]
          %v2764 = vsel %vm1662, %v2605, 0.0
          %v2765 = vsel %vm1662, %v2751, 0.0
          %v2766 = vadd.f32 %v2764, %v2765
          %2767 = vadd.xlane.f32.xlu0 %v2766
          %v2768 = vpop.xlane.xlu0 %2767
          %v2769 = vadd.f32 %v2763, %v2768
          %vm2770 = vcmask 3072
          %2771 = vst.msk [vmem:[%s18] sm:$0xf] %vm2770, %v2769
          %v2772 = vld [vmem:[%s19] sm:$0xf]
          %v2773 = vmul.f32 %v2605, %v2605
          %v2774 = vmul.f32 %v2751, %v2751
          %v2775 = vsel %vm1662, %v2773, 0.0
          %v2776 = vsel %vm1662, %v2774, 0.0
          %v2777 = vadd.f32 %v2775, %v2776
          %2778 = vadd.xlane.f32.xlu0 %v2777
          %v2779 = vpop.xlane.xlu0 %2778
          %v2780 = vadd.f32 %v2772, %v2779
          %2781 = vst.msk [vmem:[%s19] sm:$0xf] %vm2770, %v2780
        $region96: #{dirvae_forward.2} parent=63 // pred_fallthru
          _
        %p2782 = pnand %p2759, %p1536
        %p2783 = pneg %p2782
        // Predicated region
        $region97: #{dirvae_forward.2} parent=63 // pred_check
          _
        $region98: #{dirvae_forward.2} parent=63 // pred_check_branch
          %2785 = sbr.rel (%p2782) target = $region100
        $region99: #{dirvae_forward.2} parent=63 // pred_region
          %v2786 = vld [vmem:[%s18] sm:$0xf]
          %v2787 = vmul.f32 %v2786, 0.0009765625
          %v2788 = vld [vmem:[%s19] sm:$0xf]
          %v2789 = vmul.f32 %v2788, 0.0009765625
          %v2790 = vmul.f32 %v2787, %v2787
          %v2791 = vsub.f32 %v2789, %v2790
          %vm2792 = vcmask 3072
          %2793 = vst.msk [vmem:[%s18] sm:$0xf] %vm2792, %v2787
          %v2794 = vadd.f32 %v2791, 1e-05
          %v2795 = vrsqrt.pop %v2794
          %v2796 = vmul.f32 %v2795, %v2794
          %v2797 = vmul.f32 %v2796, %v2795
          %v2798 = vmul.f32 0.5, %v2797
          %v2799 = vsub.f32 1.5, %v2798
          %v2800 = vmul.f32 %v2795, %v2799
          %vm2801 = vweird.f32 %v2794
          %vm2802 = vweird.f32 %v2795
          %vm2803 = vmor %vm2801, %vm2802
          %v2804 = vsel %vm2803, %v2795, %v2800
          %2805 = vst.msk [vmem:[%s19] sm:$0xf] %vm2792, %v2804
        $region100: #{dirvae_forward.2} parent=63 // pred_fallthru
          _
        %s2806 = smul.u32 2, %s40
        %p2807 = scmp.lt.s32.totalorder %s2806, 7
        %s2808 = scalar_select %p2807, %s2806, 7
        %s2809 = smul.addr %s2808, 4
        %s2810 = scalar_lea.vmem %s11, %s2809
        // Predicated region
        $region101: #{dirvae_forward.2} parent=63 // pred_check
          %p2811 = pneg %p301
        $region102: #{dirvae_forward.2} parent=63 // pred_check_branch
          %2813 = sbr.rel (%p2811) target = $region104
        $region103: #{dirvae_forward.2} parent=63 // pred_region
          %s2814 = smul.u32 2, %s40
        $region104: #{dirvae_forward.2} parent=63 // pred_fallthru
          _
        // Predicated region
        $region105: #{dirvae_forward.2} parent=63 // pred_check
          %p2815 = pneg %p322
        $region106: #{dirvae_forward.2} parent=63 // pred_check_branch
          %2817 = sbr.rel (%p2815) target = $region108
        $region107: #{dirvae_forward.2} parent=63 // pred_region
          %2819 = vsyncadd [#allocation3], 0
          %s2820 = sshll.u32 [#allocation2], 4
          %s2821 = int_to_ptr.vmem [resolvable:$true] %s2820
          %s2822 = sshll.u32 %s12, 4
          %s2823 = int_to_ptr.hbm [resolvable:$true] %s2822
          %2828 = dma.vmem_to_hbm [thread:$0]  %s2821, 256, %s2823, [#allocation3], 128, 128, 8
        $region108: #{dirvae_forward.2} parent=63 // pred_fallthru
          _
        // Predicated region
        $region109: #{dirvae_forward.2} parent=63 // pred_check
          %p2829 = pneg %p343
        $region110: #{dirvae_forward.2} parent=63 // pred_check_branch
          %2831 = sbr.rel (%p2829) target = $region112
        $region111: #{dirvae_forward.2} parent=63 // pred_region
          %2833 = vsyncadd [#allocation5], 0
          %s2834 = sshll.u32 [#allocation4], 4
          %s2835 = int_to_ptr.vmem [resolvable:$true] %s2834
          %s2836 = sshll.u32 %s13, 4
          %s2837 = int_to_ptr.hbm [resolvable:$true] %s2836
          %2842 = dma.vmem_to_hbm [thread:$0]  %s2835, 256, %s2837, [#allocation5], 128, 128, 8
        $region112: #{dirvae_forward.2} parent=63 // pred_fallthru
          _
        // Predicated region
        $region113: #{dirvae_forward.2} parent=63 // pred_check
          %p2843 = pneg %p364
        $region114: #{dirvae_forward.2} parent=63 // pred_check_branch
          %2845 = sbr.rel (%p2843) target = $region116
        $region115: #{dirvae_forward.2} parent=63 // pred_region
          %2847 = vsyncadd [#allocation5], 0
          %s2849 = sshll.u32 [#allocation6], 4
          %s2850 = int_to_ptr.vmem [resolvable:$true] %s2849
          %s2851 = sshll.u32 %s14, 4
          %s2852 = int_to_ptr.hbm [resolvable:$true] %s2851
          %2854 = dma.vmem_to_hbm [thread:$0]  %s2850, 128, %s2852, [#allocation5]
        $region116: #{dirvae_forward.2} parent=63 // pred_fallthru
          _
        // Predicated region
        $region117: #{dirvae_forward.2} parent=63 // pred_check
          %p2855 = pneg %p385
        $region118: #{dirvae_forward.2} parent=63 // pred_check_branch
          %2857 = sbr.rel (%p2855) target = $region120
        $region119: #{dirvae_forward.2} parent=63 // pred_region
          %2859 = vsyncadd [#allocation8], 0
          %s2861 = sshll.u32 [#allocation7], 4
          %s2862 = int_to_ptr.vmem [resolvable:$true] %s2861
          %s2863 = sshll.u32 %s15, 4
          %s2864 = int_to_ptr.hbm [resolvable:$true] %s2863
          %2866 = dma.vmem_to_hbm [thread:$0]  %s2862, 128, %s2864, [#allocation8]
        $region120: #{dirvae_forward.2} parent=63 // pred_fallthru
          _
        // Predicated region
        $region121: #{dirvae_forward.2} parent=63 // pred_check
          %p2867 = pneg %p406
        $region122: #{dirvae_forward.2} parent=63 // pred_check_branch
          %2869 = sbr.rel (%p2867) target = $region124
        $region123: #{dirvae_forward.2} parent=63 // pred_region
          %2871 = vsyncadd [#allocation8], 0
          %s2873 = sshll.u32 [#allocation9], 4
          %s2874 = int_to_ptr.vmem [resolvable:$true] %s2873
          %s2875 = sshll.u32 %s16, 4
          %s2876 = int_to_ptr.hbm [resolvable:$true] %s2875
          %2878 = dma.vmem_to_hbm [thread:$0]  %s2874, 64, %s2876, [#allocation8]
        $region124: #{dirvae_forward.2} parent=63 // pred_fallthru
          _
        // Predicated region
        $region125: #{dirvae_forward.2} parent=63 // pred_check
          %p2879 = pneg %p427
        $region126: #{dirvae_forward.2} parent=63 // pred_check_branch
          %2881 = sbr.rel (%p2879) target = $region128
        $region127: #{dirvae_forward.2} parent=63 // pred_region
          %2883 = vsyncadd [#allocation11], 0
          %s2885 = sshll.u32 [#allocation10], 4
          %s2886 = int_to_ptr.vmem [resolvable:$true] %s2885
          %s2887 = sshll.u32 %s17, 4
          %s2888 = int_to_ptr.hbm [resolvable:$true] %s2887
          %2890 = dma.vmem_to_hbm [thread:$0]  %s2886, 64, %s2888, [#allocation11]
        $region128: #{dirvae_forward.2} parent=63 // pred_fallthru
          _
        // Predicated region
        $region129: #{dirvae_forward.2} parent=63 // pred_check
          %p2891 = pneg %p448
        $region130: #{dirvae_forward.2} parent=63 // pred_check_branch
          %2893 = sbr.rel (%p2891) target = $region132
        $region131: #{dirvae_forward.2} parent=63 // pred_region
          _
        $region132: #{dirvae_forward.2} parent=63 // pred_fallthru
          _
        // Predicated region
        $region133: #{dirvae_forward.2} parent=63 // pred_check
          %p2894 = pneg %p469
        $region134: #{dirvae_forward.2} parent=63 // pred_check_branch
          %2896 = sbr.rel (%p2894) target = $region136
        $region135: #{dirvae_forward.2} parent=63 // pred_region
          _
        $region136: #{dirvae_forward.2} parent=63 // pred_fallthru
          _
        // Predicated region
        $region137: #{dirvae_forward.2} parent=63 // pred_check
          %p2897 = pneg %p322
        $region138: #{dirvae_forward.2} parent=63 // pred_check_branch
          %2899 = sbr.rel (%p2897) target = $region140
        $region139: #{dirvae_forward.2} parent=63 // pred_region
          %2901 = dma.done [#allocation3], 256
        $region140: #{dirvae_forward.2} parent=63 // pred_fallthru
          _
        // Predicated region
        $region141: #{dirvae_forward.2} parent=63 // pred_check
          %p2902 = pneg %p343
        $region142: #{dirvae_forward.2} parent=63 // pred_check_branch
          %2904 = sbr.rel (%p2902) target = $region144
        $region143: #{dirvae_forward.2} parent=63 // pred_region
          %2906 = dma.done [#allocation5], 256
        $region144: #{dirvae_forward.2} parent=63 // pred_fallthru
          _
        // Predicated region
        $region145: #{dirvae_forward.2} parent=63 // pred_check
          %p2907 = pneg %p364
        $region146: #{dirvae_forward.2} parent=63 // pred_check_branch
          %2909 = sbr.rel (%p2907) target = $region148
        $region147: #{dirvae_forward.2} parent=63 // pred_region
          %2911 = dma.done [#allocation5], 128
        $region148: #{dirvae_forward.2} parent=63 // pred_fallthru
          _
        // Predicated region
        $region149: #{dirvae_forward.2} parent=63 // pred_check
          %p2912 = pneg %p385
        $region150: #{dirvae_forward.2} parent=63 // pred_check_branch
          %2914 = sbr.rel (%p2912) target = $region152
        $region151: #{dirvae_forward.2} parent=63 // pred_region
          %2916 = dma.done [#allocation8], 128
        $region152: #{dirvae_forward.2} parent=63 // pred_fallthru
          _
        // Predicated region
        $region153: #{dirvae_forward.2} parent=63 // pred_check
          %p2917 = pneg %p406
        $region154: #{dirvae_forward.2} parent=63 // pred_check_branch
          %2919 = sbr.rel (%p2917) target = $region156
        $region155: #{dirvae_forward.2} parent=63 // pred_region
          %2921 = dma.done [#allocation8], 64
        $region156: #{dirvae_forward.2} parent=63 // pred_fallthru
          _
        // Predicated region
        $region157: #{dirvae_forward.2} parent=63 // pred_check
          %p2922 = pneg %p427
        $region158: #{dirvae_forward.2} parent=63 // pred_check_branch
          %2924 = sbr.rel (%p2922) target = $region160
        $region159: #{dirvae_forward.2} parent=63 // pred_region
          %2926 = dma.done [#allocation11], 64
        $region160: #{dirvae_forward.2} parent=63 // pred_fallthru
          _
        // Predicated region
        $region161: #{dirvae_forward.2} parent=63 // pred_check
          %p2927 = pneg %p448
        $region162: #{dirvae_forward.2} parent=63 // pred_check_branch
          %2929 = sbr.rel (%p2927) target = $region164
        $region163: #{dirvae_forward.2} parent=63 // pred_region
          _
        $region164: #{dirvae_forward.2} parent=63 // pred_fallthru
          _
        // Predicated region
        $region165: #{dirvae_forward.2} parent=63 // pred_check
          %p2930 = pneg %p469
        $region166: #{dirvae_forward.2} parent=63 // pred_check_branch
          %2932 = sbr.rel (%p2930) target = $region168
        $region167: #{dirvae_forward.2} parent=63 // pred_region
          _
        $region168: #{dirvae_forward.2} parent=63 // pred_fallthru
          _
      $region64: #{dirvae_forward.2} parent=5 // pred_fallthru
        _
      %p2933 = scmp.le.s32.totalorder 2, %s30
      // Predicated region
      $region169: #{dirvae_forward.2} parent=5 // pred_check
        %p2934 = pneg %p2933
      $region170: #{dirvae_forward.2} parent=5 // pred_check_branch
        %2936 = sbr.rel (%p2934) target = $region172
      $region171: #{dirvae_forward.2} parent=5 // pred_region
        %s2937 = ssub.s32 %s30, 2
        // Predicated region
        $region173: #{dirvae_forward.2} parent=171 // pred_check
          %p2938 = pneg %p307
        $region174: #{dirvae_forward.2} parent=171 // pred_check_branch
          %2940 = sbr.rel (%p2938) target = $region176
        $region175: #{dirvae_forward.2} parent=171 // pred_region
          %s2941 = smul.u32 2, %s42
          %p2942 = scmp.lt.s32.totalorder %s2941, 7
          %s2943 = scalar_select %p2942, %s2941, 7
          %s2944 = smul.addr %s2943, 4
          %s2945 = scalar_lea.vmem %s11, %s2944
        $region176: #{dirvae_forward.2} parent=171 // pred_fallthru
          _
      $region172: #{dirvae_forward.2} parent=5 // pred_fallthru
        _
    $region6: #{dirvae_forward.2} parent=1 // loop_footer
      %s34 = sadd.s32 1, %s30
    $region7: #{dirvae_forward.2} parent=1 // loop_footer_branch
      %29 = sbr.rel target = $region3
    $region8: #{dirvae_forward.2} parent=1 // loop_exit
      _
    %2946 = vsyncpa [#allocation3], 1
    %s2947 = scalar_lea.sflag [#allocation3], 1
    %2948 = vsyncpa %s2947, 1
    %2949 = vsyncpa [#allocation5], 1
    %2950 = vsyncpa [#allocation8], 1
    %2951 = vsyncpa [#allocation11], 1

</llo_original>
